<compile_context>
chip_gen: v7x
topology: tpu7x:2x2x1
jax: 0.10.0
libtpu: 0.0.40
codegen_flags: <defaults>
</compile_context>

<pallas_src>
import math
import numpy as np
import jax
import jax.numpy as jnp
from jax.experimental import pallas as pl
from jax.experimental.pallas import tpu as pltpu

# ----------------------------- configuration --------------------------------
EMBED_DIM = 32
NUM_HEADS = 4
HEAD_DIM = EMBED_DIM // NUM_HEADS
NUM_LAYERS = 12
MLP_RATIO = 4
PATCH = 14
LORA_R = 4
IMAGE_SHAPE = (28, 42)          # multiples of 14 -> patch grid (2, 3)
OUTPUT_SHAPE = (32, 64)
OUT_INDICES = [2, 5, 8, 10, 12]  # indices into [embeddings, layer1..layer12]
UPSAMPLE = 4
IN_CHANS = 3
LN_EPS = 1e-6

# lax.dot_general dimension numbers for  a @ b.T  (used for Q @ K^T)
TRANS_B = (((1,), (1,)), ((), ()))


# ----------------------------- small matmul kernels ---------------------------
def _matmul_kernel(a_ref, b_ref, o_ref):
    o_ref[...] = jnp.dot(a_ref[...], b_ref[...], preferred_element_type=jnp.float32)


def pl_matmul(a, b):
    """2-D matmul (M,K)@(K,N), whole-array single block (small shapes)."""
    m = a.shape[0]
    n = b.shape[1]
    return pl.pallas_call(
        _matmul_kernel,
        out_shape=jax.ShapeDtypeStruct((m, n), jnp.float32),
    )(a.astype(jnp.float32), b.astype(jnp.float32))


def _linear_kernel(x_ref, wt_ref, b_ref, o_ref):
    o_ref[...] = (jnp.dot(x_ref[...], wt_ref[...],
                          preferred_element_type=jnp.float32) + b_ref[...])


def pl_linear(x, wt, b):
    """x:(M,K) @ wt:(K,N) + b:(1,N).  Weight is pre-transposed at prep time."""
    m = x.shape[0]
    n = wt.shape[1]
    return pl.pallas_call(
        _linear_kernel,
        out_shape=jax.ShapeDtypeStruct((m, n), jnp.float32),
    )(x.astype(jnp.float32), wt, b)


# ----------------------------- fused transformer kernel -----------------------
def _ln(v, w, b):
    mean = jnp.mean(v, axis=-1, keepdims=True)
    var = jnp.mean((v - mean) ** 2, axis=-1, keepdims=True)
    return (v - mean) * jax.lax.rsqrt(var + LN_EPS) * w + b


def _gelu(v):
    # TODO(synk): PyTorch nn.GELU default is exact erf-GELU; the tanh
    # approximation is used since erf lowering is not guaranteed in Mosaic.
    c = jnp.float32(math.sqrt(2.0 / math.pi))
    return 0.5 * v * (1.0 + jnp.tanh(c * (v + 0.044715 * v * v * v)))


def _encoder_kernel(tok_ref,
                    n1w_ref, n1b_ref, qkvw_ref, qkvb_ref, ow_ref, ob_ref, ls1_ref,
                    n2w_ref, n2b_ref, f1w_ref, f1b_ref, f2w_ref, f2b_ref, ls2_ref,
                    flw_ref, flb_ref,
                    out_ref, x_sc):
    layer = pl.program_id(1)

    @pl.when(layer == 0)
    def _():
        x_sc[...] = tok_ref[0]          # load tokens into the resident state

    x = x_sc[...]                       # (N, D) activations, VMEM-resident

    # ----------------------------- attention ---------------------------------
    h = _ln(x, n1w_ref[0], n1b_ref[0])
    # fused QKV projection (LoRA already merged into the q/v weight slices)
    qkv = (jnp.dot(h, qkvw_ref[0], preferred_element_type=jnp.float32)
           + qkvb_ref[0])                                            # (N, 3D)
    ow = ow_ref[0]                                                   # (D, D)
    scale = 1.0 / math.sqrt(HEAD_DIM)
    attn = jnp.zeros_like(x)
    for hh in range(NUM_HEADS):                                      # unrolled
        lo = hh * HEAD_DIM
        hi = lo + HEAD_DIM
        q_h = qkv[:, lo:hi]
        k_h = qkv[:, EMBED_DIM + lo:EMBED_DIM + hi]
        v_h = qkv[:, 2 * EMBED_DIM + lo:2 * EMBED_DIM + hi]
        s = jax.lax.dot_general(q_h, k_h, TRANS_B,
                                preferred_element_type=jnp.float32) * scale
        s = s - jnp.max(s, axis=-1, keepdims=True)
        p = jnp.exp(s)
        p = p / jnp.sum(p, axis=-1, keepdims=True)
        ctx = jnp.dot(p, v_h, preferred_element_type=jnp.float32)
        # output projection decomposed per head (avoids a concat)
        attn = attn + jnp.dot(ctx, ow[lo:hi, :],
                              preferred_element_type=jnp.float32)
    attn = attn + ob_ref[0]
    x = x + attn * ls1_ref[0]           # layer-scale 1 + residual

    # ------------------------------- MLP --------------------------------------
    h = _ln(x, n2w_ref[0], n2b_ref[0])
    h = jnp.dot(h, f1w_ref[0], preferred_element_type=jnp.float32) + f1b_ref[0]
    h = _gelu(h)
    h = jnp.dot(h, f2w_ref[0], preferred_element_type=jnp.float32) + f2b_ref[0]
    x = x + h * ls2_ref[0]              # layer-scale 2 + residual

    x_sc[...] = x
    # every layer's hidden state goes out through the backbone's final
    # layernorm; the wrapper keeps only the OUT_INDICES levels.
    out_ref[0, 0] = _ln(x, flw_ref[0], flb_ref[0])


_STACKED = ['n1w', 'n1b', 'qkv_wT', 'qkv_b', 'o_wT', 'o_b', 'ls1',
            'n2w', 'n2b', 'fc1_wT', 'fc1_b', 'fc2_wT', 'fc2_b', 'ls2']


def pl_encoder(tokens, pp):
    """Run all 12 transformer layers in one pallas_call; returns the final-LN'd
    hidden state after every layer: (B, NUM_LAYERS, N, D)."""
    b, n, d = tokens.shape
    stacked = [pp[k] for k in _STACKED]
    in_specs = [pl.BlockSpec((1, n, d), lambda bb, ll: (bb, 0, 0))]
    for arr in stacked:
        in_specs.append(
            pl.BlockSpec((1, arr.shape[1], arr.shape[2]),
                         lambda bb, ll: (ll, 0, 0)))
    in_specs += [pl.BlockSpec((1, d), lambda bb, ll: (0, 0)),
                 pl.BlockSpec((1, d), lambda bb, ll: (0, 0))]
    return pl.pallas_call(
        _encoder_kernel,
        grid=(b, NUM_LAYERS),
        in_specs=in_specs,
        out_specs=pl.BlockSpec((1, 1, n, d), lambda bb, ll: (bb, ll, 0, 0)),
        out_shape=jax.ShapeDtypeStruct((b, NUM_LAYERS, n, d), jnp.float32),
        scratch_shapes=[pltpu.VMEM((n, d), jnp.float32)],
        compiler_params=pltpu.CompilerParams(
            dimension_semantics=("parallel", "arbitrary")),
    )(tokens.astype(jnp.float32), *stacked, pp['final_w'], pp['final_b'])


# ----------------------------- bilinear resize matrices -----------------------
def _resize_matrix(in_size, out_size, align_corners):
    """Row-stochastic 2-tap interpolation matrix matching torch bilinear."""
    m = np.zeros((out_size, in_size), np.float32)
    for i in range(out_size):
        if align_corners:
            src = i * (in_size - 1) / (out_size - 1) if out_size > 1 else 0.0
        else:
            src = (i + 0.5) * in_size / out_size - 0.5
            if src < 0.0:
                src = 0.0
        i0 = min(int(np.floor(src)), in_size - 1)
        i1 = min(i0 + 1, in_size - 1)
        lam = src - i0
        m[i, i0] += 1.0 - lam
        m[i, i1] += lam
    return m


def _input_resize_matrix(in_hw, out_hw):
    """(Hin*Win, Hout*Wout) separable-bilinear matrix, align_corners=True."""
    rh = _resize_matrix(in_hw[0], out_hw[0], True)
    rw = _resize_matrix(in_hw[1], out_hw[1], True)
    return jnp.asarray(np.kron(rh, rw).T.astype(np.float32))


def _feature_resize_matrix(hp, wp):
    """Block-diagonal matrix folding, for every output level, the x4 upsample
    (align_corners=False) composed with the rescale to output_shape/2**(i+1)
    (align_corners=True) into a single (hp*wp -> Ho*Wo) linear map."""
    up_hw = (hp * UPSAMPLE, wp * UPSAMPLE)
    rh1 = _resize_matrix(hp, up_hw[0], False)
    rw1 = _resize_matrix(wp, up_hw[1], False)
    blocks, out_hws = [], []
    for i in range(len(OUT_INDICES)):
        out_hw = (int(OUTPUT_SHAPE[0] / 2 ** (i + 1)),
                  int(OUTPUT_SHAPE[1] / 2 ** (i + 1)))
        rh = _resize_matrix(up_hw[0], out_hw[0], True) @ rh1   # (Ho, hp)
        rw = _resize_matrix(up_hw[1], out_hw[1], True) @ rw1   # (Wo, wp)
        blocks.append(np.kron(rh, rw).T.astype(np.float32))    # (hp*wp, Ho*Wo)
        out_hws.append(out_hw)
    p = hp * wp
    total = sum(h * w for h, w in out_hws)
    m = np.zeros((p * len(blocks), total), np.float32)
    off = 0
    for i, blk in enumerate(blocks):
        m[i * p:(i + 1) * p, off:off + blk.shape[1]] = blk
        off += blk.shape[1]
    return jnp.asarray(m), out_hws


# ----------------------------- full forward -----------------------------------
def incre_dino_forward(pixel_values, pp):
    b, c, hin, win = pixel_values.shape

    # 1) resize input to IMAGE_SHAPE (bilinear, align_corners=True): one matmul
    m_in = _input_resize_matrix((hin, win), IMAGE_SHAPE)
    x = pl_matmul(pixel_values.reshape(b * c, hin * win), m_in)
    x = x.reshape(b, c, IMAGE_SHAPE[0], IMAGE_SHAPE[1])

    # 2) patch embedding + cls token + position embedding
    hp, wp = IMAGE_SHAPE[0] // PATCH, IMAGE_SHAPE[1] // PATCH
    patches = (x.reshape(b, c, hp, PATCH, wp, PATCH)
               .transpose(0, 2, 4, 1, 3, 5)
               .reshape(b * hp * wp, c * PATCH * PATCH))
    emb = pl_linear(patches, pp['patch_wT'], pp['patch_b'])
    emb = emb.reshape(b, hp * wp, EMBED_DIM)
    cls = jnp.broadcast_to(pp['cls_token'], (b, 1, EMBED_DIM))
    tokens = jnp.concatenate([cls, emb], axis=1) + pp['pos_emb']

    # 3) fused 12-layer transformer (single pallas_call)
    hs = pl_encoder(tokens, pp)            # (B, 12, 1+hp*wp, D), final-LN'd

    # 4) selected feature maps, channel-major: (B, D, 5*hp*wp)
    sel = [i - 1 for i in OUT_INDICES]     # hidden_states[i] == output of layer i-1
    featT = jnp.concatenate(
        [jnp.swapaxes(hs[:, li, 1:, :], 1, 2) for li in sel], axis=2)

    # 5) all feature resizes (x4 upsample + per-level rescale) as ONE matmul
    m_feat, out_hws = _feature_resize_matrix(hp, wp)
    out_all = pl_matmul(featT.reshape(b * EMBED_DIM, -1), m_feat)
    out_all = out_all.reshape(b, EMBED_DIM, -1)
    outputs, off = [], 0
    for ho, wo in out_hws:
        outputs.append(out_all[:, :, off:off + ho * wo]
                       .reshape(b, EMBED_DIM, ho, wo))
        off += ho * wo
    return outputs


# ----------------------------- parameter init / prep --------------------------
def init_params(key):
    ks = iter(jax.random.split(key, 512))

    def rnd(shape, scale=0.02):
        return jax.random.normal(next(ks), shape, dtype=jnp.float32) * scale

    n_patches = (IMAGE_SHAPE[0] // PATCH) * (IMAGE_SHAPE[1] // PATCH)
    embed = dict(
        patch_w=rnd((EMBED_DIM, IN_CHANS, PATCH, PATCH)),
        patch_b=rnd((EMBED_DIM,)),
        cls_token=rnd((1, 1, EMBED_DIM)),
        # pos-embedding defined directly at the target grid (so the bicubic
        # pos-embedding interpolation of HF Dinov2 is the identity here).
        pos_emb=rnd((1, 1 + n_patches, EMBED_DIM)),
    )
    layers = []
    for _ in range(NUM_LAYERS):
        layers.append(dict(
            norm1_w=1.0 + rnd((EMBED_DIM,)), norm1_b=rnd((EMBED_DIM,)),
            q_w=rnd((EMBED_DIM, EMBED_DIM)), q_b=rnd((EMBED_DIM,)),
            k_w=rnd((EMBED_DIM, EMBED_DIM)), k_b=rnd((EMBED_DIM,)),
            v_w=rnd((EMBED_DIM, EMBED_DIM)), v_b=rnd((EMBED_DIM,)),
            # loralib init would be (A=kaiming, B=0) -> no-op; use small random
            # values so the merged-LoRA path is actually exercised.
            q_lora_A=rnd((LORA_R, EMBED_DIM)), q_lora_B=rnd((EMBED_DIM, LORA_R)),
            v_lora_A=rnd((LORA_R, EMBED_DIM)), v_lora_B=rnd((EMBED_DIM, LORA_R)),
            o_w=rnd((EMBED_DIM, EMBED_DIM)), o_b=rnd((EMBED_DIM,)),
            ls1=1e-5 + rnd((EMBED_DIM,), 1e-6),
            norm2_w=1.0 + rnd((EMBED_DIM,)), norm2_b=rnd((EMBED_DIM,)),
            fc1_w=rnd((EMBED_DIM * MLP_RATIO, EMBED_DIM)),
            fc1_b=rnd((EMBED_DIM * MLP_RATIO,)),
            fc2_w=rnd((EMBED_DIM, EMBED_DIM * MLP_RATIO)),
            fc2_b=rnd((EMBED_DIM,)),
            ls2=1e-5 + rnd((EMBED_DIM,), 1e-6),
        ))
    return dict(embed=embed, layers=layers,
                final_ln_w=1.0 + rnd((EMBED_DIM,)),
                final_ln_b=rnd((EMBED_DIM,)))


def prep_params(params):
    """One-time plain-JAX prep: merge LoRA (W + B@A, alpha/r=1), fuse QKV,
    pre-transpose all linear weights to (in, out), stack per-layer weights
    with a leading layer dimension for the fused encoder kernel."""
    lay = params['layers']

    def stack_vec(key):
        return jnp.stack([l[key] for l in lay])[:, None, :]       # (L, 1, ·)

    q_eff = jnp.stack([l['q_w'] + l['q_lora_B'] @ l['q_lora_A'] for l in lay])
    v_eff = jnp.stack([l['v_w'] + l['v_lora_B'] @ l['v_lora_A'] for l in lay])
    k_w = jnp.stack([l['k_w'] for l in lay])
    qkv_wT = jnp.concatenate([jnp.swapaxes(q_eff, 1, 2),
                              jnp.swapaxes(k_w, 1, 2),
                              jnp.swapaxes(v_eff, 1, 2)], axis=2)  # (L, D, 3D)
    qkv_b = jnp.concatenate([jnp.stack([l['q_b'] for l in lay]),
                             jnp.stack([l['k_b'] for l in lay]),
                             jnp.stack([l['v_b'] for l in lay])],
                            axis=1)[:, None, :]                    # (L, 1, 3D)
    emb = params['embed']
    return dict(
        patch_wT=emb['patch_w'].reshape(EMBED_DIM, -1).T,          # (588, 32)
        patch_b=emb['patch_b'].reshape(1, EMBED_DIM),
        cls_token=emb['cls_token'],
        pos_emb=emb['pos_emb'],
        n1w=stack_vec('norm1_w'), n1b=stack_vec('norm1_b'),
        qkv_wT=qkv_wT, qkv_b=qkv_b,
        o_wT=jnp.stack([l['o_w'].T for l in lay]),
        o_b=stack_vec('o_b'),
        ls1=stack_vec('ls1'),
        n2w=stack_vec('norm2_w'), n2b=stack_vec('norm2_b'),
        fc1_wT=jnp.stack([l['fc1_w'].T for l in lay]),
        fc1_b=stack_vec('fc1_b'),
        fc2_wT=jnp.stack([l['fc2_w'].T for l in lay]),
        fc2_b=stack_vec('fc2_b'),
        ls2=stack_vec('ls2'),
        final_w=params['final_ln_w'].reshape(1, EMBED_DIM),
        final_b=params['final_ln_b'].reshape(1, EMBED_DIM),
    )


# ----------------------------------- main --------------------------------------
if __name__ == "__main__":
    key = jax.random.PRNGKey(0)
    pkey, xkey = jax.random.split(key)
    params = init_params(pkey)
    prepped = prep_params(params)
    # batch=1: the reference forward_feature has a `len(x) == 2` quirk that
    # mis-fires (and errors) for batch==2, so a non-2 batch is used.
    pixel_values = jax.random.normal(xkey, (1, IN_CHANS, 16, 20), jnp.float32)

    fwd = jax.jit(incre_dino_forward)
    outs = fwd(pixel_values, prepped)
    outs = jax.block_until_ready(outs)

    expected = [(1, EMBED_DIM, int(OUTPUT_SHAPE[0] / 2 ** (i + 1)),
                 int(OUTPUT_SHAPE[1] / 2 ** (i + 1))) for i in range(5)]
    assert [tuple(o.shape) for o in outs] == expected
    assert all(bool(jnp.all(jnp.isfinite(o))) for o in outs)
    print("KERNEL_OK")
</pallas_src>

<mosaic_0001>
module attributes {stable_mosaic.version = 11 : i64} {
  func.func @_matmul_kernel(%arg0: memref<3x320xf32, #tpu.memory_space<vmem>>, %arg1: memref<320x1176xf32, #tpu.memory_space<vmem>>, %arg2: memref<3x1176xf32, #tpu.memory_space<vmem>>) attributes {dimension_semantics = [], scalar_prefetch = 0 : i64, scratch_operands = 0 : i64, tpu.core_type = #tpu.core_type<tc>} {
    %c0 = arith.constant 0 : index
    %c0_0 = arith.constant 0 : index
    %0 = vector.load %arg0[%c0, %c0_0] : memref<3x320xf32, #tpu.memory_space<vmem>>, vector<3x320xf32>
    %c0_1 = arith.constant 0 : index
    %c0_2 = arith.constant 0 : index
    %1 = vector.load %arg1[%c0_1, %c0_2] : memref<320x1176xf32, #tpu.memory_space<vmem>>, vector<320x1176xf32>
    %cst = arith.constant dense<0.000000e+00> : vector<3x1176xf32>
    %2 = tpu.matmul %0, %1, %cst {dimension_numbers = #tpu.dot_dimension_numbers<[1], [0], [0], [1], [0, 0, 1, 1], [], []>} : vector<3x320xf32>, vector<320x1176xf32>, vector<3x1176xf32> -> vector<3x1176xf32>
    %c0_3 = arith.constant 0 : index
    %c0_4 = arith.constant 0 : index
    %3 = vector.load %arg2[%c0_3, %c0_4] : memref<3x1176xf32, #tpu.memory_space<vmem>>, vector<3x1176xf32>
    tpu.vector_store %arg2[%c0_3, %c0_4], %2 {strides = array<i32>} : memref<3x1176xf32, #tpu.memory_space<vmem>>, vector<3x1176xf32>,
    return
  }
}

module attributes {stable_mosaic.version = 11 : i64} {
  func.func @_linear_kernel(%arg0: memref<6x588xf32, #tpu.memory_space<vmem>>, %arg1: memref<588x32xf32, #tpu.memory_space<vmem>>, %arg2: memref<1x32xf32, #tpu.memory_space<vmem>>, %arg3: memref<6x32xf32, #tpu.memory_space<vmem>>) attributes {dimension_semantics = [], scalar_prefetch = 0 : i64, scratch_operands = 0 : i64, tpu.core_type = #tpu.core_type<tc>} {
    %c0 = arith.constant 0 : index
    %c0_0 = arith.constant 0 : index
    %0 = vector.load %arg0[%c0, %c0_0] : memref<6x588xf32, #tpu.memory_space<vmem>>, vector<6x588xf32>
    %c0_1 = arith.constant 0 : index
    %c0_2 = arith.constant 0 : index
    %1 = vector.load %arg1[%c0_1, %c0_2] : memref<588x32xf32, #tpu.memory_space<vmem>>, vector<588x32xf32>
    %cst = arith.constant dense<0.000000e+00> : vector<6x32xf32>
    %2 = tpu.matmul %0, %1, %cst {dimension_numbers = #tpu.dot_dimension_numbers<[1], [0], [0], [1], [0, 0, 1, 1], [], []>} : vector<6x588xf32>, vector<588x32xf32>, vector<6x32xf32> -> vector<6x32xf32>
    %c0_3 = arith.constant 0 : index
    %c0_4 = arith.constant 0 : index
    %3 = vector.load %arg2[%c0_3, %c0_4] : memref<1x32xf32, #tpu.memory_space<vmem>>, vector<1x32xf32>
    %4 = vector.broadcast %3 : vector<1x32xf32> to vector<6x32xf32>
    %5 = arith.addf %2, %4 : vector<6x32xf32>
    %c0_5 = arith.constant 0 : index
    %c0_6 = arith.constant 0 : index
    %6 = vector.load %arg3[%c0_5, %c0_6] : memref<6x32xf32, #tpu.memory_space<vmem>>, vector<6x32xf32>
    tpu.vector_store %arg3[%c0_5, %c0_6], %5 {strides = array<i32>} : memref<6x32xf32, #tpu.memory_space<vmem>>, vector<6x32xf32>,
    return
  }
}

module attributes {stable_mosaic.version = 11 : i64} {
  func.func @_encoder_kernel(%arg0: i32, %arg1: i32, %arg2: memref<1x7x32xf32, #tpu.memory_space<vmem>>, %arg3: memref<1x1x32xf32, #tpu.memory_space<vmem>>, %arg4: memref<1x1x32xf32, #tpu.memory_space<vmem>>, %arg5: memref<1x32x96xf32, #tpu.memory_space<vmem>>, %arg6: memref<1x1x96xf32, #tpu.memory_space<vmem>>, %arg7: memref<1x32x32xf32, #tpu.memory_space<vmem>>, %arg8: memref<1x1x32xf32, #tpu.memory_space<vmem>>, %arg9: memref<1x1x32xf32, #tpu.memory_space<vmem>>, %arg10: memref<1x1x32xf32, #tpu.memory_space<vmem>>, %arg11: memref<1x1x32xf32, #tpu.memory_space<vmem>>, %arg12: memref<1x32x128xf32, #tpu.memory_space<vmem>>, %arg13: memref<1x1x128xf32, #tpu.memory_space<vmem>>, %arg14: memref<1x128x32xf32, #tpu.memory_space<vmem>>, %arg15: memref<1x1x32xf32, #tpu.memory_space<vmem>>, %arg16: memref<1x1x32xf32, #tpu.memory_space<vmem>>, %arg17: memref<1x32xf32, #tpu.memory_space<vmem>>, %arg18: memref<1x32xf32, #tpu.memory_space<vmem>>, %arg19: memref<1x1x7x32xf32, #tpu.memory_space<vmem>>, %arg20: memref<7x32xf32, #tpu.memory_space<vmem>>) attributes {dimension_semantics = [#tpu.dimension_semantics<parallel>, #tpu.dimension_semantics<arbitrary>], iteration_bounds = array<i64: 1, 12>, scalar_prefetch = 0 : i64, scratch_operands = 1 : i64, tpu.core_type = #tpu.core_type<tc>, window_params = [{transform_indices = @transform_0, window_bounds = array<i64: 1, 7, 32>}, {transform_indices = @transform_1, window_bounds = array<i64: 1, 1, 32>}, {transform_indices = @transform_2, window_bounds = array<i64: 1, 1, 32>}, {transform_indices = @transform_3, window_bounds = array<i64: 1, 32, 96>}, {transform_indices = @transform_4, window_bounds = array<i64: 1, 1, 96>}, {transform_indices = @transform_5, window_bounds = array<i64: 1, 32, 32>}, {transform_indices = @transform_6, window_bounds = array<i64: 1, 1, 32>}, {transform_indices = @transform_7, window_bounds = array<i64: 1, 1, 32>}, {transform_indices = @transform_8, window_bounds = array<i64: 1, 1, 32>}, {transform_indices = @transform_9, window_bounds = array<i64: 1, 1, 32>}, {transform_indices = @transform_10, window_bounds = array<i64: 1, 32, 128>}, {transform_indices = @transform_11, window_bounds = array<i64: 1, 1, 128>}, {transform_indices = @transform_12, window_bounds = array<i64: 1, 128, 32>}, {transform_indices = @transform_13, window_bounds = array<i64: 1, 1, 32>}, {transform_indices = @transform_14, window_bounds = array<i64: 1, 1, 32>}, {pipeline_mode = #tpu.pipeline_mode<synchronous>, transform_indices = @transform_15, window_bounds = array<i64: 1, 32>}, {pipeline_mode = #tpu.pipeline_mode<synchronous>, transform_indices = @transform_16, window_bounds = array<i64: 1, 32>}, {transform_indices = @transform_17, window_bounds = array<i64: 1, 1, 7, 32>}]} {
    %c0_i32 = arith.constant 0 : i32
    %0 = arith.cmpi eq, %arg1, %c0_i32 : i32
    %1 = arith.extui %0 : i1 to i32
    %c0_i32_0 = arith.constant 0 : i32
    %2 = arith.cmpi ne, %1, %c0_i32_0 : i32
    scf.if %2 {
      %c0_100 = arith.constant 0 : index
      %c0_101 = arith.constant 0 : index
      %c0_102 = arith.constant 0 : index
      %215 = vector.load %arg2[%c0_100, %c0_101, %c0_102] : memref<1x7x32xf32, #tpu.memory_space<vmem>>, vector<1x7x32xf32>
      %216 = vector.shape_cast %215 : vector<1x7x32xf32> to vector<7x32xf32>
      %c0_103 = arith.constant 0 : index
      %c0_104 = arith.constant 0 : index
      %217 = vector.load %arg20[%c0_103, %c0_104] : memref<7x32xf32, #tpu.memory_space<vmem>>, vector<7x32xf32>
      tpu.vector_store %arg20[%c0_103, %c0_104], %216 {strides = array<i32>} : memref<7x32xf32, #tpu.memory_space<vmem>>, vector<7x32xf32>,
    } else {
    }
    %c0 = arith.constant 0 : index
    %c0_1 = arith.constant 0 : index
    %3 = vector.load %arg20[%c0, %c0_1] : memref<7x32xf32, #tpu.memory_space<vmem>>, vector<7x32xf32>
    %c0_2 = arith.constant 0 : index
    %c0_3 = arith.constant 0 : index
    %c0_4 = arith.constant 0 : index
    %4 = vector.load %arg3[%c0_2, %c0_3, %c0_4] : memref<1x1x32xf32, #tpu.memory_space<vmem>>, vector<1x1x32xf32>
    %5 = vector.shape_cast %4 : vector<1x1x32xf32> to vector<1x32xf32>
    %c0_5 = arith.constant 0 : index
    %c0_6 = arith.constant 0 : index
    %c0_7 = arith.constant 0 : index
    %6 = vector.load %arg4[%c0_5, %c0_6, %c0_7] : memref<1x1x32xf32, #tpu.memory_space<vmem>>, vector<1x1x32xf32>
    %7 = vector.shape_cast %6 : vector<1x1x32xf32> to vector<1x32xf32>
    %cst = arith.constant dense<0.000000e+00> : vector<7xf32>
    %8 = vector.multi_reduction <add>, %3, %cst [1] : vector<7x32xf32> to vector<7xf32>
    %9 = vector.shape_cast %8 : vector<7xf32> to vector<7x1xf32>
    %cst_8 = arith.constant 3.200000e+01 : f32
    %10 = vector.broadcast %cst_8 : f32 to vector<7x1xf32>
    %11 = arith.divf %9, %10 : vector<7x1xf32>
    %12 = vector.broadcast %11 : vector<7x1xf32> to vector<7x32xf32>
    %13 = arith.subf %3, %12 : vector<7x32xf32>
    %14 = arith.mulf %13, %13 : vector<7x32xf32>
    %cst_9 = arith.constant dense<0.000000e+00> : vector<7xf32>
    %15 = vector.multi_reduction <add>, %14, %cst_9 [1] : vector<7x32xf32> to vector<7xf32>
    %16 = vector.shape_cast %15 : vector<7xf32> to vector<7x1xf32>
    %cst_10 = arith.constant 3.200000e+01 : f32
    %17 = vector.broadcast %cst_10 : f32 to vector<7x1xf32>
    %18 = arith.divf %16, %17 : vector<7x1xf32>
    %19 = vector.broadcast %11 : vector<7x1xf32> to vector<7x32xf32>
    %20 = arith.subf %3, %19 : vector<7x32xf32>
    %cst_11 = arith.constant 9.99999997E-7 : f32
    %21 = vector.broadcast %cst_11 : f32 to vector<7x1xf32>
    %22 = arith.addf %18, %21 : vector<7x1xf32>
    %23 = math.rsqrt %22 : vector<7x1xf32>
    %24 = vector.broadcast %23 : vector<7x1xf32> to vector<7x32xf32>
    %25 = arith.mulf %20, %24 : vector<7x32xf32>
    %26 = vector.broadcast %5 : vector<1x32xf32> to vector<7x32xf32>
    %27 = arith.mulf %25, %26 : vector<7x32xf32>
    %28 = vector.broadcast %7 : vector<1x32xf32> to vector<7x32xf32>
    %29 = arith.addf %27, %28 : vector<7x32xf32>
    %c0_12 = arith.constant 0 : index
    %c0_13 = arith.constant 0 : index
    %c0_14 = arith.constant 0 : index
    %30 = vector.load %arg5[%c0_12, %c0_13, %c0_14] : memref<1x32x96xf32, #tpu.memory_space<vmem>>, vector<1x32x96xf32>
    %31 = vector.shape_cast %30 : vector<1x32x96xf32> to vector<32x96xf32>
    %cst_15 = arith.constant dense<0.000000e+00> : vector<7x96xf32>
    %32 = tpu.matmul %29, %31, %cst_15 {dimension_numbers = #tpu.dot_dimension_numbers<[1], [0], [0], [1], [0, 0, 1, 1], [], []>} : vector<7x32xf32>, vector<32x96xf32>, vector<7x96xf32> -> vector<7x96xf32>
    %c0_16 = arith.constant 0 : index
    %c0_17 = arith.constant 0 : index
    %c0_18 = arith.constant 0 : index
    %33 = vector.load %arg6[%c0_16, %c0_17, %c0_18] : memref<1x1x96xf32, #tpu.memory_space<vmem>>, vector<1x1x96xf32>
    %34 = vector.shape_cast %33 : vector<1x1x96xf32> to vector<1x96xf32>
    %35 = vector.broadcast %34 : vector<1x96xf32> to vector<7x96xf32>
    %36 = arith.addf %32, %35 : vector<7x96xf32>
    %c0_19 = arith.constant 0 : index
    %c0_20 = arith.constant 0 : index
    %c0_21 = arith.constant 0 : index
    %37 = vector.load %arg7[%c0_19, %c0_20, %c0_21] : memref<1x32x32xf32, #tpu.memory_space<vmem>>, vector<1x32x32xf32>
    %38 = vector.shape_cast %37 : vector<1x32x32xf32> to vector<32x32xf32>
    %cst_22 = arith.constant 0.000000e+00 : f32
    %39 = vector.broadcast %cst_22 : f32 to vector<7x32xf32>
    %40 = vector.extract_strided_slice %36 {offsets = [0, 0], sizes = [7, 8], strides = [1, 1]} : vector<7x96xf32> to vector<7x8xf32>
    %41 = vector.extract_strided_slice %36 {offsets = [0, 32], sizes = [7, 8], strides = [1, 1]} : vector<7x96xf32> to vector<7x8xf32>
    %42 = vector.extract_strided_slice %36 {offsets = [0, 64], sizes = [7, 8], strides = [1, 1]} : vector<7x96xf32> to vector<7x8xf32>
    %cst_23 = arith.constant dense<0.000000e+00> : vector<7x7xf32>
    %43 = tpu.matmul %40, %41, %cst_23 {dimension_numbers = #tpu.dot_dimension_numbers<[1], [1], [0], [0], [0, 0, 1, 0], [], []>} : vector<7x8xf32>, vector<7x8xf32>, vector<7x7xf32> -> vector<7x7xf32>
    %cst_24 = arith.constant 0.353553385 : f32
    %44 = vector.broadcast %cst_24 : f32 to vector<7x7xf32>
    %45 = arith.mulf %43, %44 : vector<7x7xf32>
    %cst_25 = arith.constant dense<0xFF800000> : vector<7xf32>
    %46 = vector.multi_reduction <maximumf>, %45, %cst_25 [1] : vector<7x7xf32> to vector<7xf32>
    %47 = vector.shape_cast %46 : vector<7xf32> to vector<7x1xf32>
    %48 = vector.broadcast %47 : vector<7x1xf32> to vector<7x7xf32>
    %49 = arith.subf %45, %48 : vector<7x7xf32>
    %50 = math.exp %49 : vector<7x7xf32>
    %cst_26 = arith.constant dense<0.000000e+00> : vector<7xf32>
    %51 = vector.multi_reduction <add>, %50, %cst_26 [1] : vector<7x7xf32> to vector<7xf32>
    %52 = vector.shape_cast %51 : vector<7xf32> to vector<7x1xf32>
    %53 = vector.broadcast %52 : vector<7x1xf32> to vector<7x7xf32>
    %54 = arith.divf %50, %53 : vector<7x7xf32>
    %cst_27 = arith.constant dense<0.000000e+00> : vector<7x8xf32>
    %55 = tpu.matmul %54, %42, %cst_27 {dimension_numbers = #tpu.dot_dimension_numbers<[1], [0], [0], [1], [0, 0, 1, 1], [], []>} : vector<7x7xf32>, vector<7x8xf32>, vector<7x8xf32> -> vector<7x8xf32>
    %56 = vector.extract_strided_slice %38 {offsets = [0, 0], sizes = [8, 32], strides = [1, 1]} : vector<32x32xf32> to vector<8x32xf32>
    %cst_28 = arith.constant dense<0.000000e+00> : vector<7x32xf32>
    %57 = tpu.matmul %55, %56, %cst_28 {dimension_numbers = #tpu.dot_dimension_numbers<[1], [0], [0], [1], [0, 0, 1, 1], [], []>} : vector<7x8xf32>, vector<8x32xf32>, vector<7x32xf32> -> vector<7x32xf32>
    %58 = arith.addf %39, %57 : vector<7x32xf32>
    %59 = vector.extract_strided_slice %36 {offsets = [0, 8], sizes = [7, 8], strides = [1, 1]} : vector<7x96xf32> to vector<7x8xf32>
    %60 = vector.extract_strided_slice %36 {offsets = [0, 40], sizes = [7, 8], strides = [1, 1]} : vector<7x96xf32> to vector<7x8xf32>
    %61 = vector.extract_strided_slice %36 {offsets = [0, 72], sizes = [7, 8], strides = [1, 1]} : vector<7x96xf32> to vector<7x8xf32>
    %cst_29 = arith.constant dense<0.000000e+00> : vector<7x7xf32>
    %62 = tpu.matmul %59, %60, %cst_29 {dimension_numbers = #tpu.dot_dimension_numbers<[1], [1], [0], [0], [0, 0, 1, 0], [], []>} : vector<7x8xf32>, vector<7x8xf32>, vector<7x7xf32> -> vector<7x7xf32>
    %cst_30 = arith.constant 0.353553385 : f32
    %63 = vector.broadcast %cst_30 : f32 to vector<7x7xf32>
    %64 = arith.mulf %62, %63 : vector<7x7xf32>
    %cst_31 = arith.constant dense<0xFF800000> : vector<7xf32>
    %65 = vector.multi_reduction <maximumf>, %64, %cst_31 [1] : vector<7x7xf32> to vector<7xf32>
    %66 = vector.shape_cast %65 : vector<7xf32> to vector<7x1xf32>
    %67 = vector.broadcast %66 : vector<7x1xf32> to vector<7x7xf32>
    %68 = arith.subf %64, %67 : vector<7x7xf32>
    %69 = math.exp %68 : vector<7x7xf32>
    %cst_32 = arith.constant dense<0.000000e+00> : vector<7xf32>
    %70 = vector.multi_reduction <add>, %69, %cst_32 [1] : vector<7x7xf32> to vector<7xf32>
    %71 = vector.shape_cast %70 : vector<7xf32> to vector<7x1xf32>
    %72 = vector.broadcast %71 : vector<7x1xf32> to vector<7x7xf32>
    %73 = arith.divf %69, %72 : vector<7x7xf32>
    %cst_33 = arith.constant dense<0.000000e+00> : vector<7x8xf32>
    %74 = tpu.matmul %73, %61, %cst_33 {dimension_numbers = #tpu.dot_dimension_numbers<[1], [0], [0], [1], [0, 0, 1, 1], [], []>} : vector<7x7xf32>, vector<7x8xf32>, vector<7x8xf32> -> vector<7x8xf32>
    %75 = vector.extract_strided_slice %38 {offsets = [8, 0], sizes = [8, 32], strides = [1, 1]} : vector<32x32xf32> to vector<8x32xf32>
    %cst_34 = arith.constant dense<0.000000e+00> : vector<7x32xf32>
    %76 = tpu.matmul %74, %75, %cst_34 {dimension_numbers = #tpu.dot_dimension_numbers<[1], [0], [0], [1], [0, 0, 1, 1], [], []>} : vector<7x8xf32>, vector<8x32xf32>, vector<7x32xf32> -> vector<7x32xf32>
    %77 = arith.addf %58, %76 : vector<7x32xf32>
    %78 = vector.extract_strided_slice %36 {offsets = [0, 16], sizes = [7, 8], strides = [1, 1]} : vector<7x96xf32> to vector<7x8xf32>
    %79 = vector.extract_strided_slice %36 {offsets = [0, 48], sizes = [7, 8], strides = [1, 1]} : vector<7x96xf32> to vector<7x8xf32>
    %80 = vector.extract_strided_slice %36 {offsets = [0, 80], sizes = [7, 8], strides = [1, 1]} : vector<7x96xf32> to vector<7x8xf32>
    %cst_35 = arith.constant dense<0.000000e+00> : vector<7x7xf32>
    %81 = tpu.matmul %78, %79, %cst_35 {dimension_numbers = #tpu.dot_dimension_numbers<[1], [1], [0], [0], [0, 0, 1, 0], [], []>} : vector<7x8xf32>, vector<7x8xf32>, vector<7x7xf32> -> vector<7x7xf32>
    %cst_36 = arith.constant 0.353553385 : f32
    %82 = vector.broadcast %cst_36 : f32 to vector<7x7xf32>
    %83 = arith.mulf %81, %82 : vector<7x7xf32>
    %cst_37 = arith.constant dense<0xFF800000> : vector<7xf32>
    %84 = vector.multi_reduction <maximumf>, %83, %cst_37 [1] : vector<7x7xf32> to vector<7xf32>
    %85 = vector.shape_cast %84 : vector<7xf32> to vector<7x1xf32>
    %86 = vector.broadcast %85 : vector<7x1xf32> to vector<7x7xf32>
    %87 = arith.subf %83, %86 : vector<7x7xf32>
    %88 = math.exp %87 : vector<7x7xf32>
    %cst_38 = arith.constant dense<0.000000e+00> : vector<7xf32>
    %89 = vector.multi_reduction <add>, %88, %cst_38 [1] : vector<7x7xf32> to vector<7xf32>
    %90 = vector.shape_cast %89 : vector<7xf32> to vector<7x1xf32>
    %91 = vector.broadcast %90 : vector<7x1xf32> to vector<7x7xf32>
    %92 = arith.divf %88, %91 : vector<7x7xf32>
    %cst_39 = arith.constant dense<0.000000e+00> : vector<7x8xf32>
    %93 = tpu.matmul %92, %80, %cst_39 {dimension_numbers = #tpu.dot_dimension_numbers<[1], [0], [0], [1], [0, 0, 1, 1], [], []>} : vector<7x7xf32>, vector<7x8xf32>, vector<7x8xf32> -> vector<7x8xf32>
    %94 = vector.extract_strided_slice %38 {offsets = [16, 0], sizes = [8, 32], strides = [1, 1]} : vector<32x32xf32> to vector<8x32xf32>
    %cst_40 = arith.constant dense<0.000000e+00> : vector<7x32xf32>
    %95 = tpu.matmul %93, %94, %cst_40 {dimension_numbers = #tpu.dot_dimension_numbers<[1], [0], [0], [1], [0, 0, 1, 1], [], []>} : vector<7x8xf32>, vector<8x32xf32>, vector<7x32xf32> -> vector<7x32xf32>
    %96 = arith.addf %77, %95 : vector<7x32xf32>
    %97 = vector.extract_strided_slice %36 {offsets = [0, 24], sizes = [7, 8], strides = [1, 1]} : vector<7x96xf32> to vector<7x8xf32>
    %98 = vector.extract_strided_slice %36 {offsets = [0, 56], sizes = [7, 8], strides = [1, 1]} : vector<7x96xf32> to vector<7x8xf32>
    %99 = vector.extract_strided_slice %36 {offsets = [0, 88], sizes = [7, 8], strides = [1, 1]} : vector<7x96xf32> to vector<7x8xf32>
    %cst_41 = arith.constant dense<0.000000e+00> : vector<7x7xf32>
    %100 = tpu.matmul %97, %98, %cst_41 {dimension_numbers = #tpu.dot_dimension_numbers<[1], [1], [0], [0], [0, 0, 1, 0], [], []>} : vector<7x8xf32>, vector<7x8xf32>, vector<7x7xf32> -> vector<7x7xf32>
    %cst_42 = arith.constant 0.353553385 : f32
    %101 = vector.broadcast %cst_42 : f32 to vector<7x7xf32>
    %102 = arith.mulf %100, %101 : vector<7x7xf32>
    %cst_43 = arith.constant dense<0xFF800000> : vector<7xf32>
    %103 = vector.multi_reduction <maximumf>, %102, %cst_43 [1] : vector<7x7xf32> to vector<7xf32>
    %104 = vector.shape_cast %103 : vector<7xf32> to vector<7x1xf32>
    %105 = vector.broadcast %104 : vector<7x1xf32> to vector<7x7xf32>
    %106 = arith.subf %102, %105 : vector<7x7xf32>
    %107 = math.exp %106 : vector<7x7xf32>
    %cst_44 = arith.constant dense<0.000000e+00> : vector<7xf32>
    %108 = vector.multi_reduction <add>, %107, %cst_44 [1] : vector<7x7xf32> to vector<7xf32>
    %109 = vector.shape_cast %108 : vector<7xf32> to vector<7x1xf32>
    %110 = vector.broadcast %109 : vector<7x1xf32> to vector<7x7xf32>
    %111 = arith.divf %107, %110 : vector<7x7xf32>
    %cst_45 = arith.constant dense<0.000000e+00> : vector<7x8xf32>
    %112 = tpu.matmul %111, %99, %cst_45 {dimension_numbers = #tpu.dot_dimension_numbers<[1], [0], [0], [1], [0, 0, 1, 1], [], []>} : vector<7x7xf32>, vector<7x8xf32>, vector<7x8xf32> -> vector<7x8xf32>
    %113 = vector.extract_strided_slice %38 {offsets = [24, 0], sizes = [8, 32], strides = [1, 1]} : vector<32x32xf32> to vector<8x32xf32>
    %cst_46 = arith.constant dense<0.000000e+00> : vector<7x32xf32>
    %114 = tpu.matmul %112, %113, %cst_46 {dimension_numbers = #tpu.dot_dimension_numbers<[1], [0], [0], [1], [0, 0, 1, 1], [], []>} : vector<7x8xf32>, vector<8x32xf32>, vector<7x32xf32> -> vector<7x32xf32>
    %115 = arith.addf %96, %114 : vector<7x32xf32>
    %c0_47 = arith.constant 0 : index
    %c0_48 = arith.constant 0 : index
    %c0_49 = arith.constant 0 : index
    %116 = vector.load %arg8[%c0_47, %c0_48, %c0_49] : memref<1x1x32xf32, #tpu.memory_space<vmem>>, vector<1x1x32xf32>
    %117 = vector.shape_cast %116 : vector<1x1x32xf32> to vector<1x32xf32>
    %118 = vector.broadcast %117 : vector<1x32xf32> to vector<7x32xf32>
    %119 = arith.addf %115, %118 : vector<7x32xf32>
    %c0_50 = arith.constant 0 : index
    %c0_51 = arith.constant 0 : index
    %c0_52 = arith.constant 0 : index
    %120 = vector.load %arg9[%c0_50, %c0_51, %c0_52] : memref<1x1x32xf32, #tpu.memory_space<vmem>>, vector<1x1x32xf32>
    %121 = vector.shape_cast %120 : vector<1x1x32xf32> to vector<1x32xf32>
    %122 = vector.broadcast %121 : vector<1x32xf32> to vector<7x32xf32>
    %123 = arith.mulf %119, %122 : vector<7x32xf32>
    %124 = arith.addf %3, %123 : vector<7x32xf32>
    %c0_53 = arith.constant 0 : index
    %c0_54 = arith.constant 0 : index
    %c0_55 = arith.constant 0 : index
    %125 = vector.load %arg10[%c0_53, %c0_54, %c0_55] : memref<1x1x32xf32, #tpu.memory_space<vmem>>, vector<1x1x32xf32>
    %126 = vector.shape_cast %125 : vector<1x1x32xf32> to vector<1x32xf32>
    %c0_56 = arith.constant 0 : index
    %c0_57 = arith.constant 0 : index
    %c0_58 = arith.constant 0 : index
    %127 = vector.load %arg11[%c0_56, %c0_57, %c0_58] : memref<1x1x32xf32, #tpu.memory_space<vmem>>, vector<1x1x32xf32>
    %128 = vector.shape_cast %127 : vector<1x1x32xf32> to vector<1x32xf32>
    %cst_59 = arith.constant dense<0.000000e+00> : vector<7xf32>
    %129 = vector.multi_reduction <add>, %124, %cst_59 [1] : vector<7x32xf32> to vector<7xf32>
    %130 = vector.shape_cast %129 : vector<7xf32> to vector<7x1xf32>
    %cst_60 = arith.constant 3.200000e+01 : f32
    %131 = vector.broadcast %cst_60 : f32 to vector<7x1xf32>
    %132 = arith.divf %130, %131 : vector<7x1xf32>
    %133 = vector.broadcast %132 : vector<7x1xf32> to vector<7x32xf32>
    %134 = arith.subf %124, %133 : vector<7x32xf32>
    %135 = arith.mulf %134, %134 : vector<7x32xf32>
    %cst_61 = arith.constant dense<0.000000e+00> : vector<7xf32>
    %136 = vector.multi_reduction <add>, %135, %cst_61 [1] : vector<7x32xf32> to vector<7xf32>
    %137 = vector.shape_cast %136 : vector<7xf32> to vector<7x1xf32>
    %cst_62 = arith.constant 3.200000e+01 : f32
    %138 = vector.broadcast %cst_62 : f32 to vector<7x1xf32>
    %139 = arith.divf %137, %138 : vector<7x1xf32>
    %140 = vector.broadcast %132 : vector<7x1xf32> to vector<7x32xf32>
    %141 = arith.subf %124, %140 : vector<7x32xf32>
    %cst_63 = arith.constant 9.99999997E-7 : f32
    %142 = vector.broadcast %cst_63 : f32 to vector<7x1xf32>
    %143 = arith.addf %139, %142 : vector<7x1xf32>
    %144 = math.rsqrt %143 : vector<7x1xf32>
    %145 = vector.broadcast %144 : vector<7x1xf32> to vector<7x32xf32>
    %146 = arith.mulf %141, %145 : vector<7x32xf32>
    %147 = vector.broadcast %126 : vector<1x32xf32> to vector<7x32xf32>
    %148 = arith.mulf %146, %147 : vector<7x32xf32>
    %149 = vector.broadcast %128 : vector<1x32xf32> to vector<7x32xf32>
    %150 = arith.addf %148, %149 : vector<7x32xf32>
    %c0_64 = arith.constant 0 : index
    %c0_65 = arith.constant 0 : index
    %c0_66 = arith.constant 0 : index
    %151 = vector.load %arg12[%c0_64, %c0_65, %c0_66] : memref<1x32x128xf32, #tpu.memory_space<vmem>>, vector<1x32x128xf32>
    %152 = vector.shape_cast %151 : vector<1x32x128xf32> to vector<32x128xf32>
    %cst_67 = arith.constant dense<0.000000e+00> : vector<7x128xf32>
    %153 = tpu.matmul %150, %152, %cst_67 {dimension_numbers = #tpu.dot_dimension_numbers<[1], [0], [0], [1], [0, 0, 1, 1], [], []>} : vector<7x32xf32>, vector<32x128xf32>, vector<7x128xf32> -> vector<7x128xf32>
    %c0_68 = arith.constant 0 : index
    %c0_69 = arith.constant 0 : index
    %c0_70 = arith.constant 0 : index
    %154 = vector.load %arg13[%c0_68, %c0_69, %c0_70] : memref<1x1x128xf32, #tpu.memory_space<vmem>>, vector<1x1x128xf32>
    %155 = vector.shape_cast %154 : vector<1x1x128xf32> to vector<1x128xf32>
    %156 = vector.broadcast %155 : vector<1x128xf32> to vector<7x128xf32>
    %157 = arith.addf %153, %156 : vector<7x128xf32>
    %cst_71 = arith.constant 5.000000e-01 : f32
    %158 = vector.broadcast %cst_71 : f32 to vector<7x128xf32>
    %159 = arith.mulf %158, %157 : vector<7x128xf32>
    %cst_72 = arith.constant 4.471500e-02 : f32
    %160 = vector.broadcast %cst_72 : f32 to vector<7x128xf32>
    %161 = arith.mulf %160, %157 : vector<7x128xf32>
    %162 = arith.mulf %161, %157 : vector<7x128xf32>
    %163 = arith.mulf %162, %157 : vector<7x128xf32>
    %164 = arith.addf %157, %163 : vector<7x128xf32>
    %cst_73 = arith.constant 0.797884583 : f32
    %165 = vector.broadcast %cst_73 : f32 to vector<7x128xf32>
    %166 = arith.mulf %165, %164 : vector<7x128xf32>
    %167 = math.tanh %166 : vector<7x128xf32>
    %cst_74 = arith.constant 1.000000e+00 : f32
    %168 = vector.broadcast %cst_74 : f32 to vector<7x128xf32>
    %169 = arith.addf %168, %167 : vector<7x128xf32>
    %170 = arith.mulf %159, %169 : vector<7x128xf32>
    %c0_75 = arith.constant 0 : index
    %c0_76 = arith.constant 0 : index
    %c0_77 = arith.constant 0 : index
    %171 = vector.load %arg14[%c0_75, %c0_76, %c0_77] : memref<1x128x32xf32, #tpu.memory_space<vmem>>, vector<1x128x32xf32>
    %172 = vector.shape_cast %171 : vector<1x128x32xf32> to vector<128x32xf32>
    %cst_78 = arith.constant dense<0.000000e+00> : vector<7x32xf32>
    %173 = tpu.matmul %170, %172, %cst_78 {dimension_numbers = #tpu.dot_dimension_numbers<[1], [0], [0], [1], [0, 0, 1, 1], [], []>} : vector<7x128xf32>, vector<128x32xf32>, vector<7x32xf32> -> vector<7x32xf32>
    %c0_79 = arith.constant 0 : index
    %c0_80 = arith.constant 0 : index
    %c0_81 = arith.constant 0 : index
    %174 = vector.load %arg15[%c0_79, %c0_80, %c0_81] : memref<1x1x32xf32, #tpu.memory_space<vmem>>, vector<1x1x32xf32>
    %175 = vector.shape_cast %174 : vector<1x1x32xf32> to vector<1x32xf32>
    %176 = vector.broadcast %175 : vector<1x32xf32> to vector<7x32xf32>
    %177 = arith.addf %173, %176 : vector<7x32xf32>
    %c0_82 = arith.constant 0 : index
    %c0_83 = arith.constant 0 : index
    %c0_84 = arith.constant 0 : index
    %178 = vector.load %arg16[%c0_82, %c0_83, %c0_84] : memref<1x1x32xf32, #tpu.memory_space<vmem>>, vector<1x1x32xf32>
    %179 = vector.shape_cast %178 : vector<1x1x32xf32> to vector<1x32xf32>
    %180 = vector.broadcast %179 : vector<1x32xf32> to vector<7x32xf32>
    %181 = arith.mulf %177, %180 : vector<7x32xf32>
    %182 = arith.addf %124, %181 : vector<7x32xf32>
    %c0_85 = arith.constant 0 : index
    %c0_86 = arith.constant 0 : index
    %183 = vector.load %arg20[%c0_85, %c0_86] : memref<7x32xf32, #tpu.memory_space<vmem>>, vector<7x32xf32>
    tpu.vector_store %arg20[%c0_85, %c0_86], %182 {strides = array<i32>} : memref<7x32xf32, #tpu.memory_space<vmem>>, vector<7x32xf32>,
    %c0_87 = arith.constant 0 : index
    %c0_88 = arith.constant 0 : index
    %184 = vector.load %arg17[%c0_87, %c0_88] : memref<1x32xf32, #tpu.memory_space<vmem>>, vector<1x32xf32>
    %185 = vector.shape_cast %184 : vector<1x32xf32> to vector<32xf32>
    %c0_89 = arith.constant 0 : index
    %c0_90 = arith.constant 0 : index
    %186 = vector.load %arg18[%c0_89, %c0_90] : memref<1x32xf32, #tpu.memory_space<vmem>>, vector<1x32xf32>
    %187 = vector.shape_cast %186 : vector<1x32xf32> to vector<32xf32>
    %cst_91 = arith.constant dense<0.000000e+00> : vector<7xf32>
    %188 = vector.multi_reduction <add>, %182, %cst_91 [1] : vector<7x32xf32> to vector<7xf32>
    %189 = vector.shape_cast %188 : vector<7xf32> to vector<7x1xf32>
    %cst_92 = arith.constant 3.200000e+01 : f32
    %190 = vector.broadcast %cst_92 : f32 to vector<7x1xf32>
    %191 = arith.divf %189, %190 : vector<7x1xf32>
    %192 = vector.broadcast %191 : vector<7x1xf32> to vector<7x32xf32>
    %193 = arith.subf %182, %192 : vector<7x32xf32>
    %194 = arith.mulf %193, %193 : vector<7x32xf32>
    %cst_93 = arith.constant dense<0.000000e+00> : vector<7xf32>
    %195 = vector.multi_reduction <add>, %194, %cst_93 [1] : vector<7x32xf32> to vector<7xf32>
    %196 = vector.shape_cast %195 : vector<7xf32> to vector<7x1xf32>
    %cst_94 = arith.constant 3.200000e+01 : f32
    %197 = vector.broadcast %cst_94 : f32 to vector<7x1xf32>
    %198 = arith.divf %196, %197 : vector<7x1xf32>
    %199 = vector.broadcast %191 : vector<7x1xf32> to vector<7x32xf32>
    %200 = arith.subf %182, %199 : vector<7x32xf32>
    %cst_95 = arith.constant 9.99999997E-7 : f32
    %201 = vector.broadcast %cst_95 : f32 to vector<7x1xf32>
    %202 = arith.addf %198, %201 : vector<7x1xf32>
    %203 = math.rsqrt %202 : vector<7x1xf32>
    %204 = vector.broadcast %203 : vector<7x1xf32> to vector<7x32xf32>
    %205 = arith.mulf %200, %204 : vector<7x32xf32>
    %206 = vector.shape_cast %185 : vector<32xf32> to vector<1x32xf32>
    %207 = vector.broadcast %206 : vector<1x32xf32> to vector<7x32xf32>
    %208 = arith.mulf %205, %207 : vector<7x32xf32>
    %209 = vector.shape_cast %187 : vector<32xf32> to vector<1x32xf32>
    %210 = vector.broadcast %209 : vector<1x32xf32> to vector<7x32xf32>
    %211 = arith.addf %208, %210 : vector<7x32xf32>
    %c0_96 = arith.constant 0 : index
    %c0_97 = arith.constant 0 : index
    %c0_98 = arith.constant 0 : index
    %c0_99 = arith.constant 0 : index
    %212 = vector.load %arg19[%c0_96, %c0_97, %c0_98, %c0_99] : memref<1x1x7x32xf32, #tpu.memory_space<vmem>>, vector<1x1x7x32xf32>
    %213 = vector.shape_cast %212 : vector<1x1x7x32xf32> to vector<7x32xf32>
    %214 = vector.shape_cast %211 : vector<7x32xf32> to vector<1x1x7x32xf32>
    tpu.vector_store %arg19[%c0_96, %c0_97, %c0_98, %c0_99], %214 {strides = array<i32>} : memref<1x1x7x32xf32, #tpu.memory_space<vmem>>, vector<1x1x7x32xf32>,
    return
  }
  func.func @transform_0(%arg0: i32, %arg1: i32) -> (i32, i32, i32) {
    %c0_i32 = arith.constant 0 : i32
    %c0_i32_0 = arith.constant 0 : i32
    %c0_i32_1 = arith.constant 0 : i32
    return %arg0, %c0_i32, %c0_i32_0 : i32, i32, i32
  }
  func.func @transform_1(%arg0: i32, %arg1: i32) -> (i32, i32, i32) {
    %c0_i32 = arith.constant 0 : i32
    %c0_i32_0 = arith.constant 0 : i32
    %c0_i32_1 = arith.constant 0 : i32
    return %arg1, %c0_i32, %c0_i32_0 : i32, i32, i32
  }
  func.func @transform_2(%arg0: i32, %arg1: i32) -> (i32, i32, i32) {
    %c0_i32 = arith.constant 0 : i32
    %c0_i32_0 = arith.constant 0 : i32
    %c0_i32_1 = arith.constant 0 : i32
    return %arg1, %c0_i32, %c0_i32_0 : i32, i32, i32
  }
  func.func @transform_3(%arg0: i32, %arg1: i32) -> (i32, i32, i32) {
    %c0_i32 = arith.constant 0 : i32
    %c0_i32_0 = arith.constant 0 : i32
    %c0_i32_1 = arith.constant 0 : i32
    return %arg1, %c0_i32, %c0_i32_0 : i32, i32, i32
  }
  func.func @transform_4(%arg0: i32, %arg1: i32) -> (i32, i32, i32) {
    %c0_i32 = arith.constant 0 : i32
    %c0_i32_0 = arith.constant 0 : i32
    %c0_i32_1 = arith.constant 0 : i32
    return %arg1, %c0_i32, %c0_i32_0 : i32, i32, i32
  }
  func.func @transform_5(%arg0: i32, %arg1: i32) -> (i32, i32, i32) {
    %c0_i32 = arith.constant 0 : i32
    %c0_i32_0 = arith.constant 0 : i32
    %c0_i32_1 = arith.constant 0 : i32
    return %arg1, %c0_i32, %c0_i32_0 : i32, i32, i32
  }
  func.func @transform_6(%arg0: i32, %arg1: i32) -> (i32, i32, i32) {
    %c0_i32 = arith.constant 0 : i32
    %c0_i32_0 = arith.constant 0 : i32
    %c0_i32_1 = arith.constant 0 : i32
    return %arg1, %c0_i32, %c0_i32_0 : i32, i32, i32
  }
  func.func @transform_7(%arg0: i32, %arg1: i32) -> (i32, i32, i32) {
    %c0_i32 = arith.constant 0 : i32
    %c0_i32_0 = arith.constant 0 : i32
    %c0_i32_1 = arith.constant 0 : i32
    return %arg1, %c0_i32, %c0_i32_0 : i32, i32, i32
  }
  func.func @transform_8(%arg0: i32, %arg1: i32) -> (i32, i32, i32) {
    %c0_i32 = arith.constant 0 : i32
    %c0_i32_0 = arith.constant 0 : i32
    %c0_i32_1 = arith.constant 0 : i32
    return %arg1, %c0_i32, %c0_i32_0 : i32, i32, i32
  }
  func.func @transform_9(%arg0: i32, %arg1: i32) -> (i32, i32, i32) {
    %c0_i32 = arith.constant 0 : i32
    %c0_i32_0 = arith.constant 0 : i32
    %c0_i32_1 = arith.constant 0 : i32
    return %arg1, %c0_i32, %c0_i32_0 : i32, i32, i32
  }
  func.func @transform_10(%arg0: i32, %arg1: i32) -> (i32, i32, i32) {
    %c0_i32 = arith.constant 0 : i32
    %c0_i32_0 = arith.constant 0 : i32
    %c0_i32_1 = arith.constant 0 : i32
    return %arg1, %c0_i32, %c0_i32_0 : i32, i32, i32
  }
  func.func @transform_11(%arg0: i32, %arg1: i32) -> (i32, i32, i32) {
    %c0_i32 = arith.constant 0 : i32
    %c0_i32_0 = arith.constant 0 : i32
    %c0_i32_1 = arith.constant 0 : i32
    return %arg1, %c0_i32, %c0_i32_0 : i32, i32, i32
  }
  func.func @transform_12(%arg0: i32, %arg1: i32) -> (i32, i32, i32) {
    %c0_i32 = arith.constant 0 : i32
    %c0_i32_0 = arith.constant 0 : i32
    %c0_i32_1 = arith.constant 0 : i32
    return %arg1, %c0_i32, %c0_i32_0 : i32, i32, i32
  }
  func.func @transform_13(%arg0: i32, %arg1: i32) -> (i32, i32, i32) {
    %c0_i32 = arith.constant 0 : i32
    %c0_i32_0 = arith.constant 0 : i32
    %c0_i32_1 = arith.constant 0 : i32
    return %arg1, %c0_i32, %c0_i32_0 : i32, i32, i32
  }
  func.func @transform_14(%arg0: i32, %arg1: i32) -> (i32, i32, i32) {
    %c0_i32 = arith.constant 0 : i32
    %c0_i32_0 = arith.constant 0 : i32
    %c0_i32_1 = arith.constant 0 : i32
    return %arg1, %c0_i32, %c0_i32_0 : i32, i32, i32
  }
  func.func @transform_15(%arg0: i32, %arg1: i32) -> (i32, i32) {
    %c0_i32 = arith.constant 0 : i32
    %c0_i32_0 = arith.constant 0 : i32
    %c0_i32_1 = arith.constant 0 : i32
    return %c0_i32, %c0_i32_0 : i32, i32
  }
  func.func @transform_16(%arg0: i32, %arg1: i32) -> (i32, i32) {
    %c0_i32 = arith.constant 0 : i32
    %c0_i32_0 = arith.constant 0 : i32
    %c0_i32_1 = arith.constant 0 : i32
    return %c0_i32, %c0_i32_0 : i32, i32
  }
  func.func @transform_17(%arg0: i32, %arg1: i32) -> (i32, i32, i32, i32) {
    %c0_i32 = arith.constant 0 : i32
    %c0_i32_0 = arith.constant 0 : i32
    %c0_i32_1 = arith.constant 0 : i32
    return %arg0, %arg1, %c0_i32, %c0_i32_0 : i32, i32, i32, i32
  }
}

module attributes {stable_mosaic.version = 11 : i64} {
  func.func @_matmul_kernel(%arg0: memref<32x30xf32, #tpu.memory_space<vmem>>, %arg1: memref<30x682xf32, #tpu.memory_space<vmem>>, %arg2: memref<32x682xf32, #tpu.memory_space<vmem>>) attributes {dimension_semantics = [], scalar_prefetch = 0 : i64, scratch_operands = 0 : i64, tpu.core_type = #tpu.core_type<tc>} {
    %c0 = arith.constant 0 : index
    %c0_0 = arith.constant 0 : index
    %0 = vector.load %arg0[%c0, %c0_0] : memref<32x30xf32, #tpu.memory_space<vmem>>, vector<32x30xf32>
    %c0_1 = arith.constant 0 : index
    %c0_2 = arith.constant 0 : index
    %1 = vector.load %arg1[%c0_1, %c0_2] : memref<30x682xf32, #tpu.memory_space<vmem>>, vector<30x682xf32>
    %cst = arith.constant dense<0.000000e+00> : vector<32x682xf32>
    %2 = tpu.matmul %0, %1, %cst {dimension_numbers = #tpu.dot_dimension_numbers<[1], [0], [0], [1], [0, 0, 1, 1], [], []>} : vector<32x30xf32>, vector<30x682xf32>, vector<32x682xf32> -> vector<32x682xf32>
    %c0_3 = arith.constant 0 : index
    %c0_4 = arith.constant 0 : index
    %3 = vector.load %arg2[%c0_3, %c0_4] : memref<32x682xf32, #tpu.memory_space<vmem>>, vector<32x682xf32>
    tpu.vector_store %arg2[%c0_3, %c0_4], %2 {strides = array<i32>} : memref<32x682xf32, #tpu.memory_space<vmem>>, vector<32x682xf32>,
    return
  }
}

</mosaic_0001>

<llo_original>
// kernel: incre_dino_forward.5
$region0: #{incre_dino_forward.5}
  #allocation0 [shape = 'u32[]', space=smem, size = 0x4, offset = 0x4, fixed_abs, tag = 'smem constant byte address 0x4 - core index']
  #allocation1 [shape = 'u32[144,128]{1,0:T(1,128)}', space=vmem, size = 0x12000, scoped, tag = 'internal scratch']
  %s0 = inlined_call_operand.vmem [shape: f32[6,588], index: 0, kind: input, shape index: {}]
  %s1 = inlined_call_operand.vmem [shape: f32[588,32], index: 1, kind: input, shape index: {}]
  %s2 = inlined_call_operand.vmem [shape: f32[1,32], index: 2, kind: input, shape index: {}]
  %s3 = inlined_call_operand.vmem [shape: f32[6,32], index: 3, kind: output, shape index: {}]
  %s4 = sld [smem:[#allocation0]]
  $region22: #{incre_dino_forward.5} parent=0
    _
  %s6 = ssub.s32 1, %s4
  %s7 = scalar_select 0, %s6, %s4
  // Predicated region
  $region2: #{incre_dino_forward.5} parent=0 // pred_check
    _
  $region3: #{incre_dino_forward.5} parent=0 // pred_check_branch
    %9 = sbr.rel (0) target = $region5
  $region4: #{incre_dino_forward.5} parent=0 // pred_region
    _
  $region5: #{incre_dino_forward.5} parent=0 // pred_fallthru
    _
  // Predicated region
  $region6: #{incre_dino_forward.5} parent=0 // pred_check
    _
  $region7: #{incre_dino_forward.5} parent=0 // pred_check_branch
    %11 = sbr.rel (0) target = $region9
  $region8: #{incre_dino_forward.5} parent=0 // pred_region
    _
  $region9: #{incre_dino_forward.5} parent=0 // pred_fallthru
    _
  // Predicated region
  $region10: #{incre_dino_forward.5} parent=0 // pred_check
    _
  $region11: #{incre_dino_forward.5} parent=0 // pred_check_branch
    %13 = sbr.rel (0) target = $region13
  $region12: #{incre_dino_forward.5} parent=0 // pred_region
    _
  $region13: #{incre_dino_forward.5} parent=0 // pred_fallthru
    _
  %v14 = vld [vmem:[%s0] sm:$0x3f]
  %v15 = vld [vmem:[%s0 + $0x8] sm:$0x3f]
  %v16 = vld [vmem:[%s0 + $0x10] sm:$0x3f]
  %v17 = vld [vmem:[%s0 + $0x18] sm:$0x3f]
  %v18 = vld [vmem:[%s0 + $0x20] sm:$0x3f]
  %v19 = vld [vmem:[%s1] sm:$0xff]
  %v20 = vld [vmem:[%s1 + $0x8] sm:$0xff]
  %v21 = vld [vmem:[%s1 + $0x10] sm:$0xff]
  %v22 = vld [vmem:[%s1 + $0x18] sm:$0xff]
  %v23 = vld [vmem:[%s1 + $0x20] sm:$0xff]
  %v24 = vld [vmem:[%s1 + $0x28] sm:$0xff]
  %v25 = vld [vmem:[%s1 + $0x30] sm:$0xff]
  %v26 = vld [vmem:[%s1 + $0x38] sm:$0xff]
  %v27 = vld [vmem:[%s1 + $0x40] sm:$0xff]
  %v28 = vld [vmem:[%s1 + $0x48] sm:$0xff]
  %v29 = vld [vmem:[%s1 + $0x50] sm:$0xff]
  %v30 = vld [vmem:[%s1 + $0x58] sm:$0xff]
  %v31 = vld [vmem:[%s1 + $0x60] sm:$0xff]
  %v32 = vld [vmem:[%s1 + $0x68] sm:$0xff]
  %v33 = vld [vmem:[%s1 + $0x70] sm:$0xff]
  %v34 = vld [vmem:[%s1 + $0x78] sm:$0xff]
  %v35 = vld [vmem:[%s1 + $0x80] sm:$0xff]
  %v36 = vld [vmem:[%s1 + $0x88] sm:$0xff]
  %v37 = vld [vmem:[%s1 + $0x90] sm:$0xff]
  %v38 = vld [vmem:[%s1 + $0x98] sm:$0xff]
  %v39 = vld [vmem:[%s1 + $0xa0] sm:$0xff]
  %v40 = vld [vmem:[%s1 + $0xa8] sm:$0xff]
  %v41 = vld [vmem:[%s1 + $0xb0] sm:$0xff]
  %v42 = vld [vmem:[%s1 + $0xb8] sm:$0xff]
  %v43 = vld [vmem:[%s1 + $0xc0] sm:$0xff]
  %v44 = vld [vmem:[%s1 + $0xc8] sm:$0xff]
  %v45 = vld [vmem:[%s1 + $0xd0] sm:$0xff]
  %v46 = vld [vmem:[%s1 + $0xd8] sm:$0xff]
  %v47 = vld [vmem:[%s1 + $0xe0] sm:$0xff]
  %v48 = vld [vmem:[%s1 + $0xe8] sm:$0xff]
  %v49 = vld [vmem:[%s1 + $0xf0] sm:$0xff]
  %v50 = vld [vmem:[%s1 + $0xf8] sm:$0xff]
  %v51 = vld [vmem:[%s1 + $0x100] sm:$0xff]
  %v52 = vld [vmem:[%s1 + $0x108] sm:$0xff]
  %v53 = vld [vmem:[%s1 + $0x110] sm:$0xff]
  %v54 = vld [vmem:[%s1 + $0x118] sm:$0xff]
  %v55 = vld [vmem:[%s1 + $0x120] sm:$0xff]
  %v56 = vld [vmem:[%s1 + $0x128] sm:$0xff]
  %v57 = vld [vmem:[%s1 + $0x130] sm:$0xff]
  %v58 = vld [vmem:[%s1 + $0x138] sm:$0xff]
  %v59 = vld [vmem:[%s1 + $0x140] sm:$0xff]
  %v60 = vld [vmem:[%s1 + $0x148] sm:$0xff]
  %v61 = vld [vmem:[%s1 + $0x150] sm:$0xff]
  %v62 = vld [vmem:[%s1 + $0x158] sm:$0xff]
  %v63 = vld [vmem:[%s1 + $0x160] sm:$0xff]
  %v64 = vld [vmem:[%s1 + $0x168] sm:$0xff]
  %v65 = vld [vmem:[%s1 + $0x170] sm:$0xff]
  %v66 = vld [vmem:[%s1 + $0x178] sm:$0xff]
  %v67 = vld [vmem:[%s1 + $0x180] sm:$0xff]
  %v68 = vld [vmem:[%s1 + $0x188] sm:$0xff]
  %v69 = vld [vmem:[%s1 + $0x190] sm:$0xff]
  %v70 = vld [vmem:[%s1 + $0x198] sm:$0xff]
  %v71 = vld [vmem:[%s1 + $0x1a0] sm:$0xff]
  %v72 = vld [vmem:[%s1 + $0x1a8] sm:$0xff]
  %v73 = vld [vmem:[%s1 + $0x1b0] sm:$0xff]
  %v74 = vld [vmem:[%s1 + $0x1b8] sm:$0xff]
  %v75 = vld [vmem:[%s1 + $0x1c0] sm:$0xff]
  %v76 = vld [vmem:[%s1 + $0x1c8] sm:$0xff]
  %v77 = vld [vmem:[%s1 + $0x1d0] sm:$0xff]
  %v78 = vld [vmem:[%s1 + $0x1d8] sm:$0xff]
  %v79 = vld [vmem:[%s1 + $0x1e0] sm:$0xff]
  %v80 = vld [vmem:[%s1 + $0x1e8] sm:$0xff]
  %v81 = vld [vmem:[%s1 + $0x1f0] sm:$0xff]
  %v82 = vld [vmem:[%s1 + $0x1f8] sm:$0xff]
  %v83 = vld [vmem:[%s1 + $0x200] sm:$0xff]
  %v84 = vld [vmem:[%s1 + $0x208] sm:$0xff]
  %v85 = vld [vmem:[%s1 + $0x210] sm:$0xff]
  %v86 = vld [vmem:[%s1 + $0x218] sm:$0xff]
  %v87 = vld [vmem:[%s1 + $0x220] sm:$0xff]
  %v88 = vld [vmem:[%s1 + $0x228] sm:$0xff]
  %v89 = vld [vmem:[%s1 + $0x230] sm:$0xff]
  %v90 = vld [vmem:[%s1 + $0x238] sm:$0xff]
  %v91 = vld [vmem:[%s1 + $0x240] sm:$0xff]
  %v92 = vld [vmem:[%s1 + $0x248] sm:$0xf]
  %v93 = vld [vmem:[%s2] sm:$0x1]
  %v95 = vlaneseq
  %v96 = vshrl.u32 %v95, 7
  %v97 = vsub.s32 0, %v96
  %v98 = vrot.slane %v93, %v97
  %vm100 = vcmask 621568
  %v102 = vsel %vm100, %v18, 0
  %vm104 = vcmask 1043456
  %v106 = vsel %vm104, %v92, 0
  %108 = vmatprep.subr.mxu0 0.0
  %109 = vmatpush1.msra.mxu0 %v19
  %110 = vmatprep.subr.mxu0 0.0
  %111 = vmatpush1.msra.mxu0 %v20
  %112 = vmatprep.subr.mxu0 0.0
  %113 = vmatpush1.msra.mxu0 %v21
  %114 = vmatprep.subr.mxu0 0.0
  %115 = vmatpush1.msra.mxu0 %v22
  %116 = vmatprep.subr.mxu0 0.0
  %117 = vmatpush1.msra.mxu0 %v23
  %118 = vmatprep.subr.mxu0 0.0
  %119 = vmatpush1.msra.mxu0 %v24
  %120 = vmatprep.subr.mxu0 0.0
  %121 = vmatpush1.msra.mxu0 %v25
  %122 = vmatprep.subr.mxu0 0.0
  %123 = vmatpush1.msra.mxu0 %v26
  %124 = vmatprep.subr.mxu0 0.0
  %125 = vmatpush1.msra.mxu0 %v27
  %126 = vmatprep.subr.mxu0 0.0
  %127 = vmatpush1.msra.mxu0 %v28
  %128 = vmatprep.subr.mxu0 0.0
  %129 = vmatpush1.msra.mxu0 %v29
  %130 = vmatprep.subr.mxu0 0.0
  %131 = vmatpush1.msra.mxu0 %v30
  %132 = vmatprep.subr.mxu0 0.0
  %133 = vmatpush1.msra.mxu0 %v31
  %134 = vmatprep.subr.mxu0 0.0
  %135 = vmatpush1.msra.mxu0 %v32
  %136 = vmatprep.subr.mxu0 0.0
  %137 = vmatpush1.msra.mxu0 %v33
  %138 = vmatprep.subr.mxu0 0.0
  %139 = vmatpush1.msra.mxu0 %v34
  %140 = vmatprep.subr.mxu0 0.0
  %141 = vmatpush1.msra.mxu0 %v35
  %142 = vmatprep.subr.mxu0 0.0
  %143 = vmatpush1.msra.mxu0 %v36
  %144 = vmatprep.subr.mxu0 0.0
  %145 = vmatpush1.msra.mxu0 %v37
  %146 = vmatprep.subr.mxu0 0.0
  %147 = vmatpush1.msra.mxu0 %v38
  %148 = vmatprep.subr.mxu0 0.0
  %149 = vmatpush1.msra.mxu0 %v39
  %150 = vmatprep.subr.mxu0 0.0
  %151 = vmatpush1.msra.mxu0 %v40
  %152 = vmatprep.subr.mxu0 0.0
  %153 = vmatpush1.msra.mxu0 %v41
  %154 = vmatprep.subr.mxu0 0.0
  %155 = vmatpush1.msra.mxu0 %v42
  %156 = vmatprep.subr.mxu0 0.0
  %157 = vmatpush1.msra.mxu0 %v43
  %158 = vmatprep.subr.mxu0 0.0
  %159 = vmatpush1.msra.mxu0 %v44
  %160 = vmatprep.subr.mxu0 0.0
  %161 = vmatpush1.msra.mxu0 %v45
  %162 = vmatprep.subr.mxu0 0.0
  %163 = vmatpush1.msra.mxu0 %v46
  %164 = vmatprep.subr.mxu0 0.0
  %165 = vmatpush1.msra.mxu0 %v47
  %166 = vmatprep.subr.mxu0 0.0
  %167 = vmatpush1.msra.mxu0 %v48
  %168 = vmatprep.subr.mxu0 0.0
  %169 = vmatpush1.msra.mxu0 %v49
  %170 = vmatprep.subr.mxu0 0.0
  %171 = vmatpush1.msra.mxu0 %v50
  %172 = vmatprep.mubr.f32.mxu0 %v15
  %173 = vmatmul.mubr.f32.gmra.mrb[0].mxu0 %v14
  %v174 = vpop.f32.mrb[0].mxu0
  %v175 = vadd.f32 %v98, %v174
  %v176 = vpop.f32.mrb[0].mxu0
  %177 = vdwg.mxu0
  %178 = vmatprep.subr.mxu0 0.0
  %179 = vmatpush1.msra.mxu0 %v51
  %180 = vmatprep.subr.mxu0 0.0
  %181 = vmatpush1.msra.mxu0 %v52
  %182 = vmatprep.subr.mxu0 0.0
  %183 = vmatpush1.msra.mxu0 %v53
  %184 = vmatprep.subr.mxu0 0.0
  %185 = vmatpush1.msra.mxu0 %v54
  %186 = vmatprep.subr.mxu0 0.0
  %187 = vmatpush1.msra.mxu0 %v55
  %188 = vmatprep.subr.mxu0 0.0
  %189 = vmatpush1.msra.mxu0 %v56
  %190 = vmatprep.subr.mxu0 0.0
  %191 = vmatpush1.msra.mxu0 %v57
  %192 = vmatprep.subr.mxu0 0.0
  %193 = vmatpush1.msra.mxu0 %v58
  %194 = vmatprep.subr.mxu0 0.0
  %195 = vmatpush1.msra.mxu0 %v59
  %196 = vmatprep.subr.mxu0 0.0
  %197 = vmatpush1.msra.mxu0 %v60
  %198 = vmatprep.subr.mxu0 0.0
  %199 = vmatpush1.msra.mxu0 %v61
  %200 = vmatprep.subr.mxu0 0.0
  %201 = vmatpush1.msra.mxu0 %v62
  %202 = vmatprep.subr.mxu0 0.0
  %203 = vmatpush1.msra.mxu0 %v63
  %204 = vmatprep.subr.mxu0 0.0
  %205 = vmatpush1.msra.mxu0 %v64
  %206 = vmatprep.subr.mxu0 0.0
  %207 = vmatpush1.msra.mxu0 %v65
  %208 = vmatprep.subr.mxu0 0.0
  %209 = vmatpush1.msra.mxu0 %v66
  %210 = vmatprep.subr.mxu0 0.0
  %211 = vmatpush1.msra.mxu0 %v67
  %212 = vmatprep.subr.mxu0 0.0
  %213 = vmatpush1.msra.mxu0 %v68
  %214 = vmatprep.subr.mxu0 0.0
  %215 = vmatpush1.msra.mxu0 %v69
  %216 = vmatprep.subr.mxu0 0.0
  %217 = vmatpush1.msra.mxu0 %v70
  %218 = vmatprep.subr.mxu0 0.0
  %219 = vmatpush1.msra.mxu0 %v71
  %220 = vmatprep.subr.mxu0 0.0
  %221 = vmatpush1.msra.mxu0 %v72
  %222 = vmatprep.subr.mxu0 0.0
  %223 = vmatpush1.msra.mxu0 %v73
  %224 = vmatprep.subr.mxu0 0.0
  %225 = vmatpush1.msra.mxu0 %v74
  %226 = vmatprep.subr.mxu0 0.0
  %227 = vmatpush1.msra.mxu0 %v75
  %228 = vmatprep.subr.mxu0 0.0
  %229 = vmatpush1.msra.mxu0 %v76
  %230 = vmatprep.subr.mxu0 0.0
  %231 = vmatpush1.msra.mxu0 %v77
  %232 = vmatprep.subr.mxu0 0.0
  %233 = vmatpush1.msra.mxu0 %v78
  %234 = vmatprep.subr.mxu0 0.0
  %235 = vmatpush1.msra.mxu0 %v79
  %236 = vmatprep.subr.mxu0 0.0
  %237 = vmatpush1.msra.mxu0 %v80
  %238 = vmatprep.subr.mxu0 0.0
  %239 = vmatpush1.msra.mxu0 %v81
  %240 = vmatprep.subr.mxu0 0.0
  %241 = vmatpush1.msra.mxu0 %v82
  %242 = vmatprep.mubr.f32.mxu0 %v17
  %243 = vmatmul.mubr.f32.gmra.mrb[0].mxu0 %v16
  %v244 = vpop.f32.mrb[0].mxu0
  %v245 = vadd.f32 %v175, %v244
  %v246 = vpop.f32.mrb[0].mxu0
  %247 = vdwg.mxu0
  %248 = vmatprep.subr.mxu0 0.0
  %249 = vmatpush1.msra.mxu0 %v83
  %250 = vmatprep.subr.mxu0 0.0
  %251 = vmatpush1.msra.mxu0 %v84
  %252 = vmatprep.subr.mxu0 0.0
  %253 = vmatpush1.msra.mxu0 %v85
  %254 = vmatprep.subr.mxu0 0.0
  %255 = vmatpush1.msra.mxu0 %v86
  %256 = vmatprep.subr.mxu0 0.0
  %257 = vmatpush1.msra.mxu0 %v87
  %258 = vmatprep.subr.mxu0 0.0
  %259 = vmatpush1.msra.mxu0 %v88
  %260 = vmatprep.subr.mxu0 0.0
  %261 = vmatpush1.msra.mxu0 %v89
  %262 = vmatprep.subr.mxu0 0.0
  %263 = vmatpush1.msra.mxu0 %v90
  %264 = vmatprep.subr.mxu0 0.0
  %265 = vmatpush1.msra.mxu0 %v91
  %266 = vmatprep.subr.mxu0 0.0
  %267 = vmatpush1.msra.mxu0 %v106
  %268 = vmatprep.subr.mxu0 0.0
  %269 = vmatpush1.msra.mxu0 0.0
  %270 = vmatprep.subr.mxu0 0.0
  %271 = vmatpush1.msra.mxu0 0.0
  %272 = vmatprep.subr.mxu0 0.0
  %273 = vmatpush1.msra.mxu0 0.0
  %274 = vmatprep.subr.mxu0 0.0
  %275 = vmatpush1.msra.mxu0 0.0
  %276 = vmatprep.subr.mxu0 0.0
  %277 = vmatpush1.msra.mxu0 0.0
  %278 = vmatprep.subr.mxu0 0.0
  %279 = vmatpush1.msra.mxu0 0.0
  %280 = vmatprep.subr.mxu0 0.0
  %281 = vmatpush1.msra.mxu0 0.0
  %282 = vmatprep.subr.mxu0 0.0
  %283 = vmatpush1.msra.mxu0 0.0
  %284 = vmatprep.subr.mxu0 0.0
  %285 = vmatpush1.msra.mxu0 0.0
  %286 = vmatprep.subr.mxu0 0.0
  %287 = vmatpush1.msra.mxu0 0.0
  %288 = vmatprep.subr.mxu0 0.0
  %289 = vmatpush1.msra.mxu0 0.0
  %290 = vmatprep.subr.mxu0 0.0
  %291 = vmatpush1.msra.mxu0 0.0
  %292 = vmatprep.subr.mxu0 0.0
  %293 = vmatpush1.msra.mxu0 0.0
  %294 = vmatprep.subr.mxu0 0.0
  %295 = vmatpush1.msra.mxu0 0.0
  %296 = vmatprep.subr.mxu0 0.0
  %297 = vmatpush1.msra.mxu0 0.0
  %298 = vmatprep.subr.mxu0 0.0
  %299 = vmatpush1.msra.mxu0 0.0
  %300 = vmatprep.subr.mxu0 0.0
  %301 = vmatpush1.msra.mxu0 0.0
  %302 = vmatprep.subr.mxu0 0.0
  %303 = vmatpush1.msra.mxu0 0.0
  %304 = vmatprep.subr.mxu0 0.0
  %305 = vmatpush1.msra.mxu0 0.0
  %306 = vmatprep.subr.mxu0 0.0
  %307 = vmatpush1.msra.mxu0 0.0
  %308 = vmatprep.subr.mxu0 0.0
  %309 = vmatpush1.msra.mxu0 0.0
  %310 = vmatprep.subr.mxu0 0.0
  %311 = vmatpush1.msra.mxu0 0.0
  %312 = vmatprep.mubr.f32.mxu0 0.0
  %313 = vmatmul.mubr.f32.gmra.mrb[0].mxu0 %v102
  %v314 = vpop.f32.mrb[0].mxu0
  %v315 = vadd.f32 %v245, %v314
  %v316 = vpop.f32.mrb[0].mxu0
  %317 = vdwg.mxu0
  %vm318 = vcmask 259072
  %319 = vst.msk [vmem:[%s3] sm:$0x3f] %vm318, %v315
  // Predicated region
  $region14: #{incre_dino_forward.5} parent=0 // pred_check
    _
  $region15: #{incre_dino_forward.5} parent=0 // pred_check_branch
    %321 = sbr.rel (0) target = $region17
  $region16: #{incre_dino_forward.5} parent=0 // pred_region
    _
  $region17: #{incre_dino_forward.5} parent=0 // pred_fallthru
    _
  // Predicated region
  $region18: #{incre_dino_forward.5} parent=0 // pred_check
    _
  $region19: #{incre_dino_forward.5} parent=0 // pred_check_branch
    %323 = sbr.rel (0) target = $region21
  $region20: #{incre_dino_forward.5} parent=0 // pred_region
    _
  $region21: #{incre_dino_forward.5} parent=0 // pred_fallthru
    _

// kernel: incre_dino_forward.4
$region0: #{incre_dino_forward.4}
  #allocation0 [shape = 'u32[]', space=smem, size = 0x4, offset = 0x4, fixed_abs, tag = 'smem constant byte address 0x4 - core index']
  #allocation1 [shape = 'u32[144,128]{1,0:T(1,128)}', space=vmem, size = 0x12000, scoped, tag = 'internal scratch']
  %s0 = inlined_call_operand.vmem [shape: f32[3,320], index: 0, kind: input, shape index: {}]
  %s1 = inlined_call_operand.hbm [shape: f32[320,1176], index: 1, kind: input, shape index: {}]
  %s2 = inlined_call_operand.vmem [shape: f32[3,1176], index: 2, kind: output, shape index: {}]
  %s3 = sld [smem:[#allocation0]]
  $region22: #{incre_dino_forward.4} parent=0
    _
  %s5 = ssub.s32 1, %s3
  %s6 = scalar_select 0, %s5, %s3
  $region1: #{incre_dino_forward.4} parent=0
    #allocation2 [shape = 'u8[1638400]{0}', space=vmem, size = 0x190000, scoped, tag = 'input window, operand 1, single buffered']
    #allocation3 [shape = 's32[1]{0}', space=sflag, size = 0x4, scoped, tag = 'scoped memory for incre_dino_forward.4']
    %7 = vsyncpa [#allocation3], 0
    // Predicated region
    $region2: #{incre_dino_forward.4} parent=1 // pred_check
      _
    $region3: #{incre_dino_forward.4} parent=1 // pred_check_branch
      %9 = sbr.rel (0) target = $region5
    $region4: #{incre_dino_forward.4} parent=1 // pred_region
      _
    $region5: #{incre_dino_forward.4} parent=1 // pred_fallthru
      _
    // Predicated region
    $region6: #{incre_dino_forward.4} parent=1 // pred_check
      _
    $region7: #{incre_dino_forward.4} parent=1 // pred_check_branch
      %11 = sbr.rel (0) target = $region9
    $region8: #{incre_dino_forward.4} parent=1 // pred_region
      %s13 = ssub.s32 51200, 51200
      %14 = vsyncadd [#allocation3], %s13
      %s15 = sshll.u32 [#allocation2], 4
      %s16 = int_to_ptr.vmem [resolvable:$true] %s15
      %21 = dma.hbm_to_vmem [thread:$0]  %s1, 51200, %s16, [#allocation3], 1280, 1280, 80
    $region9: #{incre_dino_forward.4} parent=1 // pred_fallthru
      _
    // Predicated region
    $region10: #{incre_dino_forward.4} parent=1 // pred_check
      _
    $region11: #{incre_dino_forward.4} parent=1 // pred_check_branch
      %23 = sbr.rel (0) target = $region13
    $region12: #{incre_dino_forward.4} parent=1 // pred_region
      %24 = dma.done [#allocation3], 51200
    $region13: #{incre_dino_forward.4} parent=1 // pred_fallthru
      _
    %v25 = vld [vmem:[%s0] sm:$0x77]
    %v26 = vld [vmem:[%s0 + $0x8] sm:$0x7]
    %v27 = vld [vmem:[#allocation2] sm:$0xff]
    %v28 = vld [vmem:[#allocation2 + $0x8] sm:$0xff]
    %v29 = vld [vmem:[#allocation2 + $0x10] sm:$0xff]
    %v30 = vld [vmem:[#allocation2 + $0x18] sm:$0xff]
    %v31 = vld [vmem:[#allocation2 + $0x20] sm:$0xff]
    %v32 = vld [vmem:[#allocation2 + $0x28] sm:$0xff]
    %v33 = vld [vmem:[#allocation2 + $0x30] sm:$0xff]
    %v34 = vld [vmem:[#allocation2 + $0x38] sm:$0xff]
    %v35 = vld [vmem:[#allocation2 + $0x40] sm:$0xff]
    %v36 = vld [vmem:[#allocation2 + $0x48] sm:$0xff]
    %v37 = vld [vmem:[#allocation2 + $0x50] sm:$0xff]
    %v38 = vld [vmem:[#allocation2 + $0x58] sm:$0xff]
    %v39 = vld [vmem:[#allocation2 + $0x60] sm:$0xff]
    %v40 = vld [vmem:[#allocation2 + $0x68] sm:$0xff]
    %v41 = vld [vmem:[#allocation2 + $0x70] sm:$0xff]
    %v42 = vld [vmem:[#allocation2 + $0x78] sm:$0xff]
    %v43 = vld [vmem:[#allocation2 + $0x80] sm:$0xff]
    %v44 = vld [vmem:[#allocation2 + $0x88] sm:$0xff]
    %v45 = vld [vmem:[#allocation2 + $0x90] sm:$0xff]
    %v46 = vld [vmem:[#allocation2 + $0x98] sm:$0xff]
    %v47 = vld [vmem:[#allocation2 + $0xa0] sm:$0xff]
    %v48 = vld [vmem:[#allocation2 + $0xa8] sm:$0xff]
    %v49 = vld [vmem:[#allocation2 + $0xb0] sm:$0xff]
    %v50 = vld [vmem:[#allocation2 + $0xb8] sm:$0xff]
    %v51 = vld [vmem:[#allocation2 + $0xc0] sm:$0xff]
    %v52 = vld [vmem:[#allocation2 + $0xc8] sm:$0xff]
    %v53 = vld [vmem:[#allocation2 + $0xd0] sm:$0xff]
    %v54 = vld [vmem:[#allocation2 + $0xd8] sm:$0xff]
    %v55 = vld [vmem:[#allocation2 + $0xe0] sm:$0xff]
    %v56 = vld [vmem:[#allocation2 + $0xe8] sm:$0xff]
    %v57 = vld [vmem:[#allocation2 + $0xf0] sm:$0xff]
    %v58 = vld [vmem:[#allocation2 + $0xf8] sm:$0xff]
    %v59 = vld [vmem:[#allocation2 + $0x100] sm:$0xff]
    %v60 = vld [vmem:[#allocation2 + $0x108] sm:$0xff]
    %v61 = vld [vmem:[#allocation2 + $0x110] sm:$0xff]
    %v62 = vld [vmem:[#allocation2 + $0x118] sm:$0xff]
    %v63 = vld [vmem:[#allocation2 + $0x120] sm:$0xff]
    %v64 = vld [vmem:[#allocation2 + $0x128] sm:$0xff]
    %v65 = vld [vmem:[#allocation2 + $0x130] sm:$0xff]
    %v66 = vld [vmem:[#allocation2 + $0x138] sm:$0xff]
    %v67 = vld [vmem:[#allocation2 + $0x140] sm:$0xff]
    %v68 = vld [vmem:[#allocation2 + $0x148] sm:$0xff]
    %v69 = vld [vmem:[#allocation2 + $0x150] sm:$0xff]
    %v70 = vld [vmem:[#allocation2 + $0x158] sm:$0xff]
    %v71 = vld [vmem:[#allocation2 + $0x160] sm:$0xff]
    %v72 = vld [vmem:[#allocation2 + $0x168] sm:$0xff]
    %v73 = vld [vmem:[#allocation2 + $0x170] sm:$0xff]
    %v74 = vld [vmem:[#allocation2 + $0x178] sm:$0xff]
    %v75 = vld [vmem:[#allocation2 + $0x180] sm:$0xff]
    %v76 = vld [vmem:[#allocation2 + $0x188] sm:$0xff]
    %v77 = vld [vmem:[#allocation2 + $0x190] sm:$0xff]
    %v78 = vld [vmem:[#allocation2 + $0x198] sm:$0xff]
    %v79 = vld [vmem:[#allocation2 + $0x1a0] sm:$0xff]
    %v80 = vld [vmem:[#allocation2 + $0x1a8] sm:$0xff]
    %v81 = vld [vmem:[#allocation2 + $0x1b0] sm:$0xff]
    %v82 = vld [vmem:[#allocation2 + $0x1b8] sm:$0xff]
    %v83 = vld [vmem:[#allocation2 + $0x1c0] sm:$0xff]
    %v84 = vld [vmem:[#allocation2 + $0x1c8] sm:$0xff]
    %v85 = vld [vmem:[#allocation2 + $0x1d0] sm:$0xff]
    %v86 = vld [vmem:[#allocation2 + $0x1d8] sm:$0xff]
    %v87 = vld [vmem:[#allocation2 + $0x1e0] sm:$0xff]
    %v88 = vld [vmem:[#allocation2 + $0x1e8] sm:$0xff]
    %v89 = vld [vmem:[#allocation2 + $0x1f0] sm:$0xff]
    %v90 = vld [vmem:[#allocation2 + $0x1f8] sm:$0xff]
    %v91 = vld [vmem:[#allocation2 + $0x200] sm:$0xff]
    %v92 = vld [vmem:[#allocation2 + $0x208] sm:$0xff]
    %v93 = vld [vmem:[#allocation2 + $0x210] sm:$0xff]
    %v94 = vld [vmem:[#allocation2 + $0x218] sm:$0xff]
    %v95 = vld [vmem:[#allocation2 + $0x220] sm:$0xff]
    %v96 = vld [vmem:[#allocation2 + $0x228] sm:$0xff]
    %v97 = vld [vmem:[#allocation2 + $0x230] sm:$0xff]
    %v98 = vld [vmem:[#allocation2 + $0x238] sm:$0xff]
    %v99 = vld [vmem:[#allocation2 + $0x240] sm:$0xff]
    %v100 = vld [vmem:[#allocation2 + $0x248] sm:$0xff]
    %v101 = vld [vmem:[#allocation2 + $0x250] sm:$0xff]
    %v102 = vld [vmem:[#allocation2 + $0x258] sm:$0xff]
    %v103 = vld [vmem:[#allocation2 + $0x260] sm:$0xff]
    %v104 = vld [vmem:[#allocation2 + $0x268] sm:$0xff]
    %v105 = vld [vmem:[#allocation2 + $0x270] sm:$0xff]
    %v106 = vld [vmem:[#allocation2 + $0x278] sm:$0xff]
    %v107 = vld [vmem:[#allocation2 + $0x280] sm:$0xff]
    %v108 = vld [vmem:[#allocation2 + $0x288] sm:$0xff]
    %v109 = vld [vmem:[#allocation2 + $0x290] sm:$0xff]
    %v110 = vld [vmem:[#allocation2 + $0x298] sm:$0xff]
    %v111 = vld [vmem:[#allocation2 + $0x2a0] sm:$0xff]
    %v112 = vld [vmem:[#allocation2 + $0x2a8] sm:$0xff]
    %v113 = vld [vmem:[#allocation2 + $0x2b0] sm:$0xff]
    %v114 = vld [vmem:[#allocation2 + $0x2b8] sm:$0xff]
    %v115 = vld [vmem:[#allocation2 + $0x2c0] sm:$0xff]
    %v116 = vld [vmem:[#allocation2 + $0x2c8] sm:$0xff]
    %v117 = vld [vmem:[#allocation2 + $0x2d0] sm:$0xff]
    %v118 = vld [vmem:[#allocation2 + $0x2d8] sm:$0xff]
    %v119 = vld [vmem:[#allocation2 + $0x2e0] sm:$0xff]
    %v120 = vld [vmem:[#allocation2 + $0x2e8] sm:$0xff]
    %v121 = vld [vmem:[#allocation2 + $0x2f0] sm:$0xff]
    %v122 = vld [vmem:[#allocation2 + $0x2f8] sm:$0xff]
    %v123 = vld [vmem:[#allocation2 + $0x300] sm:$0xff]
    %v124 = vld [vmem:[#allocation2 + $0x308] sm:$0xff]
    %v125 = vld [vmem:[#allocation2 + $0x310] sm:$0xff]
    %v126 = vld [vmem:[#allocation2 + $0x318] sm:$0xff]
    %v127 = vld [vmem:[#allocation2 + $0x320] sm:$0xff]
    %v128 = vld [vmem:[#allocation2 + $0x328] sm:$0xff]
    %v129 = vld [vmem:[#allocation2 + $0x330] sm:$0xff]
    %v130 = vld [vmem:[#allocation2 + $0x338] sm:$0xff]
    %v131 = vld [vmem:[#allocation2 + $0x340] sm:$0xff]
    %v132 = vld [vmem:[#allocation2 + $0x348] sm:$0xff]
    %v133 = vld [vmem:[#allocation2 + $0x350] sm:$0xff]
    %v134 = vld [vmem:[#allocation2 + $0x358] sm:$0xff]
    %v135 = vld [vmem:[#allocation2 + $0x360] sm:$0xff]
    %v136 = vld [vmem:[#allocation2 + $0x368] sm:$0xff]
    %v137 = vld [vmem:[#allocation2 + $0x370] sm:$0xff]
    %v138 = vld [vmem:[#allocation2 + $0x378] sm:$0xff]
    %v139 = vld [vmem:[#allocation2 + $0x380] sm:$0xff]
    %v140 = vld [vmem:[#allocation2 + $0x388] sm:$0xff]
    %v141 = vld [vmem:[#allocation2 + $0x390] sm:$0xff]
    %v142 = vld [vmem:[#allocation2 + $0x398] sm:$0xff]
    %v143 = vld [vmem:[#allocation2 + $0x3a0] sm:$0xff]
    %v144 = vld [vmem:[#allocation2 + $0x3a8] sm:$0xff]
    %v145 = vld [vmem:[#allocation2 + $0x3b0] sm:$0xff]
    %v146 = vld [vmem:[#allocation2 + $0x3b8] sm:$0xff]
    %v147 = vld [vmem:[#allocation2 + $0x3c0] sm:$0xff]
    %v148 = vld [vmem:[#allocation2 + $0x3c8] sm:$0xff]
    %v149 = vld [vmem:[#allocation2 + $0x3d0] sm:$0xff]
    %v150 = vld [vmem:[#allocation2 + $0x3d8] sm:$0xff]
    %v151 = vld [vmem:[#allocation2 + $0x3e0] sm:$0xff]
    %v152 = vld [vmem:[#allocation2 + $0x3e8] sm:$0xff]
    %v153 = vld [vmem:[#allocation2 + $0x3f0] sm:$0xff]
    %v154 = vld [vmem:[#allocation2 + $0x3f8] sm:$0xff]
    %v155 = vld [vmem:[#allocation2 + $0x400] sm:$0xff]
    %v156 = vld [vmem:[#allocation2 + $0x408] sm:$0xff]
    %v157 = vld [vmem:[#allocation2 + $0x410] sm:$0xff]
    %v158 = vld [vmem:[#allocation2 + $0x418] sm:$0xff]
    %v159 = vld [vmem:[#allocation2 + $0x420] sm:$0xff]
    %v160 = vld [vmem:[#allocation2 + $0x428] sm:$0xff]
    %v161 = vld [vmem:[#allocation2 + $0x430] sm:$0xff]
    %v162 = vld [vmem:[#allocation2 + $0x438] sm:$0xff]
    %v163 = vld [vmem:[#allocation2 + $0x440] sm:$0xff]
    %v164 = vld [vmem:[#allocation2 + $0x448] sm:$0xff]
    %v165 = vld [vmem:[#allocation2 + $0x450] sm:$0xff]
    %v166 = vld [vmem:[#allocation2 + $0x458] sm:$0xff]
    %v167 = vld [vmem:[#allocation2 + $0x460] sm:$0xff]
    %v168 = vld [vmem:[#allocation2 + $0x468] sm:$0xff]
    %v169 = vld [vmem:[#allocation2 + $0x470] sm:$0xff]
    %v170 = vld [vmem:[#allocation2 + $0x478] sm:$0xff]
    %v171 = vld [vmem:[#allocation2 + $0x480] sm:$0xff]
    %v172 = vld [vmem:[#allocation2 + $0x488] sm:$0xff]
    %v173 = vld [vmem:[#allocation2 + $0x490] sm:$0xff]
    %v174 = vld [vmem:[#allocation2 + $0x498] sm:$0xff]
    %v175 = vld [vmem:[#allocation2 + $0x4a0] sm:$0xff]
    %v176 = vld [vmem:[#allocation2 + $0x4a8] sm:$0xff]
    %v177 = vld [vmem:[#allocation2 + $0x4b0] sm:$0xff]
    %v178 = vld [vmem:[#allocation2 + $0x4b8] sm:$0xff]
    %v179 = vld [vmem:[#allocation2 + $0x4c0] sm:$0xff]
    %v180 = vld [vmem:[#allocation2 + $0x4c8] sm:$0xff]
    %v181 = vld [vmem:[#allocation2 + $0x4d0] sm:$0xff]
    %v182 = vld [vmem:[#allocation2 + $0x4d8] sm:$0xff]
    %v183 = vld [vmem:[#allocation2 + $0x4e0] sm:$0xff]
    %v184 = vld [vmem:[#allocation2 + $0x4e8] sm:$0xff]
    %v185 = vld [vmem:[#allocation2 + $0x4f0] sm:$0xff]
    %v186 = vld [vmem:[#allocation2 + $0x4f8] sm:$0xff]
    %v187 = vld [vmem:[#allocation2 + $0x500] sm:$0xff]
    %v188 = vld [vmem:[#allocation2 + $0x508] sm:$0xff]
    %v189 = vld [vmem:[#allocation2 + $0x510] sm:$0xff]
    %v190 = vld [vmem:[#allocation2 + $0x518] sm:$0xff]
    %v191 = vld [vmem:[#allocation2 + $0x520] sm:$0xff]
    %v192 = vld [vmem:[#allocation2 + $0x528] sm:$0xff]
    %v193 = vld [vmem:[#allocation2 + $0x530] sm:$0xff]
    %v194 = vld [vmem:[#allocation2 + $0x538] sm:$0xff]
    %v195 = vld [vmem:[#allocation2 + $0x540] sm:$0xff]
    %v196 = vld [vmem:[#allocation2 + $0x548] sm:$0xff]
    %v197 = vld [vmem:[#allocation2 + $0x550] sm:$0xff]
    %v198 = vld [vmem:[#allocation2 + $0x558] sm:$0xff]
    %v199 = vld [vmem:[#allocation2 + $0x560] sm:$0xff]
    %v200 = vld [vmem:[#allocation2 + $0x568] sm:$0xff]
    %v201 = vld [vmem:[#allocation2 + $0x570] sm:$0xff]
    %v202 = vld [vmem:[#allocation2 + $0x578] sm:$0xff]
    %v203 = vld [vmem:[#allocation2 + $0x580] sm:$0xff]
    %v204 = vld [vmem:[#allocation2 + $0x588] sm:$0xff]
    %v205 = vld [vmem:[#allocation2 + $0x590] sm:$0xff]
    %v206 = vld [vmem:[#allocation2 + $0x598] sm:$0xff]
    %v207 = vld [vmem:[#allocation2 + $0x5a0] sm:$0xff]
    %v208 = vld [vmem:[#allocation2 + $0x5a8] sm:$0xff]
    %v209 = vld [vmem:[#allocation2 + $0x5b0] sm:$0xff]
    %v210 = vld [vmem:[#allocation2 + $0x5b8] sm:$0xff]
    %v211 = vld [vmem:[#allocation2 + $0x5c0] sm:$0xff]
    %v212 = vld [vmem:[#allocation2 + $0x5c8] sm:$0xff]
    %v213 = vld [vmem:[#allocation2 + $0x5d0] sm:$0xff]
    %v214 = vld [vmem:[#allocation2 + $0x5d8] sm:$0xff]
    %v215 = vld [vmem:[#allocation2 + $0x5e0] sm:$0xff]
    %v216 = vld [vmem:[#allocation2 + $0x5e8] sm:$0xff]
    %v217 = vld [vmem:[#allocation2 + $0x5f0] sm:$0xff]
    %v218 = vld [vmem:[#allocation2 + $0x5f8] sm:$0xff]
    %v219 = vld [vmem:[#allocation2 + $0x600] sm:$0xff]
    %v220 = vld [vmem:[#allocation2 + $0x608] sm:$0xff]
    %v221 = vld [vmem:[#allocation2 + $0x610] sm:$0xff]
    %v222 = vld [vmem:[#allocation2 + $0x618] sm:$0xff]
    %v223 = vld [vmem:[#allocation2 + $0x620] sm:$0xff]
    %v224 = vld [vmem:[#allocation2 + $0x628] sm:$0xff]
    %v225 = vld [vmem:[#allocation2 + $0x630] sm:$0xff]
    %v226 = vld [vmem:[#allocation2 + $0x638] sm:$0xff]
    %v227 = vld [vmem:[#allocation2 + $0x640] sm:$0xff]
    %v228 = vld [vmem:[#allocation2 + $0x648] sm:$0xff]
    %v229 = vld [vmem:[#allocation2 + $0x650] sm:$0xff]
    %v230 = vld [vmem:[#allocation2 + $0x658] sm:$0xff]
    %v231 = vld [vmem:[#allocation2 + $0x660] sm:$0xff]
    %v232 = vld [vmem:[#allocation2 + $0x668] sm:$0xff]
    %v233 = vld [vmem:[#allocation2 + $0x670] sm:$0xff]
    %v234 = vld [vmem:[#allocation2 + $0x678] sm:$0xff]
    %v235 = vld [vmem:[#allocation2 + $0x680] sm:$0xff]
    %v236 = vld [vmem:[#allocation2 + $0x688] sm:$0xff]
    %v237 = vld [vmem:[#allocation2 + $0x690] sm:$0xff]
    %v238 = vld [vmem:[#allocation2 + $0x698] sm:$0xff]
    %v239 = vld [vmem:[#allocation2 + $0x6a0] sm:$0xff]
    %v240 = vld [vmem:[#allocation2 + $0x6a8] sm:$0xff]
    %v241 = vld [vmem:[#allocation2 + $0x6b0] sm:$0xff]
    %v242 = vld [vmem:[#allocation2 + $0x6b8] sm:$0xff]
    %v243 = vld [vmem:[#allocation2 + $0x6c0] sm:$0xff]
    %v244 = vld [vmem:[#allocation2 + $0x6c8] sm:$0xff]
    %v245 = vld [vmem:[#allocation2 + $0x6d0] sm:$0xff]
    %v246 = vld [vmem:[#allocation2 + $0x6d8] sm:$0xff]
    %v247 = vld [vmem:[#allocation2 + $0x6e0] sm:$0xff]
    %v248 = vld [vmem:[#allocation2 + $0x6e8] sm:$0xff]
    %v249 = vld [vmem:[#allocation2 + $0x6f0] sm:$0xff]
    %v250 = vld [vmem:[#allocation2 + $0x6f8] sm:$0xff]
    %v251 = vld [vmem:[#allocation2 + $0x700] sm:$0xff]
    %v252 = vld [vmem:[#allocation2 + $0x708] sm:$0xff]
    %v253 = vld [vmem:[#allocation2 + $0x710] sm:$0xff]
    %v254 = vld [vmem:[#allocation2 + $0x718] sm:$0xff]
    %v255 = vld [vmem:[#allocation2 + $0x720] sm:$0xff]
    %v256 = vld [vmem:[#allocation2 + $0x728] sm:$0xff]
    %v257 = vld [vmem:[#allocation2 + $0x730] sm:$0xff]
    %v258 = vld [vmem:[#allocation2 + $0x738] sm:$0xff]
    %v259 = vld [vmem:[#allocation2 + $0x740] sm:$0xff]
    %v260 = vld [vmem:[#allocation2 + $0x748] sm:$0xff]
    %v261 = vld [vmem:[#allocation2 + $0x750] sm:$0xff]
    %v262 = vld [vmem:[#allocation2 + $0x758] sm:$0xff]
    %v263 = vld [vmem:[#allocation2 + $0x760] sm:$0xff]
    %v264 = vld [vmem:[#allocation2 + $0x768] sm:$0xff]
    %v265 = vld [vmem:[#allocation2 + $0x770] sm:$0xff]
    %v266 = vld [vmem:[#allocation2 + $0x778] sm:$0xff]
    %v267 = vld [vmem:[#allocation2 + $0x780] sm:$0xff]
    %v268 = vld [vmem:[#allocation2 + $0x788] sm:$0xff]
    %v269 = vld [vmem:[#allocation2 + $0x790] sm:$0xff]
    %v270 = vld [vmem:[#allocation2 + $0x798] sm:$0xff]
    %v271 = vld [vmem:[#allocation2 + $0x7a0] sm:$0xff]
    %v272 = vld [vmem:[#allocation2 + $0x7a8] sm:$0xff]
    %v273 = vld [vmem:[#allocation2 + $0x7b0] sm:$0xff]
    %v274 = vld [vmem:[#allocation2 + $0x7b8] sm:$0xff]
    %v275 = vld [vmem:[#allocation2 + $0x7c0] sm:$0xff]
    %v276 = vld [vmem:[#allocation2 + $0x7c8] sm:$0xff]
    %v277 = vld [vmem:[#allocation2 + $0x7d0] sm:$0xff]
    %v278 = vld [vmem:[#allocation2 + $0x7d8] sm:$0xff]
    %v279 = vld [vmem:[#allocation2 + $0x7e0] sm:$0xff]
    %v280 = vld [vmem:[#allocation2 + $0x7e8] sm:$0xff]
    %v281 = vld [vmem:[#allocation2 + $0x7f0] sm:$0xff]
    %v282 = vld [vmem:[#allocation2 + $0x7f8] sm:$0xff]
    %v283 = vld [vmem:[#allocation2 + $0x800] sm:$0xff]
    %v284 = vld [vmem:[#allocation2 + $0x808] sm:$0xff]
    %v285 = vld [vmem:[#allocation2 + $0x810] sm:$0xff]
    %v286 = vld [vmem:[#allocation2 + $0x818] sm:$0xff]
    %v287 = vld [vmem:[#allocation2 + $0x820] sm:$0xff]
    %v288 = vld [vmem:[#allocation2 + $0x828] sm:$0xff]
    %v289 = vld [vmem:[#allocation2 + $0x830] sm:$0xff]
    %v290 = vld [vmem:[#allocation2 + $0x838] sm:$0xff]
    %v291 = vld [vmem:[#allocation2 + $0x840] sm:$0xff]
    %v292 = vld [vmem:[#allocation2 + $0x848] sm:$0xff]
    %v293 = vld [vmem:[#allocation2 + $0x850] sm:$0xff]
    %v294 = vld [vmem:[#allocation2 + $0x858] sm:$0xff]
    %v295 = vld [vmem:[#allocation2 + $0x860] sm:$0xff]
    %v296 = vld [vmem:[#allocation2 + $0x868] sm:$0xff]
    %v297 = vld [vmem:[#allocation2 + $0x870] sm:$0xff]
    %v298 = vld [vmem:[#allocation2 + $0x878] sm:$0xff]
    %v299 = vld [vmem:[#allocation2 + $0x880] sm:$0xff]
    %v300 = vld [vmem:[#allocation2 + $0x888] sm:$0xff]
    %v301 = vld [vmem:[#allocation2 + $0x890] sm:$0xff]
    %v302 = vld [vmem:[#allocation2 + $0x898] sm:$0xff]
    %v303 = vld [vmem:[#allocation2 + $0x8a0] sm:$0xff]
    %v304 = vld [vmem:[#allocation2 + $0x8a8] sm:$0xff]
    %v305 = vld [vmem:[#allocation2 + $0x8b0] sm:$0xff]
    %v306 = vld [vmem:[#allocation2 + $0x8b8] sm:$0xff]
    %v307 = vld [vmem:[#allocation2 + $0x8c0] sm:$0xff]
    %v308 = vld [vmem:[#allocation2 + $0x8c8] sm:$0xff]
    %v309 = vld [vmem:[#allocation2 + $0x8d0] sm:$0xff]
    %v310 = vld [vmem:[#allocation2 + $0x8d8] sm:$0xff]
    %v311 = vld [vmem:[#allocation2 + $0x8e0] sm:$0xff]
    %v312 = vld [vmem:[#allocation2 + $0x8e8] sm:$0xff]
    %v313 = vld [vmem:[#allocation2 + $0x8f0] sm:$0xff]
    %v314 = vld [vmem:[#allocation2 + $0x8f8] sm:$0xff]
    %v315 = vld [vmem:[#allocation2 + $0x900] sm:$0xff]
    %v316 = vld [vmem:[#allocation2 + $0x908] sm:$0xff]
    %v317 = vld [vmem:[#allocation2 + $0x910] sm:$0xff]
    %v318 = vld [vmem:[#allocation2 + $0x918] sm:$0xff]
    %v319 = vld [vmem:[#allocation2 + $0x920] sm:$0xff]
    %v320 = vld [vmem:[#allocation2 + $0x928] sm:$0xff]
    %v321 = vld [vmem:[#allocation2 + $0x930] sm:$0xff]
    %v322 = vld [vmem:[#allocation2 + $0x938] sm:$0xff]
    %v323 = vld [vmem:[#allocation2 + $0x940] sm:$0xff]
    %v324 = vld [vmem:[#allocation2 + $0x948] sm:$0xff]
    %v325 = vld [vmem:[#allocation2 + $0x950] sm:$0xff]
    %v326 = vld [vmem:[#allocation2 + $0x958] sm:$0xff]
    %v327 = vld [vmem:[#allocation2 + $0x960] sm:$0xff]
    %v328 = vld [vmem:[#allocation2 + $0x968] sm:$0xff]
    %v329 = vld [vmem:[#allocation2 + $0x970] sm:$0xff]
    %v330 = vld [vmem:[#allocation2 + $0x978] sm:$0xff]
    %v331 = vld [vmem:[#allocation2 + $0x980] sm:$0xff]
    %v332 = vld [vmem:[#allocation2 + $0x988] sm:$0xff]
    %v333 = vld [vmem:[#allocation2 + $0x990] sm:$0xff]
    %v334 = vld [vmem:[#allocation2 + $0x998] sm:$0xff]
    %v335 = vld [vmem:[#allocation2 + $0x9a0] sm:$0xff]
    %v336 = vld [vmem:[#allocation2 + $0x9a8] sm:$0xff]
    %v337 = vld [vmem:[#allocation2 + $0x9b0] sm:$0xff]
    %v338 = vld [vmem:[#allocation2 + $0x9b8] sm:$0xff]
    %v339 = vld [vmem:[#allocation2 + $0x9c0] sm:$0xff]
    %v340 = vld [vmem:[#allocation2 + $0x9c8] sm:$0xff]
    %v341 = vld [vmem:[#allocation2 + $0x9d0] sm:$0xff]
    %v342 = vld [vmem:[#allocation2 + $0x9d8] sm:$0xff]
    %v343 = vld [vmem:[#allocation2 + $0x9e0] sm:$0xff]
    %v344 = vld [vmem:[#allocation2 + $0x9e8] sm:$0xff]
    %v345 = vld [vmem:[#allocation2 + $0x9f0] sm:$0xff]
    %v346 = vld [vmem:[#allocation2 + $0x9f8] sm:$0xff]
    %v347 = vld [vmem:[#allocation2 + $0xa00] sm:$0xff]
    %v348 = vld [vmem:[#allocation2 + $0xa08] sm:$0xff]
    %v349 = vld [vmem:[#allocation2 + $0xa10] sm:$0xff]
    %v350 = vld [vmem:[#allocation2 + $0xa18] sm:$0xff]
    %v351 = vld [vmem:[#allocation2 + $0xa20] sm:$0xff]
    %v352 = vld [vmem:[#allocation2 + $0xa28] sm:$0xff]
    %v353 = vld [vmem:[#allocation2 + $0xa30] sm:$0xff]
    %v354 = vld [vmem:[#allocation2 + $0xa38] sm:$0xff]
    %v355 = vld [vmem:[#allocation2 + $0xa40] sm:$0xff]
    %v356 = vld [vmem:[#allocation2 + $0xa48] sm:$0xff]
    %v357 = vld [vmem:[#allocation2 + $0xa50] sm:$0xff]
    %v358 = vld [vmem:[#allocation2 + $0xa58] sm:$0xff]
    %v359 = vld [vmem:[#allocation2 + $0xa60] sm:$0xff]
    %v360 = vld [vmem:[#allocation2 + $0xa68] sm:$0xff]
    %v361 = vld [vmem:[#allocation2 + $0xa70] sm:$0xff]
    %v362 = vld [vmem:[#allocation2 + $0xa78] sm:$0xff]
    %v363 = vld [vmem:[#allocation2 + $0xa80] sm:$0xff]
    %v364 = vld [vmem:[#allocation2 + $0xa88] sm:$0xff]
    %v365 = vld [vmem:[#allocation2 + $0xa90] sm:$0xff]
    %v366 = vld [vmem:[#allocation2 + $0xa98] sm:$0xff]
    %v367 = vld [vmem:[#allocation2 + $0xaa0] sm:$0xff]
    %v368 = vld [vmem:[#allocation2 + $0xaa8] sm:$0xff]
    %v369 = vld [vmem:[#allocation2 + $0xab0] sm:$0xff]
    %v370 = vld [vmem:[#allocation2 + $0xab8] sm:$0xff]
    %v371 = vld [vmem:[#allocation2 + $0xac0] sm:$0xff]
    %v372 = vld [vmem:[#allocation2 + $0xac8] sm:$0xff]
    %v373 = vld [vmem:[#allocation2 + $0xad0] sm:$0xff]
    %v374 = vld [vmem:[#allocation2 + $0xad8] sm:$0xff]
    %v375 = vld [vmem:[#allocation2 + $0xae0] sm:$0xff]
    %v376 = vld [vmem:[#allocation2 + $0xae8] sm:$0xff]
    %v377 = vld [vmem:[#allocation2 + $0xaf0] sm:$0xff]
    %v378 = vld [vmem:[#allocation2 + $0xaf8] sm:$0xff]
    %v379 = vld [vmem:[#allocation2 + $0xb00] sm:$0xff]
    %v380 = vld [vmem:[#allocation2 + $0xb08] sm:$0xff]
    %v381 = vld [vmem:[#allocation2 + $0xb10] sm:$0xff]
    %v382 = vld [vmem:[#allocation2 + $0xb18] sm:$0xff]
    %v383 = vld [vmem:[#allocation2 + $0xb20] sm:$0xff]
    %v384 = vld [vmem:[#allocation2 + $0xb28] sm:$0xff]
    %v385 = vld [vmem:[#allocation2 + $0xb30] sm:$0xff]
    %v386 = vld [vmem:[#allocation2 + $0xb38] sm:$0xff]
    %v387 = vld [vmem:[#allocation2 + $0xb40] sm:$0xff]
    %v388 = vld [vmem:[#allocation2 + $0xb48] sm:$0xff]
    %v389 = vld [vmem:[#allocation2 + $0xb50] sm:$0xff]
    %v390 = vld [vmem:[#allocation2 + $0xb58] sm:$0xff]
    %v391 = vld [vmem:[#allocation2 + $0xb60] sm:$0xff]
    %v392 = vld [vmem:[#allocation2 + $0xb68] sm:$0xff]
    %v393 = vld [vmem:[#allocation2 + $0xb70] sm:$0xff]
    %v394 = vld [vmem:[#allocation2 + $0xb78] sm:$0xff]
    %v395 = vld [vmem:[#allocation2 + $0xb80] sm:$0xff]
    %v396 = vld [vmem:[#allocation2 + $0xb88] sm:$0xff]
    %v397 = vld [vmem:[#allocation2 + $0xb90] sm:$0xff]
    %v398 = vld [vmem:[#allocation2 + $0xb98] sm:$0xff]
    %v399 = vld [vmem:[#allocation2 + $0xba0] sm:$0xff]
    %v400 = vld [vmem:[#allocation2 + $0xba8] sm:$0xff]
    %v401 = vld [vmem:[#allocation2 + $0xbb0] sm:$0xff]
    %v402 = vld [vmem:[#allocation2 + $0xbb8] sm:$0xff]
    %v403 = vld [vmem:[#allocation2 + $0xbc0] sm:$0xff]
    %v404 = vld [vmem:[#allocation2 + $0xbc8] sm:$0xff]
    %v405 = vld [vmem:[#allocation2 + $0xbd0] sm:$0xff]
    %v406 = vld [vmem:[#allocation2 + $0xbd8] sm:$0xff]
    %v407 = vld [vmem:[#allocation2 + $0xbe0] sm:$0xff]
    %v408 = vld [vmem:[#allocation2 + $0xbe8] sm:$0xff]
    %v409 = vld [vmem:[#allocation2 + $0xbf0] sm:$0xff]
    %v410 = vld [vmem:[#allocation2 + $0xbf8] sm:$0xff]
    %v411 = vld [vmem:[#allocation2 + $0xc00] sm:$0xff]
    %v412 = vld [vmem:[#allocation2 + $0xc08] sm:$0xff]
    %v413 = vld [vmem:[#allocation2 + $0xc10] sm:$0xff]
    %v414 = vld [vmem:[#allocation2 + $0xc18] sm:$0xff]
    %v415 = vld [vmem:[#allocation2 + $0xc20] sm:$0xff]
    %v416 = vld [vmem:[#allocation2 + $0xc28] sm:$0xff]
    %v417 = vld [vmem:[#allocation2 + $0xc30] sm:$0xff]
    %v418 = vld [vmem:[#allocation2 + $0xc38] sm:$0xff]
    %v419 = vld [vmem:[#allocation2 + $0xc40] sm:$0xff]
    %v420 = vld [vmem:[#allocation2 + $0xc48] sm:$0xff]
    %v421 = vld [vmem:[#allocation2 + $0xc50] sm:$0xff]
    %v422 = vld [vmem:[#allocation2 + $0xc58] sm:$0xff]
    %v423 = vld [vmem:[#allocation2 + $0xc60] sm:$0xff]
    %v424 = vld [vmem:[#allocation2 + $0xc68] sm:$0xff]
    %v425 = vld [vmem:[#allocation2 + $0xc70] sm:$0xff]
    %v426 = vld [vmem:[#allocation2 + $0xc78] sm:$0xff]
    %v429 = vcombine.high %v25, %v25
    %vm431 = vcmask 523264
    %v432 = vsel %vm431, %v26, 0
    %434 = vmatprep.subr.mxu0 %v28
    %435 = vmatpush1.msra.mxu0 %v27
    %436 = vmatprep.subr.mxu0 %v38
    %437 = vmatpush1.msra.mxu0 %v37
    %438 = vmatprep.subr.mxu0 %v48
    %439 = vmatpush1.msra.mxu0 %v47
    %440 = vmatprep.subr.mxu0 %v58
    %441 = vmatpush1.msra.mxu0 %v57
    %442 = vmatprep.subr.mxu0 %v68
    %443 = vmatpush1.msra.mxu0 %v67
    %444 = vmatprep.subr.mxu0 %v78
    %445 = vmatpush1.msra.mxu0 %v77
    %446 = vmatprep.subr.mxu0 %v88
    %447 = vmatpush1.msra.mxu0 %v87
    %448 = vmatprep.subr.mxu0 %v98
    %449 = vmatpush1.msra.mxu0 %v97
    %450 = vmatprep.subr.mxu0 %v108
    %451 = vmatpush1.msra.mxu0 %v107
    %452 = vmatprep.subr.mxu0 %v118
    %453 = vmatpush1.msra.mxu0 %v117
    %454 = vmatprep.subr.mxu0 %v128
    %455 = vmatpush1.msra.mxu0 %v127
    %456 = vmatprep.subr.mxu0 %v138
    %457 = vmatpush1.msra.mxu0 %v137
    %458 = vmatprep.subr.mxu0 %v148
    %459 = vmatpush1.msra.mxu0 %v147
    %460 = vmatprep.subr.mxu0 %v158
    %461 = vmatpush1.msra.mxu0 %v157
    %462 = vmatprep.subr.mxu0 %v168
    %463 = vmatpush1.msra.mxu0 %v167
    %464 = vmatprep.subr.mxu0 %v178
    %465 = vmatpush1.msra.mxu0 %v177
    %466 = vmatprep.subr.mxu0 %v188
    %467 = vmatpush1.msra.mxu0 %v187
    %468 = vmatprep.subr.mxu0 %v198
    %469 = vmatpush1.msra.mxu0 %v197
    %470 = vmatprep.subr.mxu0 %v208
    %471 = vmatpush1.msra.mxu0 %v207
    %472 = vmatprep.subr.mxu0 %v218
    %473 = vmatpush1.msra.mxu0 %v217
    %474 = vmatprep.subr.mxu0 %v228
    %475 = vmatpush1.msra.mxu0 %v227
    %476 = vmatprep.subr.mxu0 %v238
    %477 = vmatpush1.msra.mxu0 %v237
    %478 = vmatprep.subr.mxu0 %v248
    %479 = vmatpush1.msra.mxu0 %v247
    %480 = vmatprep.subr.mxu0 %v258
    %481 = vmatpush1.msra.mxu0 %v257
    %482 = vmatprep.subr.mxu0 %v268
    %483 = vmatpush1.msra.mxu0 %v267
    %484 = vmatprep.subr.mxu0 %v278
    %485 = vmatpush1.msra.mxu0 %v277
    %486 = vmatprep.subr.mxu0 %v288
    %487 = vmatpush1.msra.mxu0 %v287
    %488 = vmatprep.subr.mxu0 %v298
    %489 = vmatpush1.msra.mxu0 %v297
    %490 = vmatprep.subr.mxu0 %v308
    %491 = vmatpush1.msra.mxu0 %v307
    %492 = vmatprep.subr.mxu0 %v318
    %493 = vmatpush1.msra.mxu0 %v317
    %494 = vmatprep.subr.mxu0 %v328
    %495 = vmatpush1.msra.mxu0 %v327
    %496 = vmatprep.subr.mxu0 %v338
    %497 = vmatpush1.msra.mxu0 %v337
    %498 = vmatprep.mubr.f32.mxu0 %v429
    %499 = vmatmul.mubr.f32.gmra.mrb[0].mxu0 %v25
    %v500 = vpop.f32.mrb[0].mxu0
    %v501 = vadd.f32 0.0, %v500
    %v502 = vpop.f32.mrb[0].mxu0
    %v503 = vadd.f32 0.0, %v502
    %504 = vdwg.mxu0
    %505 = vmatprep.subr.mxu0 %v348
    %506 = vmatpush1.msra.mxu0 %v347
    %507 = vmatprep.subr.mxu0 %v358
    %508 = vmatpush1.msra.mxu0 %v357
    %509 = vmatprep.subr.mxu0 %v368
    %510 = vmatpush1.msra.mxu0 %v367
    %511 = vmatprep.subr.mxu0 %v378
    %512 = vmatpush1.msra.mxu0 %v377
    %513 = vmatprep.subr.mxu0 %v388
    %514 = vmatpush1.msra.mxu0 %v387
    %515 = vmatprep.subr.mxu0 %v398
    %516 = vmatpush1.msra.mxu0 %v397
    %517 = vmatprep.subr.mxu0 %v408
    %518 = vmatpush1.msra.mxu0 %v407
    %519 = vmatprep.subr.mxu0 %v418
    %520 = vmatpush1.msra.mxu0 %v417
    %521 = vmatprep.subr.mxu0 0.0
    %522 = vmatpush1.msra.mxu0 0.0
    %523 = vmatprep.subr.mxu0 0.0
    %524 = vmatpush1.msra.mxu0 0.0
    %525 = vmatprep.subr.mxu0 0.0
    %526 = vmatpush1.msra.mxu0 0.0
    %527 = vmatprep.subr.mxu0 0.0
    %528 = vmatpush1.msra.mxu0 0.0
    %529 = vmatprep.subr.mxu0 0.0
    %530 = vmatpush1.msra.mxu0 0.0
    %531 = vmatprep.subr.mxu0 0.0
    %532 = vmatpush1.msra.mxu0 0.0
    %533 = vmatprep.subr.mxu0 0.0
    %534 = vmatpush1.msra.mxu0 0.0
    %535 = vmatprep.subr.mxu0 0.0
    %536 = vmatpush1.msra.mxu0 0.0
    %537 = vmatprep.subr.mxu0 0.0
    %538 = vmatpush1.msra.mxu0 0.0
    %539 = vmatprep.subr.mxu0 0.0
    %540 = vmatpush1.msra.mxu0 0.0
    %541 = vmatprep.subr.mxu0 0.0
    %542 = vmatpush1.msra.mxu0 0.0
    %543 = vmatprep.subr.mxu0 0.0
    %544 = vmatpush1.msra.mxu0 0.0
    %545 = vmatprep.subr.mxu0 0.0
    %546 = vmatpush1.msra.mxu0 0.0
    %547 = vmatprep.subr.mxu0 0.0
    %548 = vmatpush1.msra.mxu0 0.0
    %549 = vmatprep.subr.mxu0 0.0
    %550 = vmatpush1.msra.mxu0 0.0
    %551 = vmatprep.subr.mxu0 0.0
    %552 = vmatpush1.msra.mxu0 0.0
    %553 = vmatprep.subr.mxu0 0.0
    %554 = vmatpush1.msra.mxu0 0.0
    %555 = vmatprep.subr.mxu0 0.0
    %556 = vmatpush1.msra.mxu0 0.0
    %557 = vmatprep.subr.mxu0 0.0
    %558 = vmatpush1.msra.mxu0 0.0
    %559 = vmatprep.subr.mxu0 0.0
    %560 = vmatpush1.msra.mxu0 0.0
    %561 = vmatprep.subr.mxu0 0.0
    %562 = vmatpush1.msra.mxu0 0.0
    %563 = vmatprep.subr.mxu0 0.0
    %564 = vmatpush1.msra.mxu0 0.0
    %565 = vmatprep.subr.mxu0 0.0
    %566 = vmatpush1.msra.mxu0 0.0
    %567 = vmatprep.subr.mxu0 0.0
    %568 = vmatpush1.msra.mxu0 0.0
    %569 = vmatprep.mubr.f32.mxu0 0.0
    %570 = vmatmul.mubr.f32.gmra.mrb[0].mxu0 %v432
    %v571 = vpop.f32.mrb[0].mxu0
    %v572 = vadd.f32 %v501, %v571
    %v573 = vpop.f32.mrb[0].mxu0
    %v574 = vadd.f32 %v503, %v573
    %575 = vdwg.mxu0
    %576 = vmatprep.subr.mxu0 %v30
    %577 = vmatpush1.msra.mxu0 %v29
    %578 = vmatprep.subr.mxu0 %v40
    %579 = vmatpush1.msra.mxu0 %v39
    %580 = vmatprep.subr.mxu0 %v50
    %581 = vmatpush1.msra.mxu0 %v49
    %582 = vmatprep.subr.mxu0 %v60
    %583 = vmatpush1.msra.mxu0 %v59
    %584 = vmatprep.subr.mxu0 %v70
    %585 = vmatpush1.msra.mxu0 %v69
    %586 = vmatprep.subr.mxu0 %v80
    %587 = vmatpush1.msra.mxu0 %v79
    %588 = vmatprep.subr.mxu0 %v90
    %589 = vmatpush1.msra.mxu0 %v89
    %590 = vmatprep.subr.mxu0 %v100
    %591 = vmatpush1.msra.mxu0 %v99
    %592 = vmatprep.subr.mxu0 %v110
    %593 = vmatpush1.msra.mxu0 %v109
    %594 = vmatprep.subr.mxu0 %v120
    %595 = vmatpush1.msra.mxu0 %v119
    %596 = vmatprep.subr.mxu0 %v130
    %597 = vmatpush1.msra.mxu0 %v129
    %598 = vmatprep.subr.mxu0 %v140
    %599 = vmatpush1.msra.mxu0 %v139
    %600 = vmatprep.subr.mxu0 %v150
    %601 = vmatpush1.msra.mxu0 %v149
    %602 = vmatprep.subr.mxu0 %v160
    %603 = vmatpush1.msra.mxu0 %v159
    %604 = vmatprep.subr.mxu0 %v170
    %605 = vmatpush1.msra.mxu0 %v169
    %606 = vmatprep.subr.mxu0 %v180
    %607 = vmatpush1.msra.mxu0 %v179
    %608 = vmatprep.subr.mxu0 %v190
    %609 = vmatpush1.msra.mxu0 %v189
    %610 = vmatprep.subr.mxu0 %v200
    %611 = vmatpush1.msra.mxu0 %v199
    %612 = vmatprep.subr.mxu0 %v210
    %613 = vmatpush1.msra.mxu0 %v209
    %614 = vmatprep.subr.mxu0 %v220
    %615 = vmatpush1.msra.mxu0 %v219
    %616 = vmatprep.subr.mxu0 %v230
    %617 = vmatpush1.msra.mxu0 %v229
    %618 = vmatprep.subr.mxu0 %v240
    %619 = vmatpush1.msra.mxu0 %v239
    %620 = vmatprep.subr.mxu0 %v250
    %621 = vmatpush1.msra.mxu0 %v249
    %622 = vmatprep.subr.mxu0 %v260
    %623 = vmatpush1.msra.mxu0 %v259
    %624 = vmatprep.subr.mxu0 %v270
    %625 = vmatpush1.msra.mxu0 %v269
    %626 = vmatprep.subr.mxu0 %v280
    %627 = vmatpush1.msra.mxu0 %v279
    %628 = vmatprep.subr.mxu0 %v290
    %629 = vmatpush1.msra.mxu0 %v289
    %630 = vmatprep.subr.mxu0 %v300
    %631 = vmatpush1.msra.mxu0 %v299
    %632 = vmatprep.subr.mxu0 %v310
    %633 = vmatpush1.msra.mxu0 %v309
    %634 = vmatprep.subr.mxu0 %v320
    %635 = vmatpush1.msra.mxu0 %v319
    %636 = vmatprep.subr.mxu0 %v330
    %637 = vmatpush1.msra.mxu0 %v329
    %638 = vmatprep.subr.mxu0 %v340
    %639 = vmatpush1.msra.mxu0 %v339
    %640 = vmatprep.mubr.f32.mxu0 %v429
    %641 = vmatmul.mubr.f32.gmra.mrb[0].mxu0 %v25
    %v642 = vpop.f32.mrb[0].mxu0
    %v643 = vadd.f32 0.0, %v642
    %v644 = vpop.f32.mrb[0].mxu0
    %v645 = vadd.f32 0.0, %v644
    %646 = vdwg.mxu0
    %647 = vmatprep.subr.mxu0 %v350
    %648 = vmatpush1.msra.mxu0 %v349
    %649 = vmatprep.subr.mxu0 %v360
    %650 = vmatpush1.msra.mxu0 %v359
    %651 = vmatprep.subr.mxu0 %v370
    %652 = vmatpush1.msra.mxu0 %v369
    %653 = vmatprep.subr.mxu0 %v380
    %654 = vmatpush1.msra.mxu0 %v379
    %655 = vmatprep.subr.mxu0 %v390
    %656 = vmatpush1.msra.mxu0 %v389
    %657 = vmatprep.subr.mxu0 %v400
    %658 = vmatpush1.msra.mxu0 %v399
    %659 = vmatprep.subr.mxu0 %v410
    %660 = vmatpush1.msra.mxu0 %v409
    %661 = vmatprep.subr.mxu0 %v420
    %662 = vmatpush1.msra.mxu0 %v419
    %663 = vmatprep.subr.mxu0 0.0
    %664 = vmatpush1.msra.mxu0 0.0
    %665 = vmatprep.subr.mxu0 0.0
    %666 = vmatpush1.msra.mxu0 0.0
    %667 = vmatprep.subr.mxu0 0.0
    %668 = vmatpush1.msra.mxu0 0.0
    %669 = vmatprep.subr.mxu0 0.0
    %670 = vmatpush1.msra.mxu0 0.0
    %671 = vmatprep.subr.mxu0 0.0
    %672 = vmatpush1.msra.mxu0 0.0
    %673 = vmatprep.subr.mxu0 0.0
    %674 = vmatpush1.msra.mxu0 0.0
    %675 = vmatprep.subr.mxu0 0.0
    %676 = vmatpush1.msra.mxu0 0.0
    %677 = vmatprep.subr.mxu0 0.0
    %678 = vmatpush1.msra.mxu0 0.0
    %679 = vmatprep.subr.mxu0 0.0
    %680 = vmatpush1.msra.mxu0 0.0
    %681 = vmatprep.subr.mxu0 0.0
    %682 = vmatpush1.msra.mxu0 0.0
    %683 = vmatprep.subr.mxu0 0.0
    %684 = vmatpush1.msra.mxu0 0.0
    %685 = vmatprep.subr.mxu0 0.0
    %686 = vmatpush1.msra.mxu0 0.0
    %687 = vmatprep.subr.mxu0 0.0
    %688 = vmatpush1.msra.mxu0 0.0
    %689 = vmatprep.subr.mxu0 0.0
    %690 = vmatpush1.msra.mxu0 0.0
    %691 = vmatprep.subr.mxu0 0.0
    %692 = vmatpush1.msra.mxu0 0.0
    %693 = vmatprep.subr.mxu0 0.0
    %694 = vmatpush1.msra.mxu0 0.0
    %695 = vmatprep.subr.mxu0 0.0
    %696 = vmatpush1.msra.mxu0 0.0
    %697 = vmatprep.subr.mxu0 0.0
    %698 = vmatpush1.msra.mxu0 0.0
    %699 = vmatprep.subr.mxu0 0.0
    %700 = vmatpush1.msra.mxu0 0.0
    %701 = vmatprep.subr.mxu0 0.0
    %702 = vmatpush1.msra.mxu0 0.0
    %703 = vmatprep.subr.mxu0 0.0
    %704 = vmatpush1.msra.mxu0 0.0
    %705 = vmatprep.subr.mxu0 0.0
    %706 = vmatpush1.msra.mxu0 0.0
    %707 = vmatprep.subr.mxu0 0.0
    %708 = vmatpush1.msra.mxu0 0.0
    %709 = vmatprep.subr.mxu0 0.0
    %710 = vmatpush1.msra.mxu0 0.0
    %711 = vmatprep.mubr.f32.mxu0 0.0
    %712 = vmatmul.mubr.f32.gmra.mrb[0].mxu0 %v432
    %v713 = vpop.f32.mrb[0].mxu0
    %v714 = vadd.f32 %v643, %v713
    %v715 = vpop.f32.mrb[0].mxu0
    %v716 = vadd.f32 %v645, %v715
    %717 = vdwg.mxu0
    %718 = vmatprep.subr.mxu0 %v32
    %719 = vmatpush1.msra.mxu0 %v31
    %720 = vmatprep.subr.mxu0 %v42
    %721 = vmatpush1.msra.mxu0 %v41
    %722 = vmatprep.subr.mxu0 %v52
    %723 = vmatpush1.msra.mxu0 %v51
    %724 = vmatprep.subr.mxu0 %v62
    %725 = vmatpush1.msra.mxu0 %v61
    %726 = vmatprep.subr.mxu0 %v72
    %727 = vmatpush1.msra.mxu0 %v71
    %728 = vmatprep.subr.mxu0 %v82
    %729 = vmatpush1.msra.mxu0 %v81
    %730 = vmatprep.subr.mxu0 %v92
    %731 = vmatpush1.msra.mxu0 %v91
    %732 = vmatprep.subr.mxu0 %v102
    %733 = vmatpush1.msra.mxu0 %v101
    %734 = vmatprep.subr.mxu0 %v112
    %735 = vmatpush1.msra.mxu0 %v111
    %736 = vmatprep.subr.mxu0 %v122
    %737 = vmatpush1.msra.mxu0 %v121
    %738 = vmatprep.subr.mxu0 %v132
    %739 = vmatpush1.msra.mxu0 %v131
    %740 = vmatprep.subr.mxu0 %v142
    %741 = vmatpush1.msra.mxu0 %v141
    %742 = vmatprep.subr.mxu0 %v152
    %743 = vmatpush1.msra.mxu0 %v151
    %744 = vmatprep.subr.mxu0 %v162
    %745 = vmatpush1.msra.mxu0 %v161
    %746 = vmatprep.subr.mxu0 %v172
    %747 = vmatpush1.msra.mxu0 %v171
    %748 = vmatprep.subr.mxu0 %v182
    %749 = vmatpush1.msra.mxu0 %v181
    %750 = vmatprep.subr.mxu0 %v192
    %751 = vmatpush1.msra.mxu0 %v191
    %752 = vmatprep.subr.mxu0 %v202
    %753 = vmatpush1.msra.mxu0 %v201
    %754 = vmatprep.subr.mxu0 %v212
    %755 = vmatpush1.msra.mxu0 %v211
    %756 = vmatprep.subr.mxu0 %v222
    %757 = vmatpush1.msra.mxu0 %v221
    %758 = vmatprep.subr.mxu0 %v232
    %759 = vmatpush1.msra.mxu0 %v231
    %760 = vmatprep.subr.mxu0 %v242
    %761 = vmatpush1.msra.mxu0 %v241
    %762 = vmatprep.subr.mxu0 %v252
    %763 = vmatpush1.msra.mxu0 %v251
    %764 = vmatprep.subr.mxu0 %v262
    %765 = vmatpush1.msra.mxu0 %v261
    %766 = vmatprep.subr.mxu0 %v272
    %767 = vmatpush1.msra.mxu0 %v271
    %768 = vmatprep.subr.mxu0 %v282
    %769 = vmatpush1.msra.mxu0 %v281
    %770 = vmatprep.subr.mxu0 %v292
    %771 = vmatpush1.msra.mxu0 %v291
    %772 = vmatprep.subr.mxu0 %v302
    %773 = vmatpush1.msra.mxu0 %v301
    %774 = vmatprep.subr.mxu0 %v312
    %775 = vmatpush1.msra.mxu0 %v311
    %776 = vmatprep.subr.mxu0 %v322
    %777 = vmatpush1.msra.mxu0 %v321
    %778 = vmatprep.subr.mxu0 %v332
    %779 = vmatpush1.msra.mxu0 %v331
    %780 = vmatprep.subr.mxu0 %v342
    %781 = vmatpush1.msra.mxu0 %v341
    %782 = vmatprep.mubr.f32.mxu0 %v429
    %783 = vmatmul.mubr.f32.gmra.mrb[0].mxu0 %v25
    %v784 = vpop.f32.mrb[0].mxu0
    %v785 = vadd.f32 0.0, %v784
    %v786 = vpop.f32.mrb[0].mxu0
    %v787 = vadd.f32 0.0, %v786
    %788 = vdwg.mxu0
    %789 = vmatprep.subr.mxu0 %v352
    %790 = vmatpush1.msra.mxu0 %v351
    %791 = vmatprep.subr.mxu0 %v362
    %792 = vmatpush1.msra.mxu0 %v361
    %793 = vmatprep.subr.mxu0 %v372
    %794 = vmatpush1.msra.mxu0 %v371
    %795 = vmatprep.subr.mxu0 %v382
    %796 = vmatpush1.msra.mxu0 %v381
    %797 = vmatprep.subr.mxu0 %v392
    %798 = vmatpush1.msra.mxu0 %v391
    %799 = vmatprep.subr.mxu0 %v402
    %800 = vmatpush1.msra.mxu0 %v401
    %801 = vmatprep.subr.mxu0 %v412
    %802 = vmatpush1.msra.mxu0 %v411
    %803 = vmatprep.subr.mxu0 %v422
    %804 = vmatpush1.msra.mxu0 %v421
    %805 = vmatprep.subr.mxu0 0.0
    %806 = vmatpush1.msra.mxu0 0.0
    %807 = vmatprep.subr.mxu0 0.0
    %808 = vmatpush1.msra.mxu0 0.0
    %809 = vmatprep.subr.mxu0 0.0
    %810 = vmatpush1.msra.mxu0 0.0
    %811 = vmatprep.subr.mxu0 0.0
    %812 = vmatpush1.msra.mxu0 0.0
    %813 = vmatprep.subr.mxu0 0.0
    %814 = vmatpush1.msra.mxu0 0.0
    %815 = vmatprep.subr.mxu0 0.0
    %816 = vmatpush1.msra.mxu0 0.0
    %817 = vmatprep.subr.mxu0 0.0
    %818 = vmatpush1.msra.mxu0 0.0
    %819 = vmatprep.subr.mxu0 0.0
    %820 = vmatpush1.msra.mxu0 0.0
    %821 = vmatprep.subr.mxu0 0.0
    %822 = vmatpush1.msra.mxu0 0.0
    %823 = vmatprep.subr.mxu0 0.0
    %824 = vmatpush1.msra.mxu0 0.0
    %825 = vmatprep.subr.mxu0 0.0
    %826 = vmatpush1.msra.mxu0 0.0
    %827 = vmatprep.subr.mxu0 0.0
    %828 = vmatpush1.msra.mxu0 0.0
    %829 = vmatprep.subr.mxu0 0.0
    %830 = vmatpush1.msra.mxu0 0.0
    %831 = vmatprep.subr.mxu0 0.0
    %832 = vmatpush1.msra.mxu0 0.0
    %833 = vmatprep.subr.mxu0 0.0
    %834 = vmatpush1.msra.mxu0 0.0
    %835 = vmatprep.subr.mxu0 0.0
    %836 = vmatpush1.msra.mxu0 0.0
    %837 = vmatprep.subr.mxu0 0.0
    %838 = vmatpush1.msra.mxu0 0.0
    %839 = vmatprep.subr.mxu0 0.0
    %840 = vmatpush1.msra.mxu0 0.0
    %841 = vmatprep.subr.mxu0 0.0
    %842 = vmatpush1.msra.mxu0 0.0
    %843 = vmatprep.subr.mxu0 0.0
    %844 = vmatpush1.msra.mxu0 0.0
    %845 = vmatprep.subr.mxu0 0.0
    %846 = vmatpush1.msra.mxu0 0.0
    %847 = vmatprep.subr.mxu0 0.0
    %848 = vmatpush1.msra.mxu0 0.0
    %849 = vmatprep.subr.mxu0 0.0
    %850 = vmatpush1.msra.mxu0 0.0
    %851 = vmatprep.subr.mxu0 0.0
    %852 = vmatpush1.msra.mxu0 0.0
    %853 = vmatprep.mubr.f32.mxu0 0.0
    %854 = vmatmul.mubr.f32.gmra.mrb[0].mxu0 %v432
    %v855 = vpop.f32.mrb[0].mxu0
    %v856 = vadd.f32 %v785, %v855
    %v857 = vpop.f32.mrb[0].mxu0
    %v858 = vadd.f32 %v787, %v857
    %859 = vdwg.mxu0
    %860 = vmatprep.subr.mxu0 %v34
    %861 = vmatpush1.msra.mxu0 %v33
    %862 = vmatprep.subr.mxu0 %v44
    %863 = vmatpush1.msra.mxu0 %v43
    %864 = vmatprep.subr.mxu0 %v54
    %865 = vmatpush1.msra.mxu0 %v53
    %866 = vmatprep.subr.mxu0 %v64
    %867 = vmatpush1.msra.mxu0 %v63
    %868 = vmatprep.subr.mxu0 %v74
    %869 = vmatpush1.msra.mxu0 %v73
    %870 = vmatprep.subr.mxu0 %v84
    %871 = vmatpush1.msra.mxu0 %v83
    %872 = vmatprep.subr.mxu0 %v94
    %873 = vmatpush1.msra.mxu0 %v93
    %874 = vmatprep.subr.mxu0 %v104
    %875 = vmatpush1.msra.mxu0 %v103
    %876 = vmatprep.subr.mxu0 %v114
    %877 = vmatpush1.msra.mxu0 %v113
    %878 = vmatprep.subr.mxu0 %v124
    %879 = vmatpush1.msra.mxu0 %v123
    %880 = vmatprep.subr.mxu0 %v134
    %881 = vmatpush1.msra.mxu0 %v133
    %882 = vmatprep.subr.mxu0 %v144
    %883 = vmatpush1.msra.mxu0 %v143
    %884 = vmatprep.subr.mxu0 %v154
    %885 = vmatpush1.msra.mxu0 %v153
    %886 = vmatprep.subr.mxu0 %v164
    %887 = vmatpush1.msra.mxu0 %v163
    %888 = vmatprep.subr.mxu0 %v174
    %889 = vmatpush1.msra.mxu0 %v173
    %890 = vmatprep.subr.mxu0 %v184
    %891 = vmatpush1.msra.mxu0 %v183
    %892 = vmatprep.subr.mxu0 %v194
    %893 = vmatpush1.msra.mxu0 %v193
    %894 = vmatprep.subr.mxu0 %v204
    %895 = vmatpush1.msra.mxu0 %v203
    %896 = vmatprep.subr.mxu0 %v214
    %897 = vmatpush1.msra.mxu0 %v213
    %898 = vmatprep.subr.mxu0 %v224
    %899 = vmatpush1.msra.mxu0 %v223
    %900 = vmatprep.subr.mxu0 %v234
    %901 = vmatpush1.msra.mxu0 %v233
    %902 = vmatprep.subr.mxu0 %v244
    %903 = vmatpush1.msra.mxu0 %v243
    %904 = vmatprep.subr.mxu0 %v254
    %905 = vmatpush1.msra.mxu0 %v253
    %906 = vmatprep.subr.mxu0 %v264
    %907 = vmatpush1.msra.mxu0 %v263
    %908 = vmatprep.subr.mxu0 %v274
    %909 = vmatpush1.msra.mxu0 %v273
    %910 = vmatprep.subr.mxu0 %v284
    %911 = vmatpush1.msra.mxu0 %v283
    %912 = vmatprep.subr.mxu0 %v294
    %913 = vmatpush1.msra.mxu0 %v293
    %914 = vmatprep.subr.mxu0 %v304
    %915 = vmatpush1.msra.mxu0 %v303
    %916 = vmatprep.subr.mxu0 %v314
    %917 = vmatpush1.msra.mxu0 %v313
    %918 = vmatprep.subr.mxu0 %v324
    %919 = vmatpush1.msra.mxu0 %v323
    %920 = vmatprep.subr.mxu0 %v334
    %921 = vmatpush1.msra.mxu0 %v333
    %922 = vmatprep.subr.mxu0 %v344
    %923 = vmatpush1.msra.mxu0 %v343
    %924 = vmatprep.mubr.f32.mxu0 %v429
    %925 = vmatmul.mubr.f32.gmra.mrb[0].mxu0 %v25
    %v926 = vpop.f32.mrb[0].mxu0
    %v927 = vadd.f32 0.0, %v926
    %v928 = vpop.f32.mrb[0].mxu0
    %v929 = vadd.f32 0.0, %v928
    %930 = vdwg.mxu0
    %931 = vmatprep.subr.mxu0 %v354
    %932 = vmatpush1.msra.mxu0 %v353
    %933 = vmatprep.subr.mxu0 %v364
    %934 = vmatpush1.msra.mxu0 %v363
    %935 = vmatprep.subr.mxu0 %v374
    %936 = vmatpush1.msra.mxu0 %v373
    %937 = vmatprep.subr.mxu0 %v384
    %938 = vmatpush1.msra.mxu0 %v383
    %939 = vmatprep.subr.mxu0 %v394
    %940 = vmatpush1.msra.mxu0 %v393
    %941 = vmatprep.subr.mxu0 %v404
    %942 = vmatpush1.msra.mxu0 %v403
    %943 = vmatprep.subr.mxu0 %v414
    %944 = vmatpush1.msra.mxu0 %v413
    %945 = vmatprep.subr.mxu0 %v424
    %946 = vmatpush1.msra.mxu0 %v423
    %947 = vmatprep.subr.mxu0 0.0
    %948 = vmatpush1.msra.mxu0 0.0
    %949 = vmatprep.subr.mxu0 0.0
    %950 = vmatpush1.msra.mxu0 0.0
    %951 = vmatprep.subr.mxu0 0.0
    %952 = vmatpush1.msra.mxu0 0.0
    %953 = vmatprep.subr.mxu0 0.0
    %954 = vmatpush1.msra.mxu0 0.0
    %955 = vmatprep.subr.mxu0 0.0
    %956 = vmatpush1.msra.mxu0 0.0
    %957 = vmatprep.subr.mxu0 0.0
    %958 = vmatpush1.msra.mxu0 0.0
    %959 = vmatprep.subr.mxu0 0.0
    %960 = vmatpush1.msra.mxu0 0.0
    %961 = vmatprep.subr.mxu0 0.0
    %962 = vmatpush1.msra.mxu0 0.0
    %963 = vmatprep.subr.mxu0 0.0
    %964 = vmatpush1.msra.mxu0 0.0
    %965 = vmatprep.subr.mxu0 0.0
    %966 = vmatpush1.msra.mxu0 0.0
    %967 = vmatprep.subr.mxu0 0.0
    %968 = vmatpush1.msra.mxu0 0.0
    %969 = vmatprep.subr.mxu0 0.0
    %970 = vmatpush1.msra.mxu0 0.0
    %971 = vmatprep.subr.mxu0 0.0
    %972 = vmatpush1.msra.mxu0 0.0
    %973 = vmatprep.subr.mxu0 0.0
    %974 = vmatpush1.msra.mxu0 0.0
    %975 = vmatprep.subr.mxu0 0.0
    %976 = vmatpush1.msra.mxu0 0.0
    %977 = vmatprep.subr.mxu0 0.0
    %978 = vmatpush1.msra.mxu0 0.0
    %979 = vmatprep.subr.mxu0 0.0
    %980 = vmatpush1.msra.mxu0 0.0
    %981 = vmatprep.subr.mxu0 0.0
    %982 = vmatpush1.msra.mxu0 0.0
    %983 = vmatprep.subr.mxu0 0.0
    %984 = vmatpush1.msra.mxu0 0.0
    %985 = vmatprep.subr.mxu0 0.0
    %986 = vmatpush1.msra.mxu0 0.0
    %987 = vmatprep.subr.mxu0 0.0
    %988 = vmatpush1.msra.mxu0 0.0
    %989 = vmatprep.subr.mxu0 0.0
    %990 = vmatpush1.msra.mxu0 0.0
    %991 = vmatprep.subr.mxu0 0.0
    %992 = vmatpush1.msra.mxu0 0.0
    %993 = vmatprep.subr.mxu0 0.0
    %994 = vmatpush1.msra.mxu0 0.0
    %995 = vmatprep.mubr.f32.mxu0 0.0
    %996 = vmatmul.mubr.f32.gmra.mrb[0].mxu0 %v432
    %v997 = vpop.f32.mrb[0].mxu0
    %v998 = vadd.f32 %v927, %v997
    %v999 = vpop.f32.mrb[0].mxu0
    %v1000 = vadd.f32 %v929, %v999
    %1001 = vdwg.mxu0
    %1002 = vmatprep.subr.mxu0 %v36
    %1003 = vmatpush1.msra.mxu0 %v35
    %1004 = vmatprep.subr.mxu0 %v46
    %1005 = vmatpush1.msra.mxu0 %v45
    %1006 = vmatprep.subr.mxu0 %v56
    %1007 = vmatpush1.msra.mxu0 %v55
    %1008 = vmatprep.subr.mxu0 %v66
    %1009 = vmatpush1.msra.mxu0 %v65
    %1010 = vmatprep.subr.mxu0 %v76
    %1011 = vmatpush1.msra.mxu0 %v75
    %1012 = vmatprep.subr.mxu0 %v86
    %1013 = vmatpush1.msra.mxu0 %v85
    %1014 = vmatprep.subr.mxu0 %v96
    %1015 = vmatpush1.msra.mxu0 %v95
    %1016 = vmatprep.subr.mxu0 %v106
    %1017 = vmatpush1.msra.mxu0 %v105
    %1018 = vmatprep.subr.mxu0 %v116
    %1019 = vmatpush1.msra.mxu0 %v115
    %1020 = vmatprep.subr.mxu0 %v126
    %1021 = vmatpush1.msra.mxu0 %v125
    %1022 = vmatprep.subr.mxu0 %v136
    %1023 = vmatpush1.msra.mxu0 %v135
    %1024 = vmatprep.subr.mxu0 %v146
    %1025 = vmatpush1.msra.mxu0 %v145
    %1026 = vmatprep.subr.mxu0 %v156
    %1027 = vmatpush1.msra.mxu0 %v155
    %1028 = vmatprep.subr.mxu0 %v166
    %1029 = vmatpush1.msra.mxu0 %v165
    %1030 = vmatprep.subr.mxu0 %v176
    %1031 = vmatpush1.msra.mxu0 %v175
    %1032 = vmatprep.subr.mxu0 %v186
    %1033 = vmatpush1.msra.mxu0 %v185
    %1034 = vmatprep.subr.mxu0 %v196
    %1035 = vmatpush1.msra.mxu0 %v195
    %1036 = vmatprep.subr.mxu0 %v206
    %1037 = vmatpush1.msra.mxu0 %v205
    %1038 = vmatprep.subr.mxu0 %v216
    %1039 = vmatpush1.msra.mxu0 %v215
    %1040 = vmatprep.subr.mxu0 %v226
    %1041 = vmatpush1.msra.mxu0 %v225
    %1042 = vmatprep.subr.mxu0 %v236
    %1043 = vmatpush1.msra.mxu0 %v235
    %1044 = vmatprep.subr.mxu0 %v246
    %1045 = vmatpush1.msra.mxu0 %v245
    %1046 = vmatprep.subr.mxu0 %v256
    %1047 = vmatpush1.msra.mxu0 %v255
    %1048 = vmatprep.subr.mxu0 %v266
    %1049 = vmatpush1.msra.mxu0 %v265
    %1050 = vmatprep.subr.mxu0 %v276
    %1051 = vmatpush1.msra.mxu0 %v275
    %1052 = vmatprep.subr.mxu0 %v286
    %1053 = vmatpush1.msra.mxu0 %v285
    %1054 = vmatprep.subr.mxu0 %v296
    %1055 = vmatpush1.msra.mxu0 %v295
    %1056 = vmatprep.subr.mxu0 %v306
    %1057 = vmatpush1.msra.mxu0 %v305
    %1058 = vmatprep.subr.mxu0 %v316
    %1059 = vmatpush1.msra.mxu0 %v315
    %1060 = vmatprep.subr.mxu0 %v326
    %1061 = vmatpush1.msra.mxu0 %v325
    %1062 = vmatprep.subr.mxu0 %v336
    %1063 = vmatpush1.msra.mxu0 %v335
    %1064 = vmatprep.subr.mxu0 %v346
    %1065 = vmatpush1.msra.mxu0 %v345
    %1066 = vmatprep.mubr.f32.mxu0 %v429
    %1067 = vmatmul.mubr.f32.gmra.mrb[0].mxu0 %v25
    %v1068 = vpop.f32.mrb[0].mxu0
    %v1069 = vadd.f32 0.0, %v1068
    %v1070 = vpop.f32.mrb[0].mxu0
    %v1071 = vadd.f32 0.0, %v1070
    %1072 = vdwg.mxu0
    %1073 = vmatprep.subr.mxu0 %v356
    %1074 = vmatpush1.msra.mxu0 %v355
    %1075 = vmatprep.subr.mxu0 %v366
    %1076 = vmatpush1.msra.mxu0 %v365
    %1077 = vmatprep.subr.mxu0 %v376
    %1078 = vmatpush1.msra.mxu0 %v375
    %1079 = vmatprep.subr.mxu0 %v386
    %1080 = vmatpush1.msra.mxu0 %v385
    %1081 = vmatprep.subr.mxu0 %v396
    %1082 = vmatpush1.msra.mxu0 %v395
    %1083 = vmatprep.subr.mxu0 %v406
    %1084 = vmatpush1.msra.mxu0 %v405
    %1085 = vmatprep.subr.mxu0 %v416
    %1086 = vmatpush1.msra.mxu0 %v415
    %1087 = vmatprep.subr.mxu0 %v426
    %1088 = vmatpush1.msra.mxu0 %v425
    %1089 = vmatprep.subr.mxu0 0.0
    %1090 = vmatpush1.msra.mxu0 0.0
    %1091 = vmatprep.subr.mxu0 0.0
    %1092 = vmatpush1.msra.mxu0 0.0
    %1093 = vmatprep.subr.mxu0 0.0
    %1094 = vmatpush1.msra.mxu0 0.0
    %1095 = vmatprep.subr.mxu0 0.0
    %1096 = vmatpush1.msra.mxu0 0.0
    %1097 = vmatprep.subr.mxu0 0.0
    %1098 = vmatpush1.msra.mxu0 0.0
    %1099 = vmatprep.subr.mxu0 0.0
    %1100 = vmatpush1.msra.mxu0 0.0
    %1101 = vmatprep.subr.mxu0 0.0
    %1102 = vmatpush1.msra.mxu0 0.0
    %1103 = vmatprep.subr.mxu0 0.0
    %1104 = vmatpush1.msra.mxu0 0.0
    %1105 = vmatprep.subr.mxu0 0.0
    %1106 = vmatpush1.msra.mxu0 0.0
    %1107 = vmatprep.subr.mxu0 0.0
    %1108 = vmatpush1.msra.mxu0 0.0
    %1109 = vmatprep.subr.mxu0 0.0
    %1110 = vmatpush1.msra.mxu0 0.0
    %1111 = vmatprep.subr.mxu0 0.0
    %1112 = vmatpush1.msra.mxu0 0.0
    %1113 = vmatprep.subr.mxu0 0.0
    %1114 = vmatpush1.msra.mxu0 0.0
    %1115 = vmatprep.subr.mxu0 0.0
    %1116 = vmatpush1.msra.mxu0 0.0
    %1117 = vmatprep.subr.mxu0 0.0
    %1118 = vmatpush1.msra.mxu0 0.0
    %1119 = vmatprep.subr.mxu0 0.0
    %1120 = vmatpush1.msra.mxu0 0.0
    %1121 = vmatprep.subr.mxu0 0.0
    %1122 = vmatpush1.msra.mxu0 0.0
    %1123 = vmatprep.subr.mxu0 0.0
    %1124 = vmatpush1.msra.mxu0 0.0
    %1125 = vmatprep.subr.mxu0 0.0
    %1126 = vmatpush1.msra.mxu0 0.0
    %1127 = vmatprep.subr.mxu0 0.0
    %1128 = vmatpush1.msra.mxu0 0.0
    %1129 = vmatprep.subr.mxu0 0.0
    %1130 = vmatpush1.msra.mxu0 0.0
    %1131 = vmatprep.subr.mxu0 0.0
    %1132 = vmatpush1.msra.mxu0 0.0
    %1133 = vmatprep.subr.mxu0 0.0
    %1134 = vmatpush1.msra.mxu0 0.0
    %1135 = vmatprep.subr.mxu0 0.0
    %1136 = vmatpush1.msra.mxu0 0.0
    %1137 = vmatprep.mubr.f32.mxu0 0.0
    %1138 = vmatmul.mubr.f32.gmra.mrb[0].mxu0 %v432
    %v1139 = vpop.f32.mrb[0].mxu0
    %v1140 = vadd.f32 %v1069, %v1139
    %v1141 = vpop.f32.mrb[0].mxu0
    %v1142 = vadd.f32 %v1071, %v1141
    %1143 = vdwg.mxu0
    %v1154 = vcombine.low %v572, %v574
    %v1155 = vcombine.low %v714, %v716
    %v1156 = vcombine.low %v856, %v858
    %v1157 = vcombine.low %v998, %v1000
    %v1158 = vcombine.low %v1140, %v1142
    %1164 = vst [vmem:[%s2] sm:$0x77] %v1154
    %1165 = vst [vmem:[%s2 + $0x8] sm:$0x77] %v1155
    %1166 = vst [vmem:[%s2 + $0x10] sm:$0x77] %v1156
    %1167 = vst [vmem:[%s2 + $0x18] sm:$0x77] %v1157
    %vm1168 = vcmask 1042432
    %vm1169 = vcmask 194564
    %vm1170 = vmor %vm1169, %vm1168
    %1171 = vst.msk [vmem:[%s2 + $0x20] sm:$0x77] %vm1170, %v1158
    // Predicated region
    $region14: #{incre_dino_forward.4} parent=1 // pred_check
      _
    $region15: #{incre_dino_forward.4} parent=1 // pred_check_branch
      %1173 = sbr.rel (0) target = $region17
    $region16: #{incre_dino_forward.4} parent=1 // pred_region
      _
    $region17: #{incre_dino_forward.4} parent=1 // pred_fallthru
      _
    // Predicated region
    $region18: #{incre_dino_forward.4} parent=1 // pred_check
      _
    $region19: #{incre_dino_forward.4} parent=1 // pred_check_branch
      %1175 = sbr.rel (0) target = $region21
    $region20: #{incre_dino_forward.4} parent=1 // pred_region
      _
    $region21: #{incre_dino_forward.4} parent=1 // pred_fallthru
      _
    %1176 = vsyncpa [#allocation3], 1

// kernel: incre_dino_forward.7
$region0: #{incre_dino_forward.7}
  #allocation0 [shape = 'u32[]', space=smem, size = 0x4, offset = 0x4, fixed_abs, tag = 'smem constant byte address 0x4 - core index']
  #allocation1 [shape = 'u32[144,128]{1,0:T(1,128)}', space=vmem, size = 0x12000, scoped, tag = 'internal scratch']
  %s0 = inlined_call_operand.vmem [shape: f32[32,30], index: 0, kind: input, shape index: {}]
  %s1 = inlined_call_operand.vmem [shape: f32[30,682], index: 1, kind: input, shape index: {}]
  %s2 = inlined_call_operand.vmem [shape: f32[32,682], index: 2, kind: output, shape index: {}]
  %s3 = sld [smem:[#allocation0]]
  $region18: #{incre_dino_forward.7} parent=0
    _
  %s5 = ssub.s32 1, %s3
  %s6 = scalar_select 0, %s5, %s3
  // Predicated region
  $region2: #{incre_dino_forward.7} parent=0 // pred_check
    _
  $region3: #{incre_dino_forward.7} parent=0 // pred_check_branch
    %8 = sbr.rel (0) target = $region5
  $region4: #{incre_dino_forward.7} parent=0 // pred_region
    _
  $region5: #{incre_dino_forward.7} parent=0 // pred_fallthru
    _
  // Predicated region
  $region6: #{incre_dino_forward.7} parent=0 // pred_check
    _
  $region7: #{incre_dino_forward.7} parent=0 // pred_check_branch
    %10 = sbr.rel (0) target = $region9
  $region8: #{incre_dino_forward.7} parent=0 // pred_region
    _
  $region9: #{incre_dino_forward.7} parent=0 // pred_fallthru
    _
  %v11 = vld [vmem:[%s0] sm:$0xff]
  %v12 = vld [vmem:[%s0 + $0x8] sm:$0xff]
  %v13 = vld [vmem:[%s0 + $0x10] sm:$0xff]
  %v14 = vld [vmem:[%s0 + $0x18] sm:$0xff]
  %v15 = vld [vmem:[%s1] sm:$0xff]
  %v16 = vld [vmem:[%s1 + $0x8] sm:$0xff]
  %v17 = vld [vmem:[%s1 + $0x10] sm:$0xff]
  %v18 = vld [vmem:[%s1 + $0x18] sm:$0xff]
  %v19 = vld [vmem:[%s1 + $0x20] sm:$0xff]
  %v20 = vld [vmem:[%s1 + $0x28] sm:$0xff]
  %v21 = vld [vmem:[%s1 + $0x30] sm:$0xff]
  %v22 = vld [vmem:[%s1 + $0x38] sm:$0xff]
  %v23 = vld [vmem:[%s1 + $0x40] sm:$0xff]
  %v24 = vld [vmem:[%s1 + $0x48] sm:$0xff]
  %v25 = vld [vmem:[%s1 + $0x50] sm:$0xff]
  %v26 = vld [vmem:[%s1 + $0x58] sm:$0xff]
  %v27 = vld [vmem:[%s1 + $0x60] sm:$0xff]
  %v28 = vld [vmem:[%s1 + $0x68] sm:$0xff]
  %v29 = vld [vmem:[%s1 + $0x70] sm:$0xff]
  %v30 = vld [vmem:[%s1 + $0x78] sm:$0xff]
  %v31 = vld [vmem:[%s1 + $0x80] sm:$0xff]
  %v32 = vld [vmem:[%s1 + $0x88] sm:$0xff]
  %v33 = vld [vmem:[%s1 + $0x90] sm:$0x3f]
  %v34 = vld [vmem:[%s1 + $0x98] sm:$0x3f]
  %v35 = vld [vmem:[%s1 + $0xa0] sm:$0x3f]
  %v36 = vld [vmem:[%s1 + $0xa8] sm:$0x3f]
  %v37 = vld [vmem:[%s1 + $0xb0] sm:$0x3f]
  %v38 = vld [vmem:[%s1 + $0xb8] sm:$0x3f]
  %vm39 = vcmask 244736
  %v41 = vsel %vm39, %v11, 0
  %v44 = vsel %vm39, %v12, 0
  %v47 = vsel %vm39, %v13, 0
  %v50 = vsel %vm39, %v14, 0
  %vm52 = vcmask 1045504
  %v54 = vsel %vm52, %v33, 0
  %v57 = vsel %vm52, %v34, 0
  %v60 = vsel %vm52, %v35, 0
  %v63 = vsel %vm52, %v36, 0
  %v66 = vsel %vm52, %v37, 0
  %v69 = vsel %vm52, %v38, 0
  %71 = vmatprep.subr.mxu0 %v16
  %72 = vmatpush1.msra.mxu0 %v15
  %73 = vmatprep.subr.mxu0 %v22
  %74 = vmatpush1.msra.mxu0 %v21
  %75 = vmatprep.subr.mxu0 %v28
  %76 = vmatpush1.msra.mxu0 %v27
  %77 = vmatprep.subr.mxu0 %v57
  %78 = vmatpush1.msra.mxu0 %v54
  %79 = vmatprep.subr.mxu0 0.0
  %80 = vmatpush1.msra.mxu0 0.0
  %81 = vmatprep.subr.mxu0 0.0
  %82 = vmatpush1.msra.mxu0 0.0
  %83 = vmatprep.subr.mxu0 0.0
  %84 = vmatpush1.msra.mxu0 0.0
  %85 = vmatprep.subr.mxu0 0.0
  %86 = vmatpush1.msra.mxu0 0.0
  %87 = vmatprep.subr.mxu0 0.0
  %88 = vmatpush1.msra.mxu0 0.0
  %89 = vmatprep.subr.mxu0 0.0
  %90 = vmatpush1.msra.mxu0 0.0
  %91 = vmatprep.subr.mxu0 0.0
  %92 = vmatpush1.msra.mxu0 0.0
  %93 = vmatprep.subr.mxu0 0.0
  %94 = vmatpush1.msra.mxu0 0.0
  %95 = vmatprep.subr.mxu0 0.0
  %96 = vmatpush1.msra.mxu0 0.0
  %97 = vmatprep.subr.mxu0 0.0
  %98 = vmatpush1.msra.mxu0 0.0
  %99 = vmatprep.subr.mxu0 0.0
  %100 = vmatpush1.msra.mxu0 0.0
  %101 = vmatprep.subr.mxu0 0.0
  %102 = vmatpush1.msra.mxu0 0.0
  %103 = vmatprep.subr.mxu0 0.0
  %104 = vmatpush1.msra.mxu0 0.0
  %105 = vmatprep.subr.mxu0 0.0
  %106 = vmatpush1.msra.mxu0 0.0
  %107 = vmatprep.subr.mxu0 0.0
  %108 = vmatpush1.msra.mxu0 0.0
  %109 = vmatprep.subr.mxu0 0.0
  %110 = vmatpush1.msra.mxu0 0.0
  %111 = vmatprep.subr.mxu0 0.0
  %112 = vmatpush1.msra.mxu0 0.0
  %113 = vmatprep.subr.mxu0 0.0
  %114 = vmatpush1.msra.mxu0 0.0
  %115 = vmatprep.subr.mxu0 0.0
  %116 = vmatpush1.msra.mxu0 0.0
  %117 = vmatprep.subr.mxu0 0.0
  %118 = vmatpush1.msra.mxu0 0.0
  %119 = vmatprep.subr.mxu0 0.0
  %120 = vmatpush1.msra.mxu0 0.0
  %121 = vmatprep.subr.mxu0 0.0
  %122 = vmatpush1.msra.mxu0 0.0
  %123 = vmatprep.subr.mxu0 0.0
  %124 = vmatpush1.msra.mxu0 0.0
  %125 = vmatprep.subr.mxu0 0.0
  %126 = vmatpush1.msra.mxu0 0.0
  %127 = vmatprep.subr.mxu0 0.0
  %128 = vmatpush1.msra.mxu0 0.0
  %129 = vmatprep.subr.mxu0 0.0
  %130 = vmatpush1.msra.mxu0 0.0
  %131 = vmatprep.subr.mxu0 0.0
  %132 = vmatpush1.msra.mxu0 0.0
  %133 = vmatprep.subr.mxu0 0.0
  %134 = vmatpush1.msra.mxu0 0.0
  %135 = vmatprep.mubr.f32.mxu0 0.0
  %136 = vmatmul.mubr.f32.gmra.mrb[0].mxu0 %v41
  %v137 = vpop.f32.mrb[0].mxu0
  %v138 = vadd.f32 0.0, %v137
  %v139 = vpop.f32.mrb[0].mxu0
  %v140 = vadd.f32 0.0, %v139
  %141 = vmatprep.mubr.f32.mxu0 0.0
  %142 = vmatmul.mubr.f32.gmra.mrb[0].mxu0 %v44
  %v143 = vpop.f32.mrb[0].mxu0
  %v144 = vadd.f32 0.0, %v143
  %v145 = vpop.f32.mrb[0].mxu0
  %v146 = vadd.f32 0.0, %v145
  %147 = vmatprep.mubr.f32.mxu0 0.0
  %148 = vmatmul.mubr.f32.gmra.mrb[0].mxu0 %v47
  %v149 = vpop.f32.mrb[0].mxu0
  %v150 = vadd.f32 0.0, %v149
  %v151 = vpop.f32.mrb[0].mxu0
  %v152 = vadd.f32 0.0, %v151
  %153 = vmatprep.mubr.f32.mxu0 0.0
  %154 = vmatmul.mubr.f32.gmra.mrb[0].mxu0 %v50
  %v155 = vpop.f32.mrb[0].mxu0
  %v156 = vadd.f32 0.0, %v155
  %v157 = vpop.f32.mrb[0].mxu0
  %v158 = vadd.f32 0.0, %v157
  %159 = vdwg.mxu0
  %160 = vmatprep.subr.mxu0 %v18
  %161 = vmatpush1.msra.mxu0 %v17
  %162 = vmatprep.subr.mxu0 %v24
  %163 = vmatpush1.msra.mxu0 %v23
  %164 = vmatprep.subr.mxu0 %v30
  %165 = vmatpush1.msra.mxu0 %v29
  %166 = vmatprep.subr.mxu0 %v63
  %167 = vmatpush1.msra.mxu0 %v60
  %168 = vmatprep.subr.mxu0 0.0
  %169 = vmatpush1.msra.mxu0 0.0
  %170 = vmatprep.subr.mxu0 0.0
  %171 = vmatpush1.msra.mxu0 0.0
  %172 = vmatprep.subr.mxu0 0.0
  %173 = vmatpush1.msra.mxu0 0.0
  %174 = vmatprep.subr.mxu0 0.0
  %175 = vmatpush1.msra.mxu0 0.0
  %176 = vmatprep.subr.mxu0 0.0
  %177 = vmatpush1.msra.mxu0 0.0
  %178 = vmatprep.subr.mxu0 0.0
  %179 = vmatpush1.msra.mxu0 0.0
  %180 = vmatprep.subr.mxu0 0.0
  %181 = vmatpush1.msra.mxu0 0.0
  %182 = vmatprep.subr.mxu0 0.0
  %183 = vmatpush1.msra.mxu0 0.0
  %184 = vmatprep.subr.mxu0 0.0
  %185 = vmatpush1.msra.mxu0 0.0
  %186 = vmatprep.subr.mxu0 0.0
  %187 = vmatpush1.msra.mxu0 0.0
  %188 = vmatprep.subr.mxu0 0.0
  %189 = vmatpush1.msra.mxu0 0.0
  %190 = vmatprep.subr.mxu0 0.0
  %191 = vmatpush1.msra.mxu0 0.0
  %192 = vmatprep.subr.mxu0 0.0
  %193 = vmatpush1.msra.mxu0 0.0
  %194 = vmatprep.subr.mxu0 0.0
  %195 = vmatpush1.msra.mxu0 0.0
  %196 = vmatprep.subr.mxu0 0.0
  %197 = vmatpush1.msra.mxu0 0.0
  %198 = vmatprep.subr.mxu0 0.0
  %199 = vmatpush1.msra.mxu0 0.0
  %200 = vmatprep.subr.mxu0 0.0
  %201 = vmatpush1.msra.mxu0 0.0
  %202 = vmatprep.subr.mxu0 0.0
  %203 = vmatpush1.msra.mxu0 0.0
  %204 = vmatprep.subr.mxu0 0.0
  %205 = vmatpush1.msra.mxu0 0.0
  %206 = vmatprep.subr.mxu0 0.0
  %207 = vmatpush1.msra.mxu0 0.0
  %208 = vmatprep.subr.mxu0 0.0
  %209 = vmatpush1.msra.mxu0 0.0
  %210 = vmatprep.subr.mxu0 0.0
  %211 = vmatpush1.msra.mxu0 0.0
  %212 = vmatprep.subr.mxu0 0.0
  %213 = vmatpush1.msra.mxu0 0.0
  %214 = vmatprep.subr.mxu0 0.0
  %215 = vmatpush1.msra.mxu0 0.0
  %216 = vmatprep.subr.mxu0 0.0
  %217 = vmatpush1.msra.mxu0 0.0
  %218 = vmatprep.subr.mxu0 0.0
  %219 = vmatpush1.msra.mxu0 0.0
  %220 = vmatprep.subr.mxu0 0.0
  %221 = vmatpush1.msra.mxu0 0.0
  %222 = vmatprep.subr.mxu0 0.0
  %223 = vmatpush1.msra.mxu0 0.0
  %224 = vmatprep.mubr.f32.mxu0 0.0
  %225 = vmatmul.mubr.f32.gmra.mrb[0].mxu0 %v41
  %v226 = vpop.f32.mrb[0].mxu0
  %v227 = vadd.f32 0.0, %v226
  %v228 = vpop.f32.mrb[0].mxu0
  %v229 = vadd.f32 0.0, %v228
  %230 = vmatprep.mubr.f32.mxu0 0.0
  %231 = vmatmul.mubr.f32.gmra.mrb[0].mxu0 %v44
  %v232 = vpop.f32.mrb[0].mxu0
  %v233 = vadd.f32 0.0, %v232
  %v234 = vpop.f32.mrb[0].mxu0
  %v235 = vadd.f32 0.0, %v234
  %236 = vmatprep.mubr.f32.mxu0 0.0
  %237 = vmatmul.mubr.f32.gmra.mrb[0].mxu0 %v47
  %v238 = vpop.f32.mrb[0].mxu0
  %v239 = vadd.f32 0.0, %v238
  %v240 = vpop.f32.mrb[0].mxu0
  %v241 = vadd.f32 0.0, %v240
  %242 = vmatprep.mubr.f32.mxu0 0.0
  %243 = vmatmul.mubr.f32.gmra.mrb[0].mxu0 %v50
  %v244 = vpop.f32.mrb[0].mxu0
  %v245 = vadd.f32 0.0, %v244
  %v246 = vpop.f32.mrb[0].mxu0
  %v247 = vadd.f32 0.0, %v246
  %248 = vdwg.mxu0
  %249 = vmatprep.subr.mxu0 %v20
  %250 = vmatpush1.msra.mxu0 %v19
  %251 = vmatprep.subr.mxu0 %v26
  %252 = vmatpush1.msra.mxu0 %v25
  %253 = vmatprep.subr.mxu0 %v32
  %254 = vmatpush1.msra.mxu0 %v31
  %255 = vmatprep.subr.mxu0 %v69
  %256 = vmatpush1.msra.mxu0 %v66
  %257 = vmatprep.subr.mxu0 0.0
  %258 = vmatpush1.msra.mxu0 0.0
  %259 = vmatprep.subr.mxu0 0.0
  %260 = vmatpush1.msra.mxu0 0.0
  %261 = vmatprep.subr.mxu0 0.0
  %262 = vmatpush1.msra.mxu0 0.0
  %263 = vmatprep.subr.mxu0 0.0
  %264 = vmatpush1.msra.mxu0 0.0
  %265 = vmatprep.subr.mxu0 0.0
  %266 = vmatpush1.msra.mxu0 0.0
  %267 = vmatprep.subr.mxu0 0.0
  %268 = vmatpush1.msra.mxu0 0.0
  %269 = vmatprep.subr.mxu0 0.0
  %270 = vmatpush1.msra.mxu0 0.0
  %271 = vmatprep.subr.mxu0 0.0
  %272 = vmatpush1.msra.mxu0 0.0
  %273 = vmatprep.subr.mxu0 0.0
  %274 = vmatpush1.msra.mxu0 0.0
  %275 = vmatprep.subr.mxu0 0.0
  %276 = vmatpush1.msra.mxu0 0.0
  %277 = vmatprep.subr.mxu0 0.0
  %278 = vmatpush1.msra.mxu0 0.0
  %279 = vmatprep.subr.mxu0 0.0
  %280 = vmatpush1.msra.mxu0 0.0
  %281 = vmatprep.subr.mxu0 0.0
  %282 = vmatpush1.msra.mxu0 0.0
  %283 = vmatprep.subr.mxu0 0.0
  %284 = vmatpush1.msra.mxu0 0.0
  %285 = vmatprep.subr.mxu0 0.0
  %286 = vmatpush1.msra.mxu0 0.0
  %287 = vmatprep.subr.mxu0 0.0
  %288 = vmatpush1.msra.mxu0 0.0
  %289 = vmatprep.subr.mxu0 0.0
  %290 = vmatpush1.msra.mxu0 0.0
  %291 = vmatprep.subr.mxu0 0.0
  %292 = vmatpush1.msra.mxu0 0.0
  %293 = vmatprep.subr.mxu0 0.0
  %294 = vmatpush1.msra.mxu0 0.0
  %295 = vmatprep.subr.mxu0 0.0
  %296 = vmatpush1.msra.mxu0 0.0
  %297 = vmatprep.subr.mxu0 0.0
  %298 = vmatpush1.msra.mxu0 0.0
  %299 = vmatprep.subr.mxu0 0.0
  %300 = vmatpush1.msra.mxu0 0.0
  %301 = vmatprep.subr.mxu0 0.0
  %302 = vmatpush1.msra.mxu0 0.0
  %303 = vmatprep.subr.mxu0 0.0
  %304 = vmatpush1.msra.mxu0 0.0
  %305 = vmatprep.subr.mxu0 0.0
  %306 = vmatpush1.msra.mxu0 0.0
  %307 = vmatprep.subr.mxu0 0.0
  %308 = vmatpush1.msra.mxu0 0.0
  %309 = vmatprep.subr.mxu0 0.0
  %310 = vmatpush1.msra.mxu0 0.0
  %311 = vmatprep.subr.mxu0 0.0
  %312 = vmatpush1.msra.mxu0 0.0
  %313 = vmatprep.mubr.f32.mxu0 0.0
  %314 = vmatmul.mubr.f32.gmra.mrb[0].mxu0 %v41
  %v315 = vpop.f32.mrb[0].mxu0
  %v316 = vadd.f32 0.0, %v315
  %v317 = vpop.f32.mrb[0].mxu0
  %v318 = vadd.f32 0.0, %v317
  %319 = vmatprep.mubr.f32.mxu0 0.0
  %320 = vmatmul.mubr.f32.gmra.mrb[0].mxu0 %v44
  %v321 = vpop.f32.mrb[0].mxu0
  %v322 = vadd.f32 0.0, %v321
  %v323 = vpop.f32.mrb[0].mxu0
  %v324 = vadd.f32 0.0, %v323
  %325 = vmatprep.mubr.f32.mxu0 0.0
  %326 = vmatmul.mubr.f32.gmra.mrb[0].mxu0 %v47
  %v327 = vpop.f32.mrb[0].mxu0
  %v328 = vadd.f32 0.0, %v327
  %v329 = vpop.f32.mrb[0].mxu0
  %v330 = vadd.f32 0.0, %v329
  %331 = vmatprep.mubr.f32.mxu0 0.0
  %332 = vmatmul.mubr.f32.gmra.mrb[0].mxu0 %v50
  %v333 = vpop.f32.mrb[0].mxu0
  %v334 = vadd.f32 0.0, %v333
  %v335 = vpop.f32.mrb[0].mxu0
  %v336 = vadd.f32 0.0, %v335
  %337 = vdwg.mxu0
  %338 = vst [vmem:[%s2] sm:$0xff] %v138
  %339 = vst [vmem:[%s2 + $0x8] sm:$0xff] %v140
  %340 = vst [vmem:[%s2 + $0x10] sm:$0xff] %v227
  %341 = vst [vmem:[%s2 + $0x18] sm:$0xff] %v229
  %342 = vst [vmem:[%s2 + $0x20] sm:$0xff] %v316
  %vm343 = vcmask 343040
  %344 = vst.msk [vmem:[%s2 + $0x28] sm:$0xff] %vm343, %v318
  %345 = vst [vmem:[%s2 + $0x30] sm:$0xff] %v144
  %346 = vst [vmem:[%s2 + $0x38] sm:$0xff] %v146
  %347 = vst [vmem:[%s2 + $0x40] sm:$0xff] %v233
  %348 = vst [vmem:[%s2 + $0x48] sm:$0xff] %v235
  %349 = vst [vmem:[%s2 + $0x50] sm:$0xff] %v322
  %350 = vst.msk [vmem:[%s2 + $0x58] sm:$0xff] %vm343, %v324
  %351 = vst [vmem:[%s2 + $0x60] sm:$0xff] %v150
  %352 = vst [vmem:[%s2 + $0x68] sm:$0xff] %v152
  %353 = vst [vmem:[%s2 + $0x70] sm:$0xff] %v239
  %354 = vst [vmem:[%s2 + $0x78] sm:$0xff] %v241
  %355 = vst [vmem:[%s2 + $0x80] sm:$0xff] %v328
  %356 = vst.msk [vmem:[%s2 + $0x88] sm:$0xff] %vm343, %v330
  %357 = vst [vmem:[%s2 + $0x90] sm:$0xff] %v156
  %358 = vst [vmem:[%s2 + $0x98] sm:$0xff] %v158
  %359 = vst [vmem:[%s2 + $0xa0] sm:$0xff] %v245
  %360 = vst [vmem:[%s2 + $0xa8] sm:$0xff] %v247
  %361 = vst [vmem:[%s2 + $0xb0] sm:$0xff] %v334
  %362 = vst.msk [vmem:[%s2 + $0xb8] sm:$0xff] %vm343, %v336
  // Predicated region
  $region10: #{incre_dino_forward.7} parent=0 // pred_check
    _
  $region11: #{incre_dino_forward.7} parent=0 // pred_check_branch
    %364 = sbr.rel (0) target = $region13
  $region12: #{incre_dino_forward.7} parent=0 // pred_region
    _
  $region13: #{incre_dino_forward.7} parent=0 // pred_fallthru
    _
  // Predicated region
  $region14: #{incre_dino_forward.7} parent=0 // pred_check
    _
  $region15: #{incre_dino_forward.7} parent=0 // pred_check_branch
    %366 = sbr.rel (0) target = $region17
  $region16: #{incre_dino_forward.7} parent=0 // pred_region
    _
  $region17: #{incre_dino_forward.7} parent=0 // pred_fallthru
    _

// kernel: incre_dino_forward.6
$region0: #{incre_dino_forward.6}
  #allocation0 [shape = 'u32[]', space=smem, size = 0x4, offset = 0x4, fixed_abs, tag = 'smem constant byte address 0x4 - core index']
  #allocation1 [shape = 'u32[144,128]{1,0:T(1,128)}', space=vmem, size = 0x12000, scoped, tag = 'internal scratch']
  #allocation2 [shape = 'f32[7,32]{1,0:T(8,128)}', space=vmem, size = 0x1000, scoped, tag = 'scratch operand']
  %s0 = inlined_call_operand.vmem [shape: f32[1,7,32], index: 0, kind: input, shape index: {}]
  %s1 = inlined_call_operand.vmem [shape: f32[12,1,32], index: 1, kind: input, shape index: {}]
  %s2 = inlined_call_operand.vmem [shape: f32[12,1,32], index: 2, kind: input, shape index: {}]
  %s3 = inlined_call_operand.vmem [shape: f32[12,32,96], index: 3, kind: input, shape index: {}]
  %s4 = inlined_call_operand.vmem [shape: f32[12,1,96], index: 4, kind: input, shape index: {}]
  %s5 = inlined_call_operand.vmem [shape: f32[12,32,32], index: 5, kind: input, shape index: {}]
  %s6 = inlined_call_operand.vmem [shape: f32[12,1,32], index: 6, kind: input, shape index: {}]
  %s7 = inlined_call_operand.vmem [shape: f32[12,1,32], index: 7, kind: input, shape index: {}]
  %s8 = inlined_call_operand.vmem [shape: f32[12,1,32], index: 8, kind: input, shape index: {}]
  %s9 = inlined_call_operand.vmem [shape: f32[12,1,32], index: 9, kind: input, shape index: {}]
  %s10 = inlined_call_operand.vmem [shape: f32[12,32,128], index: 10, kind: input, shape index: {}]
  %s11 = inlined_call_operand.vmem [shape: f32[12,1,128], index: 11, kind: input, shape index: {}]
  %s12 = inlined_call_operand.vmem [shape: f32[12,128,32], index: 12, kind: input, shape index: {}]
  %s13 = inlined_call_operand.vmem [shape: f32[12,1,32], index: 13, kind: input, shape index: {}]
  %s14 = inlined_call_operand.vmem [shape: f32[12,1,32], index: 14, kind: input, shape index: {}]
  %s15 = inlined_call_operand.vmem [shape: f32[1,32], index: 15, kind: input, shape index: {}]
  %s16 = inlined_call_operand.vmem [shape: f32[1,32], index: 16, kind: input, shape index: {}]
  %s17 = inlined_call_operand.vmem [shape: f32[1,12,7,32], index: 17, kind: output, shape index: {}]
  %s18 = sld [smem:[#allocation0]]
  $region105: #{incre_dino_forward.6} parent=0
    _
  %s20 = ssub.s32 1, %s18
  %s21 = scalar_select 0, %s20, %s18
  loop: start=0, step=1, limit=14
  $region2: #{incre_dino_forward.6} parent=0 // loop_pre_header
    _
  $region3: #{incre_dino_forward.6} parent=0 // loop_header
    %s23 = sphi 0, %s27
    %p24 = scmp.ge.s32.totalorder %s23, 14
    %s30 = sphi 0, %s42
    %s31 = sphi 0, %s38
    %s32 = sphi 0, %s30
    %s33 = sphi 0, %s31
    %s34 = sphi 0, %s32
    %s35 = sphi 0, %s33
    %s45 = sphi 0, %s47
    %s48 = sphi 0, %s45
    %s49 = sphi 0, %s48
    %s65 = sphi 0, %s49
    %s71 = sphi 0, %s73
    %s74 = sphi 0, %s71
    %s75 = sphi 0, %s74
    %s91 = sphi 0, %s75
    %s97 = sphi 0, %s99
    %s100 = sphi 0, %s97
    %s101 = sphi 0, %s100
    %s117 = sphi 0, %s101
    %s123 = sphi 0, %s125
    %s126 = sphi 0, %s123
    %s127 = sphi 0, %s126
    %s143 = sphi 0, %s127
    %s149 = sphi 0, %s151
    %s152 = sphi 0, %s149
    %s153 = sphi 0, %s152
    %s169 = sphi 0, %s153
    %s175 = sphi 0, %s177
    %s178 = sphi 0, %s175
    %s179 = sphi 0, %s178
    %s195 = sphi 0, %s179
    %s201 = sphi 0, %s203
    %s204 = sphi 0, %s201
    %s205 = sphi 0, %s204
    %s221 = sphi 0, %s205
    %s227 = sphi 0, %s229
    %s230 = sphi 0, %s227
    %s231 = sphi 0, %s230
    %s247 = sphi 0, %s231
    %s253 = sphi 0, %s255
    %s256 = sphi 0, %s253
    %s257 = sphi 0, %s256
    %s273 = sphi 0, %s257
    %s279 = sphi 0, %s281
    %s282 = sphi 0, %s279
    %s283 = sphi 0, %s282
    %s299 = sphi 0, %s283
    %s305 = sphi 0, %s307
    %s308 = sphi 0, %s305
    %s309 = sphi 0, %s308
    %s325 = sphi 0, %s309
    %s331 = sphi 0, %s333
    %s334 = sphi 0, %s331
    %s335 = sphi 0, %s334
    %s351 = sphi 0, %s335
    %s357 = sphi 0, %s359
    %s360 = sphi 0, %s357
    %s361 = sphi 0, %s360
    %s377 = sphi 0, %s361
    %s383 = sphi 0, %s385
    %s386 = sphi 0, %s383
    %s387 = sphi 0, %s386
    %s403 = sphi 0, %s387
    %s409 = sphi 0, %s411
    %s412 = sphi 0, %s409
    %s413 = sphi 0, %s412
    %s429 = sphi 0, %s413
    %s433 = sphi 0, %s433
    %s435 = sphi 0, %s433
    %s436 = sphi 0, %s435
    %s450 = sphi 0, %s436
    %s454 = sphi 0, %s454
    %s456 = sphi 0, %s454
    %s457 = sphi 0, %s456
    %s471 = sphi 0, %s457
    %s479 = sphi 0, %s481
    %s482 = sphi 0, %s479
    %s483 = sphi 0, %s482
    %s499 = sphi 0, %s483
  $region4: #{incre_dino_forward.6} parent=0 // loop_header_branch
    %26 = sbr.rel (%p24) target = $region8
  $region5: #{incre_dino_forward.6} parent=0 // loop_body
    %s28 = ssub.s32 %s23, 1
    %s29 = ssub.s32 %s23, 2
    %s36 = sadd.s32 1, %s31
    %p37 = scmp.ge.s32.totalorder %s36, 12
    %s38 = scalar_select %p37, 0, %s36
    %s39 = sadd.s32 1, %s30
    %s40 = scalar_select %p37, %s39, %s30
    %p41 = scmp.ge.s32.totalorder %s40, 1
    %s42 = scalar_select %p41, 0, %s40
    %s43 = ssub.s32 %s30, %s42
    %p44 = scmp.eq.s32.totalorder %s43, 0
    %s46 = sadd.s32 %s45, 1
    %s47 = scalar_select %p44, %s45, %s46
    %p50 = pneg %p44
    %p51 = scmp.eq.s32.totalorder %s23, 11
    %p52 = por %p50, %p51
    %p53 = scmp.ne.s32.totalorder %s45, %s48
    %p54 = scmp.eq.s32.totalorder %s23, 0
    %p55 = por %p53, %p54
    %p56 = scmp.ne.s32.totalorder %s45, %s48
    %p57 = scmp.eq.s32.totalorder %s28, 11
    %p58 = por %p56, %p57
    %p59 = scmp.ne.s32.totalorder %s48, %s49
    %p60 = scmp.eq.s32.totalorder %s28, 0
    %p61 = por %p59, %p60
    %p62 = scmp.ne.s32.totalorder %s48, %s49
    %p63 = scmp.eq.s32.totalorder %s29, 11
    %p64 = por %p62, %p63
    %p66 = scmp.ne.s32.totalorder %s49, %s65
    %p67 = scmp.eq.s32.totalorder %s29, 0
    %p68 = por %p66, %p67
    %s69 = ssub.s32 %s31, %s38
    %p70 = scmp.eq.s32.totalorder %s69, 0
    %s72 = sadd.s32 %s71, 1
    %s73 = scalar_select %p70, %s71, %s72
    %p76 = pneg %p70
    %p77 = scmp.eq.s32.totalorder %s23, 11
    %p78 = por %p76, %p77
    %p79 = scmp.ne.s32.totalorder %s71, %s74
    %p80 = scmp.eq.s32.totalorder %s23, 0
    %p81 = por %p79, %p80
    %p82 = scmp.ne.s32.totalorder %s71, %s74
    %p83 = scmp.eq.s32.totalorder %s28, 11
    %p84 = por %p82, %p83
    %p85 = scmp.ne.s32.totalorder %s74, %s75
    %p86 = scmp.eq.s32.totalorder %s28, 0
    %p87 = por %p85, %p86
    %p88 = scmp.ne.s32.totalorder %s74, %s75
    %p89 = scmp.eq.s32.totalorder %s29, 11
    %p90 = por %p88, %p89
    %p92 = scmp.ne.s32.totalorder %s75, %s91
    %p93 = scmp.eq.s32.totalorder %s29, 0
    %p94 = por %p92, %p93
    %s95 = ssub.s32 %s31, %s38
    %p96 = scmp.eq.s32.totalorder %s95, 0
    %s98 = sadd.s32 %s97, 1
    %s99 = scalar_select %p96, %s97, %s98
    %p102 = pneg %p96
    %p103 = scmp.eq.s32.totalorder %s23, 11
    %p104 = por %p102, %p103
    %p105 = scmp.ne.s32.totalorder %s97, %s100
    %p106 = scmp.eq.s32.totalorder %s23, 0
    %p107 = por %p105, %p106
    %p108 = scmp.ne.s32.totalorder %s97, %s100
    %p109 = scmp.eq.s32.totalorder %s28, 11
    %p110 = por %p108, %p109
    %p111 = scmp.ne.s32.totalorder %s100, %s101
    %p112 = scmp.eq.s32.totalorder %s28, 0
    %p113 = por %p111, %p112
    %p114 = scmp.ne.s32.totalorder %s100, %s101
    %p115 = scmp.eq.s32.totalorder %s29, 11
    %p116 = por %p114, %p115
    %p118 = scmp.ne.s32.totalorder %s101, %s117
    %p119 = scmp.eq.s32.totalorder %s29, 0
    %p120 = por %p118, %p119
    %s121 = ssub.s32 %s31, %s38
    %p122 = scmp.eq.s32.totalorder %s121, 0
    %s124 = sadd.s32 %s123, 1
    %s125 = scalar_select %p122, %s123, %s124
    %p128 = pneg %p122
    %p129 = scmp.eq.s32.totalorder %s23, 11
    %p130 = por %p128, %p129
    %p131 = scmp.ne.s32.totalorder %s123, %s126
    %p132 = scmp.eq.s32.totalorder %s23, 0
    %p133 = por %p131, %p132
    %p134 = scmp.ne.s32.totalorder %s123, %s126
    %p135 = scmp.eq.s32.totalorder %s28, 11
    %p136 = por %p134, %p135
    %p137 = scmp.ne.s32.totalorder %s126, %s127
    %p138 = scmp.eq.s32.totalorder %s28, 0
    %p139 = por %p137, %p138
    %p140 = scmp.ne.s32.totalorder %s126, %s127
    %p141 = scmp.eq.s32.totalorder %s29, 11
    %p142 = por %p140, %p141
    %p144 = scmp.ne.s32.totalorder %s127, %s143
    %p145 = scmp.eq.s32.totalorder %s29, 0
    %p146 = por %p144, %p145
    %s147 = ssub.s32 %s31, %s38
    %p148 = scmp.eq.s32.totalorder %s147, 0
    %s150 = sadd.s32 %s149, 1
    %s151 = scalar_select %p148, %s149, %s150
    %p154 = pneg %p148
    %p155 = scmp.eq.s32.totalorder %s23, 11
    %p156 = por %p154, %p155
    %p157 = scmp.ne.s32.totalorder %s149, %s152
    %p158 = scmp.eq.s32.totalorder %s23, 0
    %p159 = por %p157, %p158
    %p160 = scmp.ne.s32.totalorder %s149, %s152
    %p161 = scmp.eq.s32.totalorder %s28, 11
    %p162 = por %p160, %p161
    %p163 = scmp.ne.s32.totalorder %s152, %s153
    %p164 = scmp.eq.s32.totalorder %s28, 0
    %p165 = por %p163, %p164
    %p166 = scmp.ne.s32.totalorder %s152, %s153
    %p167 = scmp.eq.s32.totalorder %s29, 11
    %p168 = por %p166, %p167
    %p170 = scmp.ne.s32.totalorder %s153, %s169
    %p171 = scmp.eq.s32.totalorder %s29, 0
    %p172 = por %p170, %p171
    %s173 = ssub.s32 %s31, %s38
    %p174 = scmp.eq.s32.totalorder %s173, 0
    %s176 = sadd.s32 %s175, 1
    %s177 = scalar_select %p174, %s175, %s176
    %p180 = pneg %p174
    %p181 = scmp.eq.s32.totalorder %s23, 11
    %p182 = por %p180, %p181
    %p183 = scmp.ne.s32.totalorder %s175, %s178
    %p184 = scmp.eq.s32.totalorder %s23, 0
    %p185 = por %p183, %p184
    %p186 = scmp.ne.s32.totalorder %s175, %s178
    %p187 = scmp.eq.s32.totalorder %s28, 11
    %p188 = por %p186, %p187
    %p189 = scmp.ne.s32.totalorder %s178, %s179
    %p190 = scmp.eq.s32.totalorder %s28, 0
    %p191 = por %p189, %p190
    %p192 = scmp.ne.s32.totalorder %s178, %s179
    %p193 = scmp.eq.s32.totalorder %s29, 11
    %p194 = por %p192, %p193
    %p196 = scmp.ne.s32.totalorder %s179, %s195
    %p197 = scmp.eq.s32.totalorder %s29, 0
    %p198 = por %p196, %p197
    %s199 = ssub.s32 %s31, %s38
    %p200 = scmp.eq.s32.totalorder %s199, 0
    %s202 = sadd.s32 %s201, 1
    %s203 = scalar_select %p200, %s201, %s202
    %p206 = pneg %p200
    %p207 = scmp.eq.s32.totalorder %s23, 11
    %p208 = por %p206, %p207
    %p209 = scmp.ne.s32.totalorder %s201, %s204
    %p210 = scmp.eq.s32.totalorder %s23, 0
    %p211 = por %p209, %p210
    %p212 = scmp.ne.s32.totalorder %s201, %s204
    %p213 = scmp.eq.s32.totalorder %s28, 11
    %p214 = por %p212, %p213
    %p215 = scmp.ne.s32.totalorder %s204, %s205
    %p216 = scmp.eq.s32.totalorder %s28, 0
    %p217 = por %p215, %p216
    %p218 = scmp.ne.s32.totalorder %s204, %s205
    %p219 = scmp.eq.s32.totalorder %s29, 11
    %p220 = por %p218, %p219
    %p222 = scmp.ne.s32.totalorder %s205, %s221
    %p223 = scmp.eq.s32.totalorder %s29, 0
    %p224 = por %p222, %p223
    %s225 = ssub.s32 %s31, %s38
    %p226 = scmp.eq.s32.totalorder %s225, 0
    %s228 = sadd.s32 %s227, 1
    %s229 = scalar_select %p226, %s227, %s228
    %p232 = pneg %p226
    %p233 = scmp.eq.s32.totalorder %s23, 11
    %p234 = por %p232, %p233
    %p235 = scmp.ne.s32.totalorder %s227, %s230
    %p236 = scmp.eq.s32.totalorder %s23, 0
    %p237 = por %p235, %p236
    %p238 = scmp.ne.s32.totalorder %s227, %s230
    %p239 = scmp.eq.s32.totalorder %s28, 11
    %p240 = por %p238, %p239
    %p241 = scmp.ne.s32.totalorder %s230, %s231
    %p242 = scmp.eq.s32.totalorder %s28, 0
    %p243 = por %p241, %p242
    %p244 = scmp.ne.s32.totalorder %s230, %s231
    %p245 = scmp.eq.s32.totalorder %s29, 11
    %p246 = por %p244, %p245
    %p248 = scmp.ne.s32.totalorder %s231, %s247
    %p249 = scmp.eq.s32.totalorder %s29, 0
    %p250 = por %p248, %p249
    %s251 = ssub.s32 %s31, %s38
    %p252 = scmp.eq.s32.totalorder %s251, 0
    %s254 = sadd.s32 %s253, 1
    %s255 = scalar_select %p252, %s253, %s254
    %p258 = pneg %p252
    %p259 = scmp.eq.s32.totalorder %s23, 11
    %p260 = por %p258, %p259
    %p261 = scmp.ne.s32.totalorder %s253, %s256
    %p262 = scmp.eq.s32.totalorder %s23, 0
    %p263 = por %p261, %p262
    %p264 = scmp.ne.s32.totalorder %s253, %s256
    %p265 = scmp.eq.s32.totalorder %s28, 11
    %p266 = por %p264, %p265
    %p267 = scmp.ne.s32.totalorder %s256, %s257
    %p268 = scmp.eq.s32.totalorder %s28, 0
    %p269 = por %p267, %p268
    %p270 = scmp.ne.s32.totalorder %s256, %s257
    %p271 = scmp.eq.s32.totalorder %s29, 11
    %p272 = por %p270, %p271
    %p274 = scmp.ne.s32.totalorder %s257, %s273
    %p275 = scmp.eq.s32.totalorder %s29, 0
    %p276 = por %p274, %p275
    %s277 = ssub.s32 %s31, %s38
    %p278 = scmp.eq.s32.totalorder %s277, 0
    %s280 = sadd.s32 %s279, 1
    %s281 = scalar_select %p278, %s279, %s280
    %p284 = pneg %p278
    %p285 = scmp.eq.s32.totalorder %s23, 11
    %p286 = por %p284, %p285
    %p287 = scmp.ne.s32.totalorder %s279, %s282
    %p288 = scmp.eq.s32.totalorder %s23, 0
    %p289 = por %p287, %p288
    %p290 = scmp.ne.s32.totalorder %s279, %s282
    %p291 = scmp.eq.s32.totalorder %s28, 11
    %p292 = por %p290, %p291
    %p293 = scmp.ne.s32.totalorder %s282, %s283
    %p294 = scmp.eq.s32.totalorder %s28, 0
    %p295 = por %p293, %p294
    %p296 = scmp.ne.s32.totalorder %s282, %s283
    %p297 = scmp.eq.s32.totalorder %s29, 11
    %p298 = por %p296, %p297
    %p300 = scmp.ne.s32.totalorder %s283, %s299
    %p301 = scmp.eq.s32.totalorder %s29, 0
    %p302 = por %p300, %p301
    %s303 = ssub.s32 %s31, %s38
    %p304 = scmp.eq.s32.totalorder %s303, 0
    %s306 = sadd.s32 %s305, 1
    %s307 = scalar_select %p304, %s305, %s306
    %p310 = pneg %p304
    %p311 = scmp.eq.s32.totalorder %s23, 11
    %p312 = por %p310, %p311
    %p313 = scmp.ne.s32.totalorder %s305, %s308
    %p314 = scmp.eq.s32.totalorder %s23, 0
    %p315 = por %p313, %p314
    %p316 = scmp.ne.s32.totalorder %s305, %s308
    %p317 = scmp.eq.s32.totalorder %s28, 11
    %p318 = por %p316, %p317
    %p319 = scmp.ne.s32.totalorder %s308, %s309
    %p320 = scmp.eq.s32.totalorder %s28, 0
    %p321 = por %p319, %p320
    %p322 = scmp.ne.s32.totalorder %s308, %s309
    %p323 = scmp.eq.s32.totalorder %s29, 11
    %p324 = por %p322, %p323
    %p326 = scmp.ne.s32.totalorder %s309, %s325
    %p327 = scmp.eq.s32.totalorder %s29, 0
    %p328 = por %p326, %p327
    %s329 = ssub.s32 %s31, %s38
    %p330 = scmp.eq.s32.totalorder %s329, 0
    %s332 = sadd.s32 %s331, 1
    %s333 = scalar_select %p330, %s331, %s332
    %p336 = pneg %p330
    %p337 = scmp.eq.s32.totalorder %s23, 11
    %p338 = por %p336, %p337
    %p339 = scmp.ne.s32.totalorder %s331, %s334
    %p340 = scmp.eq.s32.totalorder %s23, 0
    %p341 = por %p339, %p340
    %p342 = scmp.ne.s32.totalorder %s331, %s334
    %p343 = scmp.eq.s32.totalorder %s28, 11
    %p344 = por %p342, %p343
    %p345 = scmp.ne.s32.totalorder %s334, %s335
    %p346 = scmp.eq.s32.totalorder %s28, 0
    %p347 = por %p345, %p346
    %p348 = scmp.ne.s32.totalorder %s334, %s335
    %p349 = scmp.eq.s32.totalorder %s29, 11
    %p350 = por %p348, %p349
    %p352 = scmp.ne.s32.totalorder %s335, %s351
    %p353 = scmp.eq.s32.totalorder %s29, 0
    %p354 = por %p352, %p353
    %s355 = ssub.s32 %s31, %s38
    %p356 = scmp.eq.s32.totalorder %s355, 0
    %s358 = sadd.s32 %s357, 1
    %s359 = scalar_select %p356, %s357, %s358
    %p362 = pneg %p356
    %p363 = scmp.eq.s32.totalorder %s23, 11
    %p364 = por %p362, %p363
    %p365 = scmp.ne.s32.totalorder %s357, %s360
    %p366 = scmp.eq.s32.totalorder %s23, 0
    %p367 = por %p365, %p366
    %p368 = scmp.ne.s32.totalorder %s357, %s360
    %p369 = scmp.eq.s32.totalorder %s28, 11
    %p370 = por %p368, %p369
    %p371 = scmp.ne.s32.totalorder %s360, %s361
    %p372 = scmp.eq.s32.totalorder %s28, 0
    %p373 = por %p371, %p372
    %p374 = scmp.ne.s32.totalorder %s360, %s361
    %p375 = scmp.eq.s32.totalorder %s29, 11
    %p376 = por %p374, %p375
    %p378 = scmp.ne.s32.totalorder %s361, %s377
    %p379 = scmp.eq.s32.totalorder %s29, 0
    %p380 = por %p378, %p379
    %s381 = ssub.s32 %s31, %s38
    %p382 = scmp.eq.s32.totalorder %s381, 0
    %s384 = sadd.s32 %s383, 1
    %s385 = scalar_select %p382, %s383, %s384
    %p388 = pneg %p382
    %p389 = scmp.eq.s32.totalorder %s23, 11
    %p390 = por %p388, %p389
    %p391 = scmp.ne.s32.totalorder %s383, %s386
    %p392 = scmp.eq.s32.totalorder %s23, 0
    %p393 = por %p391, %p392
    %p394 = scmp.ne.s32.totalorder %s383, %s386
    %p395 = scmp.eq.s32.totalorder %s28, 11
    %p396 = por %p394, %p395
    %p397 = scmp.ne.s32.totalorder %s386, %s387
    %p398 = scmp.eq.s32.totalorder %s28, 0
    %p399 = por %p397, %p398
    %p400 = scmp.ne.s32.totalorder %s386, %s387
    %p401 = scmp.eq.s32.totalorder %s29, 11
    %p402 = por %p400, %p401
    %p404 = scmp.ne.s32.totalorder %s387, %s403
    %p405 = scmp.eq.s32.totalorder %s29, 0
    %p406 = por %p404, %p405
    %s407 = ssub.s32 %s31, %s38
    %p408 = scmp.eq.s32.totalorder %s407, 0
    %s410 = sadd.s32 %s409, 1
    %s411 = scalar_select %p408, %s409, %s410
    %p414 = pneg %p408
    %p415 = scmp.eq.s32.totalorder %s23, 11
    %p416 = por %p414, %p415
    %p417 = scmp.ne.s32.totalorder %s409, %s412
    %p418 = scmp.eq.s32.totalorder %s23, 0
    %p419 = por %p417, %p418
    %p420 = scmp.ne.s32.totalorder %s409, %s412
    %p421 = scmp.eq.s32.totalorder %s28, 11
    %p422 = por %p420, %p421
    %p423 = scmp.ne.s32.totalorder %s412, %s413
    %p424 = scmp.eq.s32.totalorder %s28, 0
    %p425 = por %p423, %p424
    %p426 = scmp.ne.s32.totalorder %s412, %s413
    %p427 = scmp.eq.s32.totalorder %s29, 11
    %p428 = por %p426, %p427
    %p430 = scmp.ne.s32.totalorder %s413, %s429
    %p431 = scmp.eq.s32.totalorder %s29, 0
    %p432 = por %p430, %p431
    %s434 = sadd.s32 %s433, 1
    %p437 = scmp.eq.s32.totalorder %s23, 11
    %p438 = scmp.ne.s32.totalorder %s433, %s435
    %p439 = scmp.eq.s32.totalorder %s23, 0
    %p440 = por %p438, %p439
    %p441 = scmp.ne.s32.totalorder %s433, %s435
    %p442 = scmp.eq.s32.totalorder %s28, 11
    %p443 = por %p441, %p442
    %p444 = scmp.ne.s32.totalorder %s435, %s436
    %p445 = scmp.eq.s32.totalorder %s28, 0
    %p446 = por %p444, %p445
    %p447 = scmp.ne.s32.totalorder %s435, %s436
    %p448 = scmp.eq.s32.totalorder %s29, 11
    %p449 = por %p447, %p448
    %p451 = scmp.ne.s32.totalorder %s436, %s450
    %p452 = scmp.eq.s32.totalorder %s29, 0
    %p453 = por %p451, %p452
    %s455 = sadd.s32 %s454, 1
    %p458 = scmp.eq.s32.totalorder %s23, 11
    %p459 = scmp.ne.s32.totalorder %s454, %s456
    %p460 = scmp.eq.s32.totalorder %s23, 0
    %p461 = por %p459, %p460
    %p462 = scmp.ne.s32.totalorder %s454, %s456
    %p463 = scmp.eq.s32.totalorder %s28, 11
    %p464 = por %p462, %p463
    %p465 = scmp.ne.s32.totalorder %s456, %s457
    %p466 = scmp.eq.s32.totalorder %s28, 0
    %p467 = por %p465, %p466
    %p468 = scmp.ne.s32.totalorder %s456, %s457
    %p469 = scmp.eq.s32.totalorder %s29, 11
    %p470 = por %p468, %p469
    %p472 = scmp.ne.s32.totalorder %s457, %s471
    %p473 = scmp.eq.s32.totalorder %s29, 0
    %p474 = por %p472, %p473
    %s475 = ssub.s32 %s30, %s42
    %s476 = ssub.s32 %s31, %s38
    %s477 = sor.u32 %s475, %s476
    %p478 = scmp.eq.s32.totalorder %s477, 0
    %s480 = sadd.s32 %s479, 1
    %s481 = scalar_select %p478, %s479, %s480
    %p484 = pneg %p478
    %p485 = scmp.eq.s32.totalorder %s23, 11
    %p486 = por %p484, %p485
    %p487 = scmp.ne.s32.totalorder %s479, %s482
    %p488 = scmp.eq.s32.totalorder %s23, 0
    %p489 = por %p487, %p488
    %p490 = scmp.ne.s32.totalorder %s479, %s482
    %p491 = scmp.eq.s32.totalorder %s28, 11
    %p492 = por %p490, %p491
    %p493 = scmp.ne.s32.totalorder %s482, %s483
    %p494 = scmp.eq.s32.totalorder %s28, 0
    %p495 = por %p493, %p494
    %p496 = scmp.ne.s32.totalorder %s482, %s483
    %p497 = scmp.eq.s32.totalorder %s29, 11
    %p498 = por %p496, %p497
    %p500 = scmp.ne.s32.totalorder %s483, %s499
    %p501 = scmp.eq.s32.totalorder %s29, 0
    %p502 = por %p500, %p501
    %p503 = scmp.le.s32.totalorder 1, %s23
    %p504 = scmp.lt.s32.totalorder %s23, 13
    %p505 = pnand %p503, %p504
    %p506 = pneg %p505
    // Predicated region
    $region9: #{incre_dino_forward.6} parent=5 // pred_check
      _
    $region10: #{incre_dino_forward.6} parent=5 // pred_check_branch
      %508 = sbr.rel (%p505) target = $region12
    $region11: #{incre_dino_forward.6} parent=5 // pred_region
      %s509 = ssub.s32 %s23, 1
      // Predicated region
      $region13: #{incre_dino_forward.6} parent=11 // pred_check
        %p510 = pneg %p61
      $region14: #{incre_dino_forward.6} parent=11 // pred_check_branch
        %512 = sbr.rel (%p510) target = $region16
      $region15: #{incre_dino_forward.6} parent=11 // pred_region
        %p513 = scmp.lt.s32.totalorder %s32, 0
        %s514 = scalar_select %p513, %s32, 0
        %s515 = smul.addr %s514, 8
        %s516 = scalar_lea.vmem %s0, %s515
      $region16: #{incre_dino_forward.6} parent=11 // pred_fallthru
        _
      // Predicated region
      $region17: #{incre_dino_forward.6} parent=11 // pred_check
        %p517 = pneg %p446
      $region18: #{incre_dino_forward.6} parent=11 // pred_check_branch
        %519 = sbr.rel (%p517) target = $region20
      $region19: #{incre_dino_forward.6} parent=11 // pred_region
        _
      $region20: #{incre_dino_forward.6} parent=11 // pred_fallthru
        _
      // Predicated region
      $region21: #{incre_dino_forward.6} parent=11 // pred_check
        %p520 = pneg %p467
      $region22: #{incre_dino_forward.6} parent=11 // pred_check_branch
        %522 = sbr.rel (%p520) target = $region24
      $region23: #{incre_dino_forward.6} parent=11 // pred_region
        _
      $region24: #{incre_dino_forward.6} parent=11 // pred_fallthru
        _
    $region12: #{incre_dino_forward.6} parent=5 // pred_fallthru
      _
    %p523 = scmp.lt.s32.totalorder %s23, 12
    // Predicated region
    $region25: #{incre_dino_forward.6} parent=5 // pred_check
      %p524 = pneg %p523
    $region26: #{incre_dino_forward.6} parent=5 // pred_check_branch
      %526 = sbr.rel (%p524) target = $region28
    $region27: #{incre_dino_forward.6} parent=5 // pred_region
      // Predicated region
      $region29: #{incre_dino_forward.6} parent=27 // pred_check
        %p527 = pneg %p81
      $region30: #{incre_dino_forward.6} parent=27 // pred_check_branch
        %529 = sbr.rel (%p527) target = $region32
      $region31: #{incre_dino_forward.6} parent=27 // pred_region
        %p530 = scmp.lt.s32.totalorder %s31, 11
        %s531 = scalar_select %p530, %s31, 11
        %s532 = scalar_lea.vmem %s1, %s531
      $region32: #{incre_dino_forward.6} parent=27 // pred_fallthru
        _
      // Predicated region
      $region33: #{incre_dino_forward.6} parent=27 // pred_check
        %p533 = pneg %p107
      $region34: #{incre_dino_forward.6} parent=27 // pred_check_branch
        %535 = sbr.rel (%p533) target = $region36
      $region35: #{incre_dino_forward.6} parent=27 // pred_region
        %p536 = scmp.lt.s32.totalorder %s31, 11
        %s537 = scalar_select %p536, %s31, 11
        %s538 = scalar_lea.vmem %s2, %s537
      $region36: #{incre_dino_forward.6} parent=27 // pred_fallthru
        _
      // Predicated region
      $region37: #{incre_dino_forward.6} parent=27 // pred_check
        %p539 = pneg %p133
      $region38: #{incre_dino_forward.6} parent=27 // pred_check_branch
        %541 = sbr.rel (%p539) target = $region40
      $region39: #{incre_dino_forward.6} parent=27 // pred_region
        %p542 = scmp.lt.s32.totalorder %s31, 11
        %s543 = scalar_select %p542, %s31, 11
        %s544 = smul.addr %s543, 4
        %s545 = smul.addr %s544, 8
        %s546 = scalar_lea.vmem %s3, %s545
      $region40: #{incre_dino_forward.6} parent=27 // pred_fallthru
        _
      // Predicated region
      $region41: #{incre_dino_forward.6} parent=27 // pred_check
        %p547 = pneg %p159
      $region42: #{incre_dino_forward.6} parent=27 // pred_check_branch
        %549 = sbr.rel (%p547) target = $region44
      $region43: #{incre_dino_forward.6} parent=27 // pred_region
        %p550 = scmp.lt.s32.totalorder %s31, 11
        %s551 = scalar_select %p550, %s31, 11
        %s552 = scalar_lea.vmem %s4, %s551
      $region44: #{incre_dino_forward.6} parent=27 // pred_fallthru
        _
      // Predicated region
      $region45: #{incre_dino_forward.6} parent=27 // pred_check
        %p553 = pneg %p185
      $region46: #{incre_dino_forward.6} parent=27 // pred_check_branch
        %555 = sbr.rel (%p553) target = $region48
      $region47: #{incre_dino_forward.6} parent=27 // pred_region
        %p556 = scmp.lt.s32.totalorder %s31, 11
        %s557 = scalar_select %p556, %s31, 11
        %s558 = smul.addr %s557, 4
        %s559 = smul.addr %s558, 8
        %s560 = scalar_lea.vmem %s5, %s559
      $region48: #{incre_dino_forward.6} parent=27 // pred_fallthru
        _
      // Predicated region
      $region49: #{incre_dino_forward.6} parent=27 // pred_check
        %p561 = pneg %p211
      $region50: #{incre_dino_forward.6} parent=27 // pred_check_branch
        %563 = sbr.rel (%p561) target = $region52
      $region51: #{incre_dino_forward.6} parent=27 // pred_region
        %p564 = scmp.lt.s32.totalorder %s31, 11
        %s565 = scalar_select %p564, %s31, 11
        %s566 = scalar_lea.vmem %s6, %s565
      $region52: #{incre_dino_forward.6} parent=27 // pred_fallthru
        _
      // Predicated region
      $region53: #{incre_dino_forward.6} parent=27 // pred_check
        %p567 = pneg %p237
      $region54: #{incre_dino_forward.6} parent=27 // pred_check_branch
        %569 = sbr.rel (%p567) target = $region56
      $region55: #{incre_dino_forward.6} parent=27 // pred_region
        %p570 = scmp.lt.s32.totalorder %s31, 11
        %s571 = scalar_select %p570, %s31, 11
        %s572 = scalar_lea.vmem %s7, %s571
      $region56: #{incre_dino_forward.6} parent=27 // pred_fallthru
        _
      // Predicated region
      $region57: #{incre_dino_forward.6} parent=27 // pred_check
        %p573 = pneg %p263
      $region58: #{incre_dino_forward.6} parent=27 // pred_check_branch
        %575 = sbr.rel (%p573) target = $region60
      $region59: #{incre_dino_forward.6} parent=27 // pred_region
        %p576 = scmp.lt.s32.totalorder %s31, 11
        %s577 = scalar_select %p576, %s31, 11
        %s578 = scalar_lea.vmem %s8, %s577
      $region60: #{incre_dino_forward.6} parent=27 // pred_fallthru
        _
      // Predicated region
      $region61: #{incre_dino_forward.6} parent=27 // pred_check
        %p579 = pneg %p289
      $region62: #{incre_dino_forward.6} parent=27 // pred_check_branch
        %581 = sbr.rel (%p579) target = $region64
      $region63: #{incre_dino_forward.6} parent=27 // pred_region
        %p582 = scmp.lt.s32.totalorder %s31, 11
        %s583 = scalar_select %p582, %s31, 11
        %s584 = scalar_lea.vmem %s9, %s583
      $region64: #{incre_dino_forward.6} parent=27 // pred_fallthru
        _
      // Predicated region
      $region65: #{incre_dino_forward.6} parent=27 // pred_check
        %p585 = pneg %p315
      $region66: #{incre_dino_forward.6} parent=27 // pred_check_branch
        %587 = sbr.rel (%p585) target = $region68
      $region67: #{incre_dino_forward.6} parent=27 // pred_region
        %p588 = scmp.lt.s32.totalorder %s31, 11
        %s589 = scalar_select %p588, %s31, 11
        %s590 = smul.addr %s589, 4
        %s591 = smul.addr %s590, 8
        %s592 = scalar_lea.vmem %s10, %s591
      $region68: #{incre_dino_forward.6} parent=27 // pred_fallthru
        _
      // Predicated region
      $region69: #{incre_dino_forward.6} parent=27 // pred_check
        %p593 = pneg %p341
      $region70: #{incre_dino_forward.6} parent=27 // pred_check_branch
        %595 = sbr.rel (%p593) target = $region72
      $region71: #{incre_dino_forward.6} parent=27 // pred_region
        %p596 = scmp.lt.s32.totalorder %s31, 11
        %s597 = scalar_select %p596, %s31, 11
        %s598 = scalar_lea.vmem %s11, %s597
      $region72: #{incre_dino_forward.6} parent=27 // pred_fallthru
        _
      // Predicated region
      $region73: #{incre_dino_forward.6} parent=27 // pred_check
        %p599 = pneg %p367
      $region74: #{incre_dino_forward.6} parent=27 // pred_check_branch
        %601 = sbr.rel (%p599) target = $region76
      $region75: #{incre_dino_forward.6} parent=27 // pred_region
        %p602 = scmp.lt.s32.totalorder %s31, 11
        %s603 = scalar_select %p602, %s31, 11
        %s604 = smul.addr %s603, 16
        %s605 = smul.addr %s604, 8
        %s606 = scalar_lea.vmem %s12, %s605
      $region76: #{incre_dino_forward.6} parent=27 // pred_fallthru
        _
      // Predicated region
      $region77: #{incre_dino_forward.6} parent=27 // pred_check
        %p607 = pneg %p393
      $region78: #{incre_dino_forward.6} parent=27 // pred_check_branch
        %609 = sbr.rel (%p607) target = $region80
      $region79: #{incre_dino_forward.6} parent=27 // pred_region
        %p610 = scmp.lt.s32.totalorder %s31, 11
        %s611 = scalar_select %p610, %s31, 11
        %s612 = scalar_lea.vmem %s13, %s611
      $region80: #{incre_dino_forward.6} parent=27 // pred_fallthru
        _
      // Predicated region
      $region81: #{incre_dino_forward.6} parent=27 // pred_check
        %p613 = pneg %p419
      $region82: #{incre_dino_forward.6} parent=27 // pred_check_branch
        %615 = sbr.rel (%p613) target = $region84
      $region83: #{incre_dino_forward.6} parent=27 // pred_region
        %p616 = scmp.lt.s32.totalorder %s31, 11
        %s617 = scalar_select %p616, %s31, 11
        %s618 = scalar_lea.vmem %s14, %s617
      $region84: #{incre_dino_forward.6} parent=27 // pred_fallthru
        _
    $region28: #{incre_dino_forward.6} parent=5 // pred_fallthru
      _
    %p619 = scmp.le.s32.totalorder 1, %s23
    %p620 = scmp.lt.s32.totalorder %s23, 13
    %p621 = pnand %p619, %p620
    %p622 = pneg %p621
    // Predicated region
    $region85: #{incre_dino_forward.6} parent=5 // pred_check
      _
    $region86: #{incre_dino_forward.6} parent=5 // pred_check_branch
      %624 = sbr.rel (%p621) target = $region88
    $region87: #{incre_dino_forward.6} parent=5 // pred_region
      %s625 = ssub.s32 %s23, 1
      %p626 = scmp.lt.s32.totalorder %s32, 0
      %s627 = scalar_select %p626, %s32, 0
      %s628 = smul.addr %s627, 8
      %s629 = scalar_lea.vmem %s0, %s628
      %p630 = pneg %p61
      %p631 = pneg %p58
      %p632 = scmp.lt.s32.totalorder %s33, 11
      %s633 = scalar_select %p632, %s33, 11
      %s634 = scalar_lea.vmem %s1, %s633
      %p635 = pneg %p87
      %p636 = pneg %p84
      %p637 = scmp.lt.s32.totalorder %s33, 11
      %s638 = scalar_select %p637, %s33, 11
      %s639 = scalar_lea.vmem %s2, %s638
      %p640 = pneg %p113
      %p641 = pneg %p110
      %p642 = scmp.lt.s32.totalorder %s33, 11
      %s643 = scalar_select %p642, %s33, 11
      %s644 = smul.addr %s643, 4
      %s645 = smul.addr %s644, 8
      %s646 = scalar_lea.vmem %s3, %s645
      %p647 = pneg %p139
      %p648 = pneg %p136
      %p649 = scmp.lt.s32.totalorder %s33, 11
      %s650 = scalar_select %p649, %s33, 11
      %s651 = scalar_lea.vmem %s4, %s650
      %p652 = pneg %p165
      %p653 = pneg %p162
      %p654 = scmp.lt.s32.totalorder %s33, 11
      %s655 = scalar_select %p654, %s33, 11
      %s656 = smul.addr %s655, 4
      %s657 = smul.addr %s656, 8
      %s658 = scalar_lea.vmem %s5, %s657
      %p659 = pneg %p191
      %p660 = pneg %p188
      %p661 = scmp.lt.s32.totalorder %s33, 11
      %s662 = scalar_select %p661, %s33, 11
      %s663 = scalar_lea.vmem %s6, %s662
      %p664 = pneg %p217
      %p665 = pneg %p214
      %p666 = scmp.lt.s32.totalorder %s33, 11
      %s667 = scalar_select %p666, %s33, 11
      %s668 = scalar_lea.vmem %s7, %s667
      %p669 = pneg %p243
      %p670 = pneg %p240
      %p671 = scmp.lt.s32.totalorder %s33, 11
      %s672 = scalar_select %p671, %s33, 11
      %s673 = scalar_lea.vmem %s8, %s672
      %p674 = pneg %p269
      %p675 = pneg %p266
      %p676 = scmp.lt.s32.totalorder %s33, 11
      %s677 = scalar_select %p676, %s33, 11
      %s678 = scalar_lea.vmem %s9, %s677
      %p679 = pneg %p295
      %p680 = pneg %p292
      %p681 = scmp.lt.s32.totalorder %s33, 11
      %s682 = scalar_select %p681, %s33, 11
      %s683 = smul.addr %s682, 4
      %s684 = smul.addr %s683, 8
      %s685 = scalar_lea.vmem %s10, %s684
      %p686 = pneg %p321
      %p687 = pneg %p318
      %p688 = scmp.lt.s32.totalorder %s33, 11
      %s689 = scalar_select %p688, %s33, 11
      %s690 = scalar_lea.vmem %s11, %s689
      %p691 = pneg %p347
      %p692 = pneg %p344
      %p693 = scmp.lt.s32.totalorder %s33, 11
      %s694 = scalar_select %p693, %s33, 11
      %s695 = smul.addr %s694, 16
      %s696 = smul.addr %s695, 8
      %s697 = scalar_lea.vmem %s12, %s696
      %p698 = pneg %p373
      %p699 = pneg %p370
      %p700 = scmp.lt.s32.totalorder %s33, 11
      %s701 = scalar_select %p700, %s33, 11
      %s702 = scalar_lea.vmem %s13, %s701
      %p703 = pneg %p399
      %p704 = pneg %p396
      %p705 = scmp.lt.s32.totalorder %s33, 11
      %s706 = scalar_select %p705, %s33, 11
      %s707 = scalar_lea.vmem %s14, %s706
      %p708 = pneg %p425
      %p709 = pneg %p422
      %p710 = pneg %p446
      %p711 = pneg %p443
      %p712 = pneg %p467
      %p713 = pneg %p464
      %p714 = pneg %p495
      %p715 = pneg %p492
      %p716 = scmp.lt.s32.totalorder %s32, 0
      %s717 = scalar_select %p716, %s32, 0
      %p718 = scmp.lt.s32.totalorder %s33, 11
      %s719 = scalar_select %p718, %s33, 11
      %s720 = smul.addr %s717, 12
      %s721 = sadd.s32 %s719, %s720
      %s722 = smul.addr %s721, 8
      %s723 = scalar_lea.vmem %s17, %s722
      %p724 = scmp.lt.s32.totalorder %s32, 0
      %s725 = scalar_select %p724, %s32, 0
      %s726 = smul.addr %s725, 8
      %s727 = scalar_lea.vmem %s0, %s726
      %p728 = scmp.lt.s32.totalorder %s33, 11
      %s729 = scalar_select %p728, %s33, 11
      %s730 = scalar_lea.vmem %s1, %s729
      %p731 = scmp.lt.s32.totalorder %s33, 11
      %s732 = scalar_select %p731, %s33, 11
      %s733 = scalar_lea.vmem %s2, %s732
      %p734 = scmp.lt.s32.totalorder %s33, 11
      %s735 = scalar_select %p734, %s33, 11
      %s736 = smul.addr %s735, 4
      %s737 = smul.addr %s736, 8
      %s738 = scalar_lea.vmem %s3, %s737
      %p739 = scmp.lt.s32.totalorder %s33, 11
      %s740 = scalar_select %p739, %s33, 11
      %s741 = scalar_lea.vmem %s4, %s740
      %p742 = scmp.lt.s32.totalorder %s33, 11
      %s743 = scalar_select %p742, %s33, 11
      %s744 = smul.addr %s743, 4
      %s745 = smul.addr %s744, 8
      %s746 = scalar_lea.vmem %s5, %s745
      %p747 = scmp.lt.s32.totalorder %s33, 11
      %s748 = scalar_select %p747, %s33, 11
      %s749 = scalar_lea.vmem %s6, %s748
      %p750 = scmp.lt.s32.totalorder %s33, 11
      %s751 = scalar_select %p750, %s33, 11
      %s752 = scalar_lea.vmem %s7, %s751
      %p753 = scmp.lt.s32.totalorder %s33, 11
      %s754 = scalar_select %p753, %s33, 11
      %s755 = scalar_lea.vmem %s8, %s754
      %p756 = scmp.lt.s32.totalorder %s33, 11
      %s757 = scalar_select %p756, %s33, 11
      %s758 = scalar_lea.vmem %s9, %s757
      %p759 = scmp.lt.s32.totalorder %s33, 11
      %s760 = scalar_select %p759, %s33, 11
      %s761 = smul.addr %s760, 4
      %s762 = smul.addr %s761, 8
      %s763 = scalar_lea.vmem %s10, %s762
      %p764 = scmp.lt.s32.totalorder %s33, 11
      %s765 = scalar_select %p764, %s33, 11
      %s766 = scalar_lea.vmem %s11, %s765
      %p767 = scmp.lt.s32.totalorder %s33, 11
      %s768 = scalar_select %p767, %s33, 11
      %s769 = smul.addr %s768, 16
      %s770 = smul.addr %s769, 8
      %s771 = scalar_lea.vmem %s12, %s770
      %p772 = scmp.lt.s32.totalorder %s33, 11
      %s773 = scalar_select %p772, %s33, 11
      %s774 = scalar_lea.vmem %s13, %s773
      %p775 = scmp.lt.s32.totalorder %s33, 11
      %s776 = scalar_select %p775, %s33, 11
      %s777 = scalar_lea.vmem %s14, %s776
      %p778 = scmp.lt.s32.totalorder %s32, 0
      %s779 = scalar_select %p778, %s32, 0
      %p780 = scmp.lt.s32.totalorder %s33, 11
      %s781 = scalar_select %p780, %s33, 11
      %s782 = smul.addr %s779, 12
      %s783 = sadd.s32 %s781, %s782
      %s784 = smul.addr %s783, 8
      %s785 = scalar_lea.vmem %s17, %s784
      %p786 = scmp.eq.s32.totalorder %s33, 0
      // Predicated region
      $region89: #{incre_dino_forward.6} parent=87 // pred_check
        %p787 = pneg %p786
      $region90: #{incre_dino_forward.6} parent=87 // pred_check_branch
        %789 = sbr.rel (%p787) target = $region92
      $region91: #{incre_dino_forward.6} parent=87 // pred_region
        %v790 = vld [vmem:[%s727] sm:$0x7f]
        %vm791 = vcmask 260096
        %792 = vst.msk [vmem:[#allocation2] sm:$0x7f] %vm791, %v790
      $region92: #{incre_dino_forward.6} parent=87 // pred_fallthru
        _
      %v793 = vld [vmem:[#allocation2] sm:$0x7f]
      %v794 = vld [vmem:[%s730] sm:$0x1]
      %v795 = vld [vmem:[%s733] sm:$0x1]
      %vm796 = vcmask 260096
      %v797 = vsel %vm796, %v793, 0.0
      %798 = vadd.xlane.f32.xlu0 %v797
      %v799 = vpop.xlane.xlu0 %798
      %v800 = vrcp.pop 32.0
      %v801 = vmul.f32 %v799, %v800
      %v802 = vsub.f32 %v793, %v801
      %v803 = vmul.f32 %v802, %v802
      %v804 = vsel %vm796, %v803, 0.0
      %805 = vadd.xlane.f32.xlu0 %v804
      %v806 = vpop.xlane.xlu0 %805
      %v807 = vmul.f32 %v806, %v800
      %v808 = vadd.f32 %v807, 1e-06
      %v809 = vrsqrt.pop %v808
      %v810 = vmul.f32 %v802, %v809
      %v812 = vlaneseq
      %v813 = vshrl.u32 %v812, 7
      %v814 = vsub.s32 0, %v813
      %v815 = vrot.slane %v794, %v814
      %v817 = vmul.f32 %v810, %v815
      %v819 = vlaneseq
      %v820 = vshrl.u32 %v819, 7
      %v821 = vsub.s32 0, %v820
      %v822 = vrot.slane %v795, %v821
      %v824 = vadd.f32 %v817, %v822
      %v825 = vld [vmem:[%s738] sm:$0xff]
      %v826 = vld [vmem:[%s738 + $0x8] sm:$0xff]
      %v827 = vld [vmem:[%s738 + $0x10] sm:$0xff]
      %v828 = vld [vmem:[%s738 + $0x18] sm:$0xff]
      %v829 = vld [vmem:[%s741] sm:$0x1]
      %v831 = vlaneseq
      %v832 = vshrl.u32 %v831, 7
      %v833 = vsub.s32 0, %v832
      %v834 = vrot.slane %v829, %v833
      %vm836 = vcmask 261120
      %v838 = vsel %vm836, %v824, 0
      %840 = vmatprep.subr.mxu0 0.0
      %841 = vmatpush1.msra.mxu0 %v825
      %842 = vmatprep.subr.mxu0 0.0
      %843 = vmatpush1.msra.mxu0 %v826
      %844 = vmatprep.subr.mxu0 0.0
      %845 = vmatpush1.msra.mxu0 %v827
      %846 = vmatprep.subr.mxu0 0.0
      %847 = vmatpush1.msra.mxu0 %v828
      %848 = vmatprep.subr.mxu0 0.0
      %849 = vmatpush1.msra.mxu0 0.0
      %850 = vmatprep.subr.mxu0 0.0
      %851 = vmatpush1.msra.mxu0 0.0
      %852 = vmatprep.subr.mxu0 0.0
      %853 = vmatpush1.msra.mxu0 0.0
      %854 = vmatprep.subr.mxu0 0.0
      %855 = vmatpush1.msra.mxu0 0.0
      %856 = vmatprep.subr.mxu0 0.0
      %857 = vmatpush1.msra.mxu0 0.0
      %858 = vmatprep.subr.mxu0 0.0
      %859 = vmatpush1.msra.mxu0 0.0
      %860 = vmatprep.subr.mxu0 0.0
      %861 = vmatpush1.msra.mxu0 0.0
      %862 = vmatprep.subr.mxu0 0.0
      %863 = vmatpush1.msra.mxu0 0.0
      %864 = vmatprep.subr.mxu0 0.0
      %865 = vmatpush1.msra.mxu0 0.0
      %866 = vmatprep.subr.mxu0 0.0
      %867 = vmatpush1.msra.mxu0 0.0
      %868 = vmatprep.subr.mxu0 0.0
      %869 = vmatpush1.msra.mxu0 0.0
      %870 = vmatprep.subr.mxu0 0.0
      %871 = vmatpush1.msra.mxu0 0.0
      %872 = vmatprep.subr.mxu0 0.0
      %873 = vmatpush1.msra.mxu0 0.0
      %874 = vmatprep.subr.mxu0 0.0
      %875 = vmatpush1.msra.mxu0 0.0
      %876 = vmatprep.subr.mxu0 0.0
      %877 = vmatpush1.msra.mxu0 0.0
      %878 = vmatprep.subr.mxu0 0.0
      %879 = vmatpush1.msra.mxu0 0.0
      %880 = vmatprep.subr.mxu0 0.0
      %881 = vmatpush1.msra.mxu0 0.0
      %882 = vmatprep.subr.mxu0 0.0
      %883 = vmatpush1.msra.mxu0 0.0
      %884 = vmatprep.subr.mxu0 0.0
      %885 = vmatpush1.msra.mxu0 0.0
      %886 = vmatprep.subr.mxu0 0.0
      %887 = vmatpush1.msra.mxu0 0.0
      %888 = vmatprep.subr.mxu0 0.0
      %889 = vmatpush1.msra.mxu0 0.0
      %890 = vmatprep.subr.mxu0 0.0
      %891 = vmatpush1.msra.mxu0 0.0
      %892 = vmatprep.subr.mxu0 0.0
      %893 = vmatpush1.msra.mxu0 0.0
      %894 = vmatprep.subr.mxu0 0.0
      %895 = vmatpush1.msra.mxu0 0.0
      %896 = vmatprep.subr.mxu0 0.0
      %897 = vmatpush1.msra.mxu0 0.0
      %898 = vmatprep.subr.mxu0 0.0
      %899 = vmatpush1.msra.mxu0 0.0
      %900 = vmatprep.subr.mxu0 0.0
      %901 = vmatpush1.msra.mxu0 0.0
      %902 = vmatprep.subr.mxu0 0.0
      %903 = vmatpush1.msra.mxu0 0.0
      %904 = vmatprep.mubr.f32.mxu0 0.0
      %905 = vmatmul.mubr.f32.gmra.mrb[0].mxu0 %v838
      %v906 = vpop.f32.mrb[0].mxu0
      %v907 = vadd.f32 %v834, %v906
      %v908 = vpop.f32.mrb[0].mxu0
      %909 = vdwg.mxu0
      %v910 = vld [vmem:[%s746] sm:$0xff]
      %v911 = vld [vmem:[%s746 + $0x8] sm:$0xff]
      %v912 = vld [vmem:[%s746 + $0x10] sm:$0xff]
      %v913 = vld [vmem:[%s746 + $0x18] sm:$0xff]
      %915 = vrot.lane.b32.xlu0 %v907, 96
      %v916 = vpop.permute.xlu0 %915
      %vm917 = vcmask 64512
      %v918 = vsel %vm917, %v907, 0
      %v920 = vsel %vm917, %v916, 0
      %922 = vmatprep.subr.mxu0 0.0
      %923 = vmatpush1.xpose.msra.mxu0 %v920
      %924 = vmatprep.subr.mxu0 0.0
      %925 = vmatpush1.xpose.msra.mxu0 0.0
      %926 = vmatprep.subr.mxu0 0.0
      %927 = vmatpush1.xpose.msra.mxu0 0.0
      %928 = vmatprep.subr.mxu0 0.0
      %929 = vmatpush1.xpose.msra.mxu0 0.0
      %930 = vmatprep.subr.mxu0 0.0
      %931 = vmatpush1.xpose.msra.mxu0 0.0
      %932 = vmatprep.subr.mxu0 0.0
      %933 = vmatpush1.xpose.msra.mxu0 0.0
      %934 = vmatprep.subr.mxu0 0.0
      %935 = vmatpush1.xpose.msra.mxu0 0.0
      %936 = vmatprep.subr.mxu0 0.0
      %937 = vmatpush1.xpose.msra.mxu0 0.0
      %938 = vmatprep.subr.mxu0 0.0
      %939 = vmatpush1.xpose.msra.mxu0 0.0
      %940 = vmatprep.subr.mxu0 0.0
      %941 = vmatpush1.xpose.msra.mxu0 0.0
      %942 = vmatprep.subr.mxu0 0.0
      %943 = vmatpush1.xpose.msra.mxu0 0.0
      %944 = vmatprep.subr.mxu0 0.0
      %945 = vmatpush1.xpose.msra.mxu0 0.0
      %946 = vmatprep.subr.mxu0 0.0
      %947 = vmatpush1.xpose.msra.mxu0 0.0
      %948 = vmatprep.subr.mxu0 0.0
      %949 = vmatpush1.xpose.msra.mxu0 0.0
      %950 = vmatprep.subr.mxu0 0.0
      %951 = vmatpush1.xpose.msra.mxu0 0.0
      %952 = vmatprep.subr.mxu0 0.0
      %953 = vmatpush1.xpose.msra.mxu0 0.0
      %954 = vmatprep.subr.mxu0 0.0
      %955 = vmatpush1.xpose.msra.mxu0 0.0
      %956 = vmatprep.subr.mxu0 0.0
      %957 = vmatpush1.xpose.msra.mxu0 0.0
      %958 = vmatprep.subr.mxu0 0.0
      %959 = vmatpush1.xpose.msra.mxu0 0.0
      %960 = vmatprep.subr.mxu0 0.0
      %961 = vmatpush1.xpose.msra.mxu0 0.0
      %962 = vmatprep.subr.mxu0 0.0
      %963 = vmatpush1.xpose.msra.mxu0 0.0
      %964 = vmatprep.subr.mxu0 0.0
      %965 = vmatpush1.xpose.msra.mxu0 0.0
      %966 = vmatprep.subr.mxu0 0.0
      %967 = vmatpush1.xpose.msra.mxu0 0.0
      %968 = vmatprep.subr.mxu0 0.0
      %969 = vmatpush1.xpose.msra.mxu0 0.0
      %970 = vmatprep.subr.mxu0 0.0
      %971 = vmatpush1.xpose.msra.mxu0 0.0
      %972 = vmatprep.subr.mxu0 0.0
      %973 = vmatpush1.xpose.msra.mxu0 0.0
      %974 = vmatprep.subr.mxu0 0.0
      %975 = vmatpush1.xpose.msra.mxu0 0.0
      %976 = vmatprep.subr.mxu0 0.0
      %977 = vmatpush1.xpose.msra.mxu0 0.0
      %978 = vmatprep.subr.mxu0 0.0
      %979 = vmatpush1.xpose.msra.mxu0 0.0
      %980 = vmatprep.subr.mxu0 0.0
      %981 = vmatpush1.xpose.msra.mxu0 0.0
      %982 = vmatprep.subr.mxu0 0.0
      %983 = vmatpush1.xpose.msra.mxu0 0.0
      %984 = vmatprep.subr.mxu0 0.0
      %985 = vmatpush1.xpose.msra.mxu0 0.0
      %986 = vmatprep.mubr.f32.mxu0 0.0
      %987 = vmatmul.mubr.f32.gmra.mrb[0].mxu0 %v918
      %v988 = vpop.f32.mrb[0].mxu0
      %v989 = vadd.f32 0.0, %v988
      %v990 = vpop.f32.mrb[0].mxu0
      %991 = vdwg.mxu0
      %v992 = vmul.f32 %v989, 0.35355338
      %vm993 = vcmask 55296
      %v994 = vsel %vm993, %v992, -inf
      %995 = vmax.xlane.f32.xlu0 %v994
      %v996 = vpop.xlane.xlu0 %995
      %v997 = vsub.f32 %v992, %v996
      %v998 = vmul.f32 %v997, 1.442695
      %v999 = vpow.pop %v998
      %v1000 = vsel %vm993, %v999, 0.0
      %1001 = vadd.xlane.f32.xlu0 %v1000
      %v1002 = vpop.xlane.xlu0 %1001
      %v1003 = vrcp.pop %v1002
      %v1004 = vmul.f32 %v999, %v1003
      %1005 = vrot.lane.b32.xlu0 %v907, 64
      %v1006 = vpop.permute.xlu0 %1005
      %vm1007 = vcmask 56320
      %v1009 = vsel %vm1007, %v1004, 0
      %vm1011 = vcmask 1046528
      %v1012 = vsel %vm1011, %v1006, 0
      %1014 = vmatprep.subr.mxu0 0.0
      %1015 = vmatpush1.msra.mxu0 %v1012
      %1016 = vmatprep.subr.mxu0 0.0
      %1017 = vmatpush1.msra.mxu0 0.0
      %1018 = vmatprep.subr.mxu0 0.0
      %1019 = vmatpush1.msra.mxu0 0.0
      %1020 = vmatprep.subr.mxu0 0.0
      %1021 = vmatpush1.msra.mxu0 0.0
      %1022 = vmatprep.subr.mxu0 0.0
      %1023 = vmatpush1.msra.mxu0 0.0
      %1024 = vmatprep.subr.mxu0 0.0
      %1025 = vmatpush1.msra.mxu0 0.0
      %1026 = vmatprep.subr.mxu0 0.0
      %1027 = vmatpush1.msra.mxu0 0.0
      %1028 = vmatprep.subr.mxu0 0.0
      %1029 = vmatpush1.msra.mxu0 0.0
      %1030 = vmatprep.subr.mxu0 0.0
      %1031 = vmatpush1.msra.mxu0 0.0
      %1032 = vmatprep.subr.mxu0 0.0
      %1033 = vmatpush1.msra.mxu0 0.0
      %1034 = vmatprep.subr.mxu0 0.0
      %1035 = vmatpush1.msra.mxu0 0.0
      %1036 = vmatprep.subr.mxu0 0.0
      %1037 = vmatpush1.msra.mxu0 0.0
      %1038 = vmatprep.subr.mxu0 0.0
      %1039 = vmatpush1.msra.mxu0 0.0
      %1040 = vmatprep.subr.mxu0 0.0
      %1041 = vmatpush1.msra.mxu0 0.0
      %1042 = vmatprep.subr.mxu0 0.0
      %1043 = vmatpush1.msra.mxu0 0.0
      %1044 = vmatprep.subr.mxu0 0.0
      %1045 = vmatpush1.msra.mxu0 0.0
      %1046 = vmatprep.subr.mxu0 0.0
      %1047 = vmatpush1.msra.mxu0 0.0
      %1048 = vmatprep.subr.mxu0 0.0
      %1049 = vmatpush1.msra.mxu0 0.0
      %1050 = vmatprep.subr.mxu0 0.0
      %1051 = vmatpush1.msra.mxu0 0.0
      %1052 = vmatprep.subr.mxu0 0.0
      %1053 = vmatpush1.msra.mxu0 0.0
      %1054 = vmatprep.subr.mxu0 0.0
      %1055 = vmatpush1.msra.mxu0 0.0
      %1056 = vmatprep.subr.mxu0 0.0
      %1057 = vmatpush1.msra.mxu0 0.0
      %1058 = vmatprep.subr.mxu0 0.0
      %1059 = vmatpush1.msra.mxu0 0.0
      %1060 = vmatprep.subr.mxu0 0.0
      %1061 = vmatpush1.msra.mxu0 0.0
      %1062 = vmatprep.subr.mxu0 0.0
      %1063 = vmatpush1.msra.mxu0 0.0
      %1064 = vmatprep.subr.mxu0 0.0
      %1065 = vmatpush1.msra.mxu0 0.0
      %1066 = vmatprep.subr.mxu0 0.0
      %1067 = vmatpush1.msra.mxu0 0.0
      %1068 = vmatprep.subr.mxu0 0.0
      %1069 = vmatpush1.msra.mxu0 0.0
      %1070 = vmatprep.subr.mxu0 0.0
      %1071 = vmatpush1.msra.mxu0 0.0
      %1072 = vmatprep.subr.mxu0 0.0
      %1073 = vmatpush1.msra.mxu0 0.0
      %1074 = vmatprep.subr.mxu0 0.0
      %1075 = vmatpush1.msra.mxu0 0.0
      %1076 = vmatprep.subr.mxu0 0.0
      %1077 = vmatpush1.msra.mxu0 0.0
      %1078 = vmatprep.mubr.f32.mxu0 0.0
      %1079 = vmatmul.mubr.f32.gmra.mrb[0].mxu0 %v1009
      %v1080 = vpop.f32.mrb[0].mxu0
      %v1081 = vadd.f32 0.0, %v1080
      %v1082 = vpop.f32.mrb[0].mxu0
      %1083 = vdwg.mxu0
      %1084 = vrot.lane.b32.xlu0 %v907, 120
      %v1085 = vpop.permute.xlu0 %1084
      %1086 = vrot.lane.b32.xlu0 %v907, 88
      %v1087 = vpop.permute.xlu0 %1086
      %v1088 = vsel %vm917, %v1085, 0
      %v1090 = vsel %vm917, %v1087, 0
      %1092 = vmatprep.subr.mxu0 0.0
      %1093 = vmatpush1.xpose.msra.mxu0 %v1090
      %1094 = vmatprep.subr.mxu0 0.0
      %1095 = vmatpush1.xpose.msra.mxu0 0.0
      %1096 = vmatprep.subr.mxu0 0.0
      %1097 = vmatpush1.xpose.msra.mxu0 0.0
      %1098 = vmatprep.subr.mxu0 0.0
      %1099 = vmatpush1.xpose.msra.mxu0 0.0
      %1100 = vmatprep.subr.mxu0 0.0
      %1101 = vmatpush1.xpose.msra.mxu0 0.0
      %1102 = vmatprep.subr.mxu0 0.0
      %1103 = vmatpush1.xpose.msra.mxu0 0.0
      %1104 = vmatprep.subr.mxu0 0.0
      %1105 = vmatpush1.xpose.msra.mxu0 0.0
      %1106 = vmatprep.subr.mxu0 0.0
      %1107 = vmatpush1.xpose.msra.mxu0 0.0
      %1108 = vmatprep.subr.mxu0 0.0
      %1109 = vmatpush1.xpose.msra.mxu0 0.0
      %1110 = vmatprep.subr.mxu0 0.0
      %1111 = vmatpush1.xpose.msra.mxu0 0.0
      %1112 = vmatprep.subr.mxu0 0.0
      %1113 = vmatpush1.xpose.msra.mxu0 0.0
      %1114 = vmatprep.subr.mxu0 0.0
      %1115 = vmatpush1.xpose.msra.mxu0 0.0
      %1116 = vmatprep.subr.mxu0 0.0
      %1117 = vmatpush1.xpose.msra.mxu0 0.0
      %1118 = vmatprep.subr.mxu0 0.0
      %1119 = vmatpush1.xpose.msra.mxu0 0.0
      %1120 = vmatprep.subr.mxu0 0.0
      %1121 = vmatpush1.xpose.msra.mxu0 0.0
      %1122 = vmatprep.subr.mxu0 0.0
      %1123 = vmatpush1.xpose.msra.mxu0 0.0
      %1124 = vmatprep.subr.mxu0 0.0
      %1125 = vmatpush1.xpose.msra.mxu0 0.0
      %1126 = vmatprep.subr.mxu0 0.0
      %1127 = vmatpush1.xpose.msra.mxu0 0.0
      %1128 = vmatprep.subr.mxu0 0.0
      %1129 = vmatpush1.xpose.msra.mxu0 0.0
      %1130 = vmatprep.subr.mxu0 0.0
      %1131 = vmatpush1.xpose.msra.mxu0 0.0
      %1132 = vmatprep.subr.mxu0 0.0
      %1133 = vmatpush1.xpose.msra.mxu0 0.0
      %1134 = vmatprep.subr.mxu0 0.0
      %1135 = vmatpush1.xpose.msra.mxu0 0.0
      %1136 = vmatprep.subr.mxu0 0.0
      %1137 = vmatpush1.xpose.msra.mxu0 0.0
      %1138 = vmatprep.subr.mxu0 0.0
      %1139 = vmatpush1.xpose.msra.mxu0 0.0
      %1140 = vmatprep.subr.mxu0 0.0
      %1141 = vmatpush1.xpose.msra.mxu0 0.0
      %1142 = vmatprep.subr.mxu0 0.0
      %1143 = vmatpush1.xpose.msra.mxu0 0.0
      %1144 = vmatprep.subr.mxu0 0.0
      %1145 = vmatpush1.xpose.msra.mxu0 0.0
      %1146 = vmatprep.subr.mxu0 0.0
      %1147 = vmatpush1.xpose.msra.mxu0 0.0
      %1148 = vmatprep.subr.mxu0 0.0
      %1149 = vmatpush1.xpose.msra.mxu0 0.0
      %1150 = vmatprep.subr.mxu0 0.0
      %1151 = vmatpush1.xpose.msra.mxu0 0.0
      %1152 = vmatprep.subr.mxu0 0.0
      %1153 = vmatpush1.xpose.msra.mxu0 0.0
      %1154 = vmatprep.subr.mxu0 0.0
      %1155 = vmatpush1.xpose.msra.mxu0 0.0
      %1156 = vmatprep.mubr.f32.mxu0 0.0
      %1157 = vmatmul.mubr.f32.gmra.mrb[0].mxu0 %v1088
      %v1158 = vpop.f32.mrb[0].mxu0
      %v1159 = vadd.f32 0.0, %v1158
      %v1160 = vpop.f32.mrb[0].mxu0
      %1161 = vdwg.mxu0
      %v1162 = vmul.f32 %v1159, 0.35355338
      %v1163 = vsel %vm993, %v1162, -inf
      %1164 = vmax.xlane.f32.xlu0 %v1163
      %v1165 = vpop.xlane.xlu0 %1164
      %v1166 = vsub.f32 %v1162, %v1165
      %v1167 = vmul.f32 %v1166, 1.442695
      %v1168 = vpow.pop %v1167
      %v1169 = vsel %vm993, %v1168, 0.0
      %1170 = vadd.xlane.f32.xlu0 %v1169
      %v1171 = vpop.xlane.xlu0 %1170
      %v1172 = vrcp.pop %v1171
      %v1173 = vmul.f32 %v1168, %v1172
      %1174 = vrot.lane.b32.xlu0 %v907, 56
      %v1175 = vpop.permute.xlu0 %1174
      %v1177 = vsel %vm1007, %v1173, 0
      %v1179 = vsel %vm1011, %v1175, 0
      %1181 = vmatprep.subr.mxu0 0.0
      %1182 = vmatpush1.msra.mxu0 %v1179
      %1183 = vmatprep.subr.mxu0 0.0
      %1184 = vmatpush1.msra.mxu0 0.0
      %1185 = vmatprep.subr.mxu0 0.0
      %1186 = vmatpush1.msra.mxu0 0.0
      %1187 = vmatprep.subr.mxu0 0.0
      %1188 = vmatpush1.msra.mxu0 0.0
      %1189 = vmatprep.subr.mxu0 0.0
      %1190 = vmatpush1.msra.mxu0 0.0
      %1191 = vmatprep.subr.mxu0 0.0
      %1192 = vmatpush1.msra.mxu0 0.0
      %1193 = vmatprep.subr.mxu0 0.0
      %1194 = vmatpush1.msra.mxu0 0.0
      %1195 = vmatprep.subr.mxu0 0.0
      %1196 = vmatpush1.msra.mxu0 0.0
      %1197 = vmatprep.subr.mxu0 0.0
      %1198 = vmatpush1.msra.mxu0 0.0
      %1199 = vmatprep.subr.mxu0 0.0
      %1200 = vmatpush1.msra.mxu0 0.0
      %1201 = vmatprep.subr.mxu0 0.0
      %1202 = vmatpush1.msra.mxu0 0.0
      %1203 = vmatprep.subr.mxu0 0.0
      %1204 = vmatpush1.msra.mxu0 0.0
      %1205 = vmatprep.subr.mxu0 0.0
      %1206 = vmatpush1.msra.mxu0 0.0
      %1207 = vmatprep.subr.mxu0 0.0
      %1208 = vmatpush1.msra.mxu0 0.0
      %1209 = vmatprep.subr.mxu0 0.0
      %1210 = vmatpush1.msra.mxu0 0.0
      %1211 = vmatprep.subr.mxu0 0.0
      %1212 = vmatpush1.msra.mxu0 0.0
      %1213 = vmatprep.subr.mxu0 0.0
      %1214 = vmatpush1.msra.mxu0 0.0
      %1215 = vmatprep.subr.mxu0 0.0
      %1216 = vmatpush1.msra.mxu0 0.0
      %1217 = vmatprep.subr.mxu0 0.0
      %1218 = vmatpush1.msra.mxu0 0.0
      %1219 = vmatprep.subr.mxu0 0.0
      %1220 = vmatpush1.msra.mxu0 0.0
      %1221 = vmatprep.subr.mxu0 0.0
      %1222 = vmatpush1.msra.mxu0 0.0
      %1223 = vmatprep.subr.mxu0 0.0
      %1224 = vmatpush1.msra.mxu0 0.0
      %1225 = vmatprep.subr.mxu0 0.0
      %1226 = vmatpush1.msra.mxu0 0.0
      %1227 = vmatprep.subr.mxu0 0.0
      %1228 = vmatpush1.msra.mxu0 0.0
      %1229 = vmatprep.subr.mxu0 0.0
      %1230 = vmatpush1.msra.mxu0 0.0
      %1231 = vmatprep.subr.mxu0 0.0
      %1232 = vmatpush1.msra.mxu0 0.0
      %1233 = vmatprep.subr.mxu0 0.0
      %1234 = vmatpush1.msra.mxu0 0.0
      %1235 = vmatprep.subr.mxu0 0.0
      %1236 = vmatpush1.msra.mxu0 0.0
      %1237 = vmatprep.subr.mxu0 0.0
      %1238 = vmatpush1.msra.mxu0 0.0
      %1239 = vmatprep.subr.mxu0 0.0
      %1240 = vmatpush1.msra.mxu0 0.0
      %1241 = vmatprep.subr.mxu0 0.0
      %1242 = vmatpush1.msra.mxu0 0.0
      %1243 = vmatprep.subr.mxu0 0.0
      %1244 = vmatpush1.msra.mxu0 0.0
      %1245 = vmatprep.mubr.f32.mxu0 0.0
      %1246 = vmatmul.mubr.f32.gmra.mrb[0].mxu0 %v1177
      %v1247 = vpop.f32.mrb[0].mxu0
      %v1248 = vadd.f32 0.0, %v1247
      %v1249 = vpop.f32.mrb[0].mxu0
      %1250 = vdwg.mxu0
      %v1252 = vsel %vm917, %v1248, 0
      %1254 = vmatprep.subr.mxu0 0.0
      %1255 = vmatpush1.msra.mxu0 %v911
      %1256 = vmatprep.subr.mxu0 0.0
      %1257 = vmatpush1.msra.mxu0 0.0
      %1258 = vmatprep.subr.mxu0 0.0
      %1259 = vmatpush1.msra.mxu0 0.0
      %1260 = vmatprep.subr.mxu0 0.0
      %1261 = vmatpush1.msra.mxu0 0.0
      %1262 = vmatprep.subr.mxu0 0.0
      %1263 = vmatpush1.msra.mxu0 0.0
      %1264 = vmatprep.subr.mxu0 0.0
      %1265 = vmatpush1.msra.mxu0 0.0
      %1266 = vmatprep.subr.mxu0 0.0
      %1267 = vmatpush1.msra.mxu0 0.0
      %1268 = vmatprep.subr.mxu0 0.0
      %1269 = vmatpush1.msra.mxu0 0.0
      %1270 = vmatprep.subr.mxu0 0.0
      %1271 = vmatpush1.msra.mxu0 0.0
      %1272 = vmatprep.subr.mxu0 0.0
      %1273 = vmatpush1.msra.mxu0 0.0
      %1274 = vmatprep.subr.mxu0 0.0
      %1275 = vmatpush1.msra.mxu0 0.0
      %1276 = vmatprep.subr.mxu0 0.0
      %1277 = vmatpush1.msra.mxu0 0.0
      %1278 = vmatprep.subr.mxu0 0.0
      %1279 = vmatpush1.msra.mxu0 0.0
      %1280 = vmatprep.subr.mxu0 0.0
      %1281 = vmatpush1.msra.mxu0 0.0
      %1282 = vmatprep.subr.mxu0 0.0
      %1283 = vmatpush1.msra.mxu0 0.0
      %1284 = vmatprep.subr.mxu0 0.0
      %1285 = vmatpush1.msra.mxu0 0.0
      %1286 = vmatprep.subr.mxu0 0.0
      %1287 = vmatpush1.msra.mxu0 0.0
      %1288 = vmatprep.subr.mxu0 0.0
      %1289 = vmatpush1.msra.mxu0 0.0
      %1290 = vmatprep.subr.mxu0 0.0
      %1291 = vmatpush1.msra.mxu0 0.0
      %1292 = vmatprep.subr.mxu0 0.0
      %1293 = vmatpush1.msra.mxu0 0.0
      %1294 = vmatprep.subr.mxu0 0.0
      %1295 = vmatpush1.msra.mxu0 0.0
      %1296 = vmatprep.subr.mxu0 0.0
      %1297 = vmatpush1.msra.mxu0 0.0
      %1298 = vmatprep.subr.mxu0 0.0
      %1299 = vmatpush1.msra.mxu0 0.0
      %1300 = vmatprep.subr.mxu0 0.0
      %1301 = vmatpush1.msra.mxu0 0.0
      %1302 = vmatprep.subr.mxu0 0.0
      %1303 = vmatpush1.msra.mxu0 0.0
      %1304 = vmatprep.subr.mxu0 0.0
      %1305 = vmatpush1.msra.mxu0 0.0
      %1306 = vmatprep.subr.mxu0 0.0
      %1307 = vmatpush1.msra.mxu0 0.0
      %1308 = vmatprep.subr.mxu0 0.0
      %1309 = vmatpush1.msra.mxu0 0.0
      %1310 = vmatprep.subr.mxu0 0.0
      %1311 = vmatpush1.msra.mxu0 0.0
      %1312 = vmatprep.subr.mxu0 0.0
      %1313 = vmatpush1.msra.mxu0 0.0
      %1314 = vmatprep.subr.mxu0 0.0
      %1315 = vmatpush1.msra.mxu0 0.0
      %1316 = vmatprep.subr.mxu0 0.0
      %1317 = vmatpush1.msra.mxu0 0.0
      %1318 = vmatprep.mubr.f32.mxu0 0.0
      %1319 = vmatmul.mubr.f32.gmra.mrb[0].mxu0 %v1252
      %v1320 = vpop.f32.mrb[0].mxu0
      %v1321 = vadd.f32 0.0, %v1320
      %v1322 = vpop.f32.mrb[0].mxu0
      %1323 = vdwg.mxu0
      %v1325 = vsel %vm917, %v1081, 0
      %1327 = vmatprep.subr.mxu0 0.0
      %1328 = vmatpush1.msra.mxu0 %v910
      %1329 = vmatprep.subr.mxu0 0.0
      %1330 = vmatpush1.msra.mxu0 0.0
      %1331 = vmatprep.subr.mxu0 0.0
      %1332 = vmatpush1.msra.mxu0 0.0
      %1333 = vmatprep.subr.mxu0 0.0
      %1334 = vmatpush1.msra.mxu0 0.0
      %1335 = vmatprep.subr.mxu0 0.0
      %1336 = vmatpush1.msra.mxu0 0.0
      %1337 = vmatprep.subr.mxu0 0.0
      %1338 = vmatpush1.msra.mxu0 0.0
      %1339 = vmatprep.subr.mxu0 0.0
      %1340 = vmatpush1.msra.mxu0 0.0
      %1341 = vmatprep.subr.mxu0 0.0
      %1342 = vmatpush1.msra.mxu0 0.0
      %1343 = vmatprep.subr.mxu0 0.0
      %1344 = vmatpush1.msra.mxu0 0.0
      %1345 = vmatprep.subr.mxu0 0.0
      %1346 = vmatpush1.msra.mxu0 0.0
      %1347 = vmatprep.subr.mxu0 0.0
      %1348 = vmatpush1.msra.mxu0 0.0
      %1349 = vmatprep.subr.mxu0 0.0
      %1350 = vmatpush1.msra.mxu0 0.0
      %1351 = vmatprep.subr.mxu0 0.0
      %1352 = vmatpush1.msra.mxu0 0.0
      %1353 = vmatprep.subr.mxu0 0.0
      %1354 = vmatpush1.msra.mxu0 0.0
      %1355 = vmatprep.subr.mxu0 0.0
      %1356 = vmatpush1.msra.mxu0 0.0
      %1357 = vmatprep.subr.mxu0 0.0
      %1358 = vmatpush1.msra.mxu0 0.0
      %1359 = vmatprep.subr.mxu0 0.0
      %1360 = vmatpush1.msra.mxu0 0.0
      %1361 = vmatprep.subr.mxu0 0.0
      %1362 = vmatpush1.msra.mxu0 0.0
      %1363 = vmatprep.subr.mxu0 0.0
      %1364 = vmatpush1.msra.mxu0 0.0
      %1365 = vmatprep.subr.mxu0 0.0
      %1366 = vmatpush1.msra.mxu0 0.0
      %1367 = vmatprep.subr.mxu0 0.0
      %1368 = vmatpush1.msra.mxu0 0.0
      %1369 = vmatprep.subr.mxu0 0.0
      %1370 = vmatpush1.msra.mxu0 0.0
      %1371 = vmatprep.subr.mxu0 0.0
      %1372 = vmatpush1.msra.mxu0 0.0
      %1373 = vmatprep.subr.mxu0 0.0
      %1374 = vmatpush1.msra.mxu0 0.0
      %1375 = vmatprep.subr.mxu0 0.0
      %1376 = vmatpush1.msra.mxu0 0.0
      %1377 = vmatprep.subr.mxu0 0.0
      %1378 = vmatpush1.msra.mxu0 0.0
      %1379 = vmatprep.subr.mxu0 0.0
      %1380 = vmatpush1.msra.mxu0 0.0
      %1381 = vmatprep.subr.mxu0 0.0
      %1382 = vmatpush1.msra.mxu0 0.0
      %1383 = vmatprep.subr.mxu0 0.0
      %1384 = vmatpush1.msra.mxu0 0.0
      %1385 = vmatprep.subr.mxu0 0.0
      %1386 = vmatpush1.msra.mxu0 0.0
      %1387 = vmatprep.subr.mxu0 0.0
      %1388 = vmatpush1.msra.mxu0 0.0
      %1389 = vmatprep.subr.mxu0 0.0
      %1390 = vmatpush1.msra.mxu0 0.0
      %1391 = vmatprep.mubr.f32.mxu0 0.0
      %1392 = vmatmul.mubr.f32.gmra.mrb[0].mxu0 %v1325
      %v1393 = vpop.f32.mrb[0].mxu0
      %v1394 = vadd.f32 %v1321, %v1393
      %v1395 = vpop.f32.mrb[0].mxu0
      %1396 = vdwg.mxu0
      %1397 = vrot.lane.b32.xlu0 %v907, 112
      %v1398 = vpop.permute.xlu0 %1397
      %1399 = vrot.lane.b32.xlu0 %v907, 80
      %v1400 = vpop.permute.xlu0 %1399
      %v1401 = vsel %vm917, %v1398, 0
      %v1403 = vsel %vm917, %v1400, 0
      %1405 = vmatprep.subr.mxu0 0.0
      %1406 = vmatpush1.xpose.msra.mxu0 %v1403
      %1407 = vmatprep.subr.mxu0 0.0
      %1408 = vmatpush1.xpose.msra.mxu0 0.0
      %1409 = vmatprep.subr.mxu0 0.0
      %1410 = vmatpush1.xpose.msra.mxu0 0.0
      %1411 = vmatprep.subr.mxu0 0.0
      %1412 = vmatpush1.xpose.msra.mxu0 0.0
      %1413 = vmatprep.subr.mxu0 0.0
      %1414 = vmatpush1.xpose.msra.mxu0 0.0
      %1415 = vmatprep.subr.mxu0 0.0
      %1416 = vmatpush1.xpose.msra.mxu0 0.0
      %1417 = vmatprep.subr.mxu0 0.0
      %1418 = vmatpush1.xpose.msra.mxu0 0.0
      %1419 = vmatprep.subr.mxu0 0.0
      %1420 = vmatpush1.xpose.msra.mxu0 0.0
      %1421 = vmatprep.subr.mxu0 0.0
      %1422 = vmatpush1.xpose.msra.mxu0 0.0
      %1423 = vmatprep.subr.mxu0 0.0
      %1424 = vmatpush1.xpose.msra.mxu0 0.0
      %1425 = vmatprep.subr.mxu0 0.0
      %1426 = vmatpush1.xpose.msra.mxu0 0.0
      %1427 = vmatprep.subr.mxu0 0.0
      %1428 = vmatpush1.xpose.msra.mxu0 0.0
      %1429 = vmatprep.subr.mxu0 0.0
      %1430 = vmatpush1.xpose.msra.mxu0 0.0
      %1431 = vmatprep.subr.mxu0 0.0
      %1432 = vmatpush1.xpose.msra.mxu0 0.0
      %1433 = vmatprep.subr.mxu0 0.0
      %1434 = vmatpush1.xpose.msra.mxu0 0.0
      %1435 = vmatprep.subr.mxu0 0.0
      %1436 = vmatpush1.xpose.msra.mxu0 0.0
      %1437 = vmatprep.subr.mxu0 0.0
      %1438 = vmatpush1.xpose.msra.mxu0 0.0
      %1439 = vmatprep.subr.mxu0 0.0
      %1440 = vmatpush1.xpose.msra.mxu0 0.0
      %1441 = vmatprep.subr.mxu0 0.0
      %1442 = vmatpush1.xpose.msra.mxu0 0.0
      %1443 = vmatprep.subr.mxu0 0.0
      %1444 = vmatpush1.xpose.msra.mxu0 0.0
      %1445 = vmatprep.subr.mxu0 0.0
      %1446 = vmatpush1.xpose.msra.mxu0 0.0
      %1447 = vmatprep.subr.mxu0 0.0
      %1448 = vmatpush1.xpose.msra.mxu0 0.0
      %1449 = vmatprep.subr.mxu0 0.0
      %1450 = vmatpush1.xpose.msra.mxu0 0.0
      %1451 = vmatprep.subr.mxu0 0.0
      %1452 = vmatpush1.xpose.msra.mxu0 0.0
      %1453 = vmatprep.subr.mxu0 0.0
      %1454 = vmatpush1.xpose.msra.mxu0 0.0
      %1455 = vmatprep.subr.mxu0 0.0
      %1456 = vmatpush1.xpose.msra.mxu0 0.0
      %1457 = vmatprep.subr.mxu0 0.0
      %1458 = vmatpush1.xpose.msra.mxu0 0.0
      %1459 = vmatprep.subr.mxu0 0.0
      %1460 = vmatpush1.xpose.msra.mxu0 0.0
      %1461 = vmatprep.subr.mxu0 0.0
      %1462 = vmatpush1.xpose.msra.mxu0 0.0
      %1463 = vmatprep.subr.mxu0 0.0
      %1464 = vmatpush1.xpose.msra.mxu0 0.0
      %1465 = vmatprep.subr.mxu0 0.0
      %1466 = vmatpush1.xpose.msra.mxu0 0.0
      %1467 = vmatprep.subr.mxu0 0.0
      %1468 = vmatpush1.xpose.msra.mxu0 0.0
      %1469 = vmatprep.mubr.f32.mxu0 0.0
      %1470 = vmatmul.mubr.f32.gmra.mrb[0].mxu0 %v1401
      %v1471 = vpop.f32.mrb[0].mxu0
      %v1472 = vadd.f32 0.0, %v1471
      %v1473 = vpop.f32.mrb[0].mxu0
      %1474 = vdwg.mxu0
      %v1475 = vmul.f32 %v1472, 0.35355338
      %v1476 = vsel %vm993, %v1475, -inf
      %1477 = vmax.xlane.f32.xlu0 %v1476
      %v1478 = vpop.xlane.xlu0 %1477
      %v1479 = vsub.f32 %v1475, %v1478
      %v1480 = vmul.f32 %v1479, 1.442695
      %v1481 = vpow.pop %v1480
      %v1482 = vsel %vm993, %v1481, 0.0
      %1483 = vadd.xlane.f32.xlu0 %v1482
      %v1484 = vpop.xlane.xlu0 %1483
      %v1485 = vrcp.pop %v1484
      %v1486 = vmul.f32 %v1481, %v1485
      %1487 = vrot.lane.b32.xlu0 %v907, 48
      %v1488 = vpop.permute.xlu0 %1487
      %v1490 = vsel %vm1007, %v1486, 0
      %v1492 = vsel %vm1011, %v1488, 0
      %1494 = vmatprep.subr.mxu0 0.0
      %1495 = vmatpush1.msra.mxu0 %v1492
      %1496 = vmatprep.subr.mxu0 0.0
      %1497 = vmatpush1.msra.mxu0 0.0
      %1498 = vmatprep.subr.mxu0 0.0
      %1499 = vmatpush1.msra.mxu0 0.0
      %1500 = vmatprep.subr.mxu0 0.0
      %1501 = vmatpush1.msra.mxu0 0.0
      %1502 = vmatprep.subr.mxu0 0.0
      %1503 = vmatpush1.msra.mxu0 0.0
      %1504 = vmatprep.subr.mxu0 0.0
      %1505 = vmatpush1.msra.mxu0 0.0
      %1506 = vmatprep.subr.mxu0 0.0
      %1507 = vmatpush1.msra.mxu0 0.0
      %1508 = vmatprep.subr.mxu0 0.0
      %1509 = vmatpush1.msra.mxu0 0.0
      %1510 = vmatprep.subr.mxu0 0.0
      %1511 = vmatpush1.msra.mxu0 0.0
      %1512 = vmatprep.subr.mxu0 0.0
      %1513 = vmatpush1.msra.mxu0 0.0
      %1514 = vmatprep.subr.mxu0 0.0
      %1515 = vmatpush1.msra.mxu0 0.0
      %1516 = vmatprep.subr.mxu0 0.0
      %1517 = vmatpush1.msra.mxu0 0.0
      %1518 = vmatprep.subr.mxu0 0.0
      %1519 = vmatpush1.msra.mxu0 0.0
      %1520 = vmatprep.subr.mxu0 0.0
      %1521 = vmatpush1.msra.mxu0 0.0
      %1522 = vmatprep.subr.mxu0 0.0
      %1523 = vmatpush1.msra.mxu0 0.0
      %1524 = vmatprep.subr.mxu0 0.0
      %1525 = vmatpush1.msra.mxu0 0.0
      %1526 = vmatprep.subr.mxu0 0.0
      %1527 = vmatpush1.msra.mxu0 0.0
      %1528 = vmatprep.subr.mxu0 0.0
      %1529 = vmatpush1.msra.mxu0 0.0
      %1530 = vmatprep.subr.mxu0 0.0
      %1531 = vmatpush1.msra.mxu0 0.0
      %1532 = vmatprep.subr.mxu0 0.0
      %1533 = vmatpush1.msra.mxu0 0.0
      %1534 = vmatprep.subr.mxu0 0.0
      %1535 = vmatpush1.msra.mxu0 0.0
      %1536 = vmatprep.subr.mxu0 0.0
      %1537 = vmatpush1.msra.mxu0 0.0
      %1538 = vmatprep.subr.mxu0 0.0
      %1539 = vmatpush1.msra.mxu0 0.0
      %1540 = vmatprep.subr.mxu0 0.0
      %1541 = vmatpush1.msra.mxu0 0.0
      %1542 = vmatprep.subr.mxu0 0.0
      %1543 = vmatpush1.msra.mxu0 0.0
      %1544 = vmatprep.subr.mxu0 0.0
      %1545 = vmatpush1.msra.mxu0 0.0
      %1546 = vmatprep.subr.mxu0 0.0
      %1547 = vmatpush1.msra.mxu0 0.0
      %1548 = vmatprep.subr.mxu0 0.0
      %1549 = vmatpush1.msra.mxu0 0.0
      %1550 = vmatprep.subr.mxu0 0.0
      %1551 = vmatpush1.msra.mxu0 0.0
      %1552 = vmatprep.subr.mxu0 0.0
      %1553 = vmatpush1.msra.mxu0 0.0
      %1554 = vmatprep.subr.mxu0 0.0
      %1555 = vmatpush1.msra.mxu0 0.0
      %1556 = vmatprep.subr.mxu0 0.0
      %1557 = vmatpush1.msra.mxu0 0.0
      %1558 = vmatprep.mubr.f32.mxu0 0.0
      %1559 = vmatmul.mubr.f32.gmra.mrb[0].mxu0 %v1490
      %v1560 = vpop.f32.mrb[0].mxu0
      %v1561 = vadd.f32 0.0, %v1560
      %v1562 = vpop.f32.mrb[0].mxu0
      %1563 = vdwg.mxu0
      %v1565 = vsel %vm917, %v1561, 0
      %1567 = vmatprep.subr.mxu0 0.0
      %1568 = vmatpush1.msra.mxu0 %v912
      %1569 = vmatprep.subr.mxu0 0.0
      %1570 = vmatpush1.msra.mxu0 0.0
      %1571 = vmatprep.subr.mxu0 0.0
      %1572 = vmatpush1.msra.mxu0 0.0
      %1573 = vmatprep.subr.mxu0 0.0
      %1574 = vmatpush1.msra.mxu0 0.0
      %1575 = vmatprep.subr.mxu0 0.0
      %1576 = vmatpush1.msra.mxu0 0.0
      %1577 = vmatprep.subr.mxu0 0.0
      %1578 = vmatpush1.msra.mxu0 0.0
      %1579 = vmatprep.subr.mxu0 0.0
      %1580 = vmatpush1.msra.mxu0 0.0
      %1581 = vmatprep.subr.mxu0 0.0
      %1582 = vmatpush1.msra.mxu0 0.0
      %1583 = vmatprep.subr.mxu0 0.0
      %1584 = vmatpush1.msra.mxu0 0.0
      %1585 = vmatprep.subr.mxu0 0.0
      %1586 = vmatpush1.msra.mxu0 0.0
      %1587 = vmatprep.subr.mxu0 0.0
      %1588 = vmatpush1.msra.mxu0 0.0
      %1589 = vmatprep.subr.mxu0 0.0
      %1590 = vmatpush1.msra.mxu0 0.0
      %1591 = vmatprep.subr.mxu0 0.0
      %1592 = vmatpush1.msra.mxu0 0.0
      %1593 = vmatprep.subr.mxu0 0.0
      %1594 = vmatpush1.msra.mxu0 0.0
      %1595 = vmatprep.subr.mxu0 0.0
      %1596 = vmatpush1.msra.mxu0 0.0
      %1597 = vmatprep.subr.mxu0 0.0
      %1598 = vmatpush1.msra.mxu0 0.0
      %1599 = vmatprep.subr.mxu0 0.0
      %1600 = vmatpush1.msra.mxu0 0.0
      %1601 = vmatprep.subr.mxu0 0.0
      %1602 = vmatpush1.msra.mxu0 0.0
      %1603 = vmatprep.subr.mxu0 0.0
      %1604 = vmatpush1.msra.mxu0 0.0
      %1605 = vmatprep.subr.mxu0 0.0
      %1606 = vmatpush1.msra.mxu0 0.0
      %1607 = vmatprep.subr.mxu0 0.0
      %1608 = vmatpush1.msra.mxu0 0.0
      %1609 = vmatprep.subr.mxu0 0.0
      %1610 = vmatpush1.msra.mxu0 0.0
      %1611 = vmatprep.subr.mxu0 0.0
      %1612 = vmatpush1.msra.mxu0 0.0
      %1613 = vmatprep.subr.mxu0 0.0
      %1614 = vmatpush1.msra.mxu0 0.0
      %1615 = vmatprep.subr.mxu0 0.0
      %1616 = vmatpush1.msra.mxu0 0.0
      %1617 = vmatprep.subr.mxu0 0.0
      %1618 = vmatpush1.msra.mxu0 0.0
      %1619 = vmatprep.subr.mxu0 0.0
      %1620 = vmatpush1.msra.mxu0 0.0
      %1621 = vmatprep.subr.mxu0 0.0
      %1622 = vmatpush1.msra.mxu0 0.0
      %1623 = vmatprep.subr.mxu0 0.0
      %1624 = vmatpush1.msra.mxu0 0.0
      %1625 = vmatprep.subr.mxu0 0.0
      %1626 = vmatpush1.msra.mxu0 0.0
      %1627 = vmatprep.subr.mxu0 0.0
      %1628 = vmatpush1.msra.mxu0 0.0
      %1629 = vmatprep.subr.mxu0 0.0
      %1630 = vmatpush1.msra.mxu0 0.0
      %1631 = vmatprep.mubr.f32.mxu0 0.0
      %1632 = vmatmul.mubr.f32.gmra.mrb[0].mxu0 %v1565
      %v1633 = vpop.f32.mrb[0].mxu0
      %v1634 = vadd.f32 0.0, %v1633
      %v1635 = vpop.f32.mrb[0].mxu0
      %1636 = vdwg.mxu0
      %v1637 = vadd.f32 %v1394, %v1634
      %1638 = vrot.lane.b32.xlu0 %v907, 104
      %v1639 = vpop.permute.xlu0 %1638
      %1640 = vrot.lane.b32.xlu0 %v907, 72
      %v1641 = vpop.permute.xlu0 %1640
      %v1642 = vsel %vm917, %v1639, 0
      %v1644 = vsel %vm917, %v1641, 0
      %1646 = vmatprep.subr.mxu0 0.0
      %1647 = vmatpush1.xpose.msra.mxu0 %v1644
      %1648 = vmatprep.subr.mxu0 0.0
      %1649 = vmatpush1.xpose.msra.mxu0 0.0
      %1650 = vmatprep.subr.mxu0 0.0
      %1651 = vmatpush1.xpose.msra.mxu0 0.0
      %1652 = vmatprep.subr.mxu0 0.0
      %1653 = vmatpush1.xpose.msra.mxu0 0.0
      %1654 = vmatprep.subr.mxu0 0.0
      %1655 = vmatpush1.xpose.msra.mxu0 0.0
      %1656 = vmatprep.subr.mxu0 0.0
      %1657 = vmatpush1.xpose.msra.mxu0 0.0
      %1658 = vmatprep.subr.mxu0 0.0
      %1659 = vmatpush1.xpose.msra.mxu0 0.0
      %1660 = vmatprep.subr.mxu0 0.0
      %1661 = vmatpush1.xpose.msra.mxu0 0.0
      %1662 = vmatprep.subr.mxu0 0.0
      %1663 = vmatpush1.xpose.msra.mxu0 0.0
      %1664 = vmatprep.subr.mxu0 0.0
      %1665 = vmatpush1.xpose.msra.mxu0 0.0
      %1666 = vmatprep.subr.mxu0 0.0
      %1667 = vmatpush1.xpose.msra.mxu0 0.0
      %1668 = vmatprep.subr.mxu0 0.0
      %1669 = vmatpush1.xpose.msra.mxu0 0.0
      %1670 = vmatprep.subr.mxu0 0.0
      %1671 = vmatpush1.xpose.msra.mxu0 0.0
      %1672 = vmatprep.subr.mxu0 0.0
      %1673 = vmatpush1.xpose.msra.mxu0 0.0
      %1674 = vmatprep.subr.mxu0 0.0
      %1675 = vmatpush1.xpose.msra.mxu0 0.0
      %1676 = vmatprep.subr.mxu0 0.0
      %1677 = vmatpush1.xpose.msra.mxu0 0.0
      %1678 = vmatprep.subr.mxu0 0.0
      %1679 = vmatpush1.xpose.msra.mxu0 0.0
      %1680 = vmatprep.subr.mxu0 0.0
      %1681 = vmatpush1.xpose.msra.mxu0 0.0
      %1682 = vmatprep.subr.mxu0 0.0
      %1683 = vmatpush1.xpose.msra.mxu0 0.0
      %1684 = vmatprep.subr.mxu0 0.0
      %1685 = vmatpush1.xpose.msra.mxu0 0.0
      %1686 = vmatprep.subr.mxu0 0.0
      %1687 = vmatpush1.xpose.msra.mxu0 0.0
      %1688 = vmatprep.subr.mxu0 0.0
      %1689 = vmatpush1.xpose.msra.mxu0 0.0
      %1690 = vmatprep.subr.mxu0 0.0
      %1691 = vmatpush1.xpose.msra.mxu0 0.0
      %1692 = vmatprep.subr.mxu0 0.0
      %1693 = vmatpush1.xpose.msra.mxu0 0.0
      %1694 = vmatprep.subr.mxu0 0.0
      %1695 = vmatpush1.xpose.msra.mxu0 0.0
      %1696 = vmatprep.subr.mxu0 0.0
      %1697 = vmatpush1.xpose.msra.mxu0 0.0
      %1698 = vmatprep.subr.mxu0 0.0
      %1699 = vmatpush1.xpose.msra.mxu0 0.0
      %1700 = vmatprep.subr.mxu0 0.0
      %1701 = vmatpush1.xpose.msra.mxu0 0.0
      %1702 = vmatprep.subr.mxu0 0.0
      %1703 = vmatpush1.xpose.msra.mxu0 0.0
      %1704 = vmatprep.subr.mxu0 0.0
      %1705 = vmatpush1.xpose.msra.mxu0 0.0
      %1706 = vmatprep.subr.mxu0 0.0
      %1707 = vmatpush1.xpose.msra.mxu0 0.0
      %1708 = vmatprep.subr.mxu0 0.0
      %1709 = vmatpush1.xpose.msra.mxu0 0.0
      %1710 = vmatprep.mubr.f32.mxu0 0.0
      %1711 = vmatmul.mubr.f32.gmra.mrb[0].mxu0 %v1642
      %v1712 = vpop.f32.mrb[0].mxu0
      %v1713 = vadd.f32 0.0, %v1712
      %v1714 = vpop.f32.mrb[0].mxu0
      %1715 = vdwg.mxu0
      %v1716 = vmul.f32 %v1713, 0.35355338
      %v1717 = vsel %vm993, %v1716, -inf
      %1718 = vmax.xlane.f32.xlu0 %v1717
      %v1719 = vpop.xlane.xlu0 %1718
      %v1720 = vsub.f32 %v1716, %v1719
      %v1721 = vmul.f32 %v1720, 1.442695
      %v1722 = vpow.pop %v1721
      %v1723 = vsel %vm993, %v1722, 0.0
      %1724 = vadd.xlane.f32.xlu0 %v1723
      %v1725 = vpop.xlane.xlu0 %1724
      %v1726 = vrcp.pop %v1725
      %v1727 = vmul.f32 %v1722, %v1726
      %1728 = vrot.lane.b32.xlu0 %v907, 40
      %v1729 = vpop.permute.xlu0 %1728
      %v1731 = vsel %vm1007, %v1727, 0
      %v1733 = vsel %vm1011, %v1729, 0
      %1735 = vmatprep.subr.mxu0 0.0
      %1736 = vmatpush1.msra.mxu0 %v1733
      %1737 = vmatprep.subr.mxu0 0.0
      %1738 = vmatpush1.msra.mxu0 0.0
      %1739 = vmatprep.subr.mxu0 0.0
      %1740 = vmatpush1.msra.mxu0 0.0
      %1741 = vmatprep.subr.mxu0 0.0
      %1742 = vmatpush1.msra.mxu0 0.0
      %1743 = vmatprep.subr.mxu0 0.0
      %1744 = vmatpush1.msra.mxu0 0.0
      %1745 = vmatprep.subr.mxu0 0.0
      %1746 = vmatpush1.msra.mxu0 0.0
      %1747 = vmatprep.subr.mxu0 0.0
      %1748 = vmatpush1.msra.mxu0 0.0
      %1749 = vmatprep.subr.mxu0 0.0
      %1750 = vmatpush1.msra.mxu0 0.0
      %1751 = vmatprep.subr.mxu0 0.0
      %1752 = vmatpush1.msra.mxu0 0.0
      %1753 = vmatprep.subr.mxu0 0.0
      %1754 = vmatpush1.msra.mxu0 0.0
      %1755 = vmatprep.subr.mxu0 0.0
      %1756 = vmatpush1.msra.mxu0 0.0
      %1757 = vmatprep.subr.mxu0 0.0
      %1758 = vmatpush1.msra.mxu0 0.0
      %1759 = vmatprep.subr.mxu0 0.0
      %1760 = vmatpush1.msra.mxu0 0.0
      %1761 = vmatprep.subr.mxu0 0.0
      %1762 = vmatpush1.msra.mxu0 0.0
      %1763 = vmatprep.subr.mxu0 0.0
      %1764 = vmatpush1.msra.mxu0 0.0
      %1765 = vmatprep.subr.mxu0 0.0
      %1766 = vmatpush1.msra.mxu0 0.0
      %1767 = vmatprep.subr.mxu0 0.0
      %1768 = vmatpush1.msra.mxu0 0.0
      %1769 = vmatprep.subr.mxu0 0.0
      %1770 = vmatpush1.msra.mxu0 0.0
      %1771 = vmatprep.subr.mxu0 0.0
      %1772 = vmatpush1.msra.mxu0 0.0
      %1773 = vmatprep.subr.mxu0 0.0
      %1774 = vmatpush1.msra.mxu0 0.0
      %1775 = vmatprep.subr.mxu0 0.0
      %1776 = vmatpush1.msra.mxu0 0.0
      %1777 = vmatprep.subr.mxu0 0.0
      %1778 = vmatpush1.msra.mxu0 0.0
      %1779 = vmatprep.subr.mxu0 0.0
      %1780 = vmatpush1.msra.mxu0 0.0
      %1781 = vmatprep.subr.mxu0 0.0
      %1782 = vmatpush1.msra.mxu0 0.0
      %1783 = vmatprep.subr.mxu0 0.0
      %1784 = vmatpush1.msra.mxu0 0.0
      %1785 = vmatprep.subr.mxu0 0.0
      %1786 = vmatpush1.msra.mxu0 0.0
      %1787 = vmatprep.subr.mxu0 0.0
      %1788 = vmatpush1.msra.mxu0 0.0
      %1789 = vmatprep.subr.mxu0 0.0
      %1790 = vmatpush1.msra.mxu0 0.0
      %1791 = vmatprep.subr.mxu0 0.0
      %1792 = vmatpush1.msra.mxu0 0.0
      %1793 = vmatprep.subr.mxu0 0.0
      %1794 = vmatpush1.msra.mxu0 0.0
      %1795 = vmatprep.subr.mxu0 0.0
      %1796 = vmatpush1.msra.mxu0 0.0
      %1797 = vmatprep.subr.mxu0 0.0
      %1798 = vmatpush1.msra.mxu0 0.0
      %1799 = vmatprep.mubr.f32.mxu0 0.0
      %1800 = vmatmul.mubr.f32.gmra.mrb[0].mxu0 %v1731
      %v1801 = vpop.f32.mrb[0].mxu0
      %v1802 = vadd.f32 0.0, %v1801
      %v1803 = vpop.f32.mrb[0].mxu0
      %1804 = vdwg.mxu0
      %v1806 = vsel %vm917, %v1802, 0
      %1808 = vmatprep.subr.mxu0 0.0
      %1809 = vmatpush1.msra.mxu0 %v913
      %1810 = vmatprep.subr.mxu0 0.0
      %1811 = vmatpush1.msra.mxu0 0.0
      %1812 = vmatprep.subr.mxu0 0.0
      %1813 = vmatpush1.msra.mxu0 0.0
      %1814 = vmatprep.subr.mxu0 0.0
      %1815 = vmatpush1.msra.mxu0 0.0
      %1816 = vmatprep.subr.mxu0 0.0
      %1817 = vmatpush1.msra.mxu0 0.0
      %1818 = vmatprep.subr.mxu0 0.0
      %1819 = vmatpush1.msra.mxu0 0.0
      %1820 = vmatprep.subr.mxu0 0.0
      %1821 = vmatpush1.msra.mxu0 0.0
      %1822 = vmatprep.subr.mxu0 0.0
      %1823 = vmatpush1.msra.mxu0 0.0
      %1824 = vmatprep.subr.mxu0 0.0
      %1825 = vmatpush1.msra.mxu0 0.0
      %1826 = vmatprep.subr.mxu0 0.0
      %1827 = vmatpush1.msra.mxu0 0.0
      %1828 = vmatprep.subr.mxu0 0.0
      %1829 = vmatpush1.msra.mxu0 0.0
      %1830 = vmatprep.subr.mxu0 0.0
      %1831 = vmatpush1.msra.mxu0 0.0
      %1832 = vmatprep.subr.mxu0 0.0
      %1833 = vmatpush1.msra.mxu0 0.0
      %1834 = vmatprep.subr.mxu0 0.0
      %1835 = vmatpush1.msra.mxu0 0.0
      %1836 = vmatprep.subr.mxu0 0.0
      %1837 = vmatpush1.msra.mxu0 0.0
      %1838 = vmatprep.subr.mxu0 0.0
      %1839 = vmatpush1.msra.mxu0 0.0
      %1840 = vmatprep.subr.mxu0 0.0
      %1841 = vmatpush1.msra.mxu0 0.0
      %1842 = vmatprep.subr.mxu0 0.0
      %1843 = vmatpush1.msra.mxu0 0.0
      %1844 = vmatprep.subr.mxu0 0.0
      %1845 = vmatpush1.msra.mxu0 0.0
      %1846 = vmatprep.subr.mxu0 0.0
      %1847 = vmatpush1.msra.mxu0 0.0
      %1848 = vmatprep.subr.mxu0 0.0
      %1849 = vmatpush1.msra.mxu0 0.0
      %1850 = vmatprep.subr.mxu0 0.0
      %1851 = vmatpush1.msra.mxu0 0.0
      %1852 = vmatprep.subr.mxu0 0.0
      %1853 = vmatpush1.msra.mxu0 0.0
      %1854 = vmatprep.subr.mxu0 0.0
      %1855 = vmatpush1.msra.mxu0 0.0
      %1856 = vmatprep.subr.mxu0 0.0
      %1857 = vmatpush1.msra.mxu0 0.0
      %1858 = vmatprep.subr.mxu0 0.0
      %1859 = vmatpush1.msra.mxu0 0.0
      %1860 = vmatprep.subr.mxu0 0.0
      %1861 = vmatpush1.msra.mxu0 0.0
      %1862 = vmatprep.subr.mxu0 0.0
      %1863 = vmatpush1.msra.mxu0 0.0
      %1864 = vmatprep.subr.mxu0 0.0
      %1865 = vmatpush1.msra.mxu0 0.0
      %1866 = vmatprep.subr.mxu0 0.0
      %1867 = vmatpush1.msra.mxu0 0.0
      %1868 = vmatprep.subr.mxu0 0.0
      %1869 = vmatpush1.msra.mxu0 0.0
      %1870 = vmatprep.subr.mxu0 0.0
      %1871 = vmatpush1.msra.mxu0 0.0
      %1872 = vmatprep.mubr.f32.mxu0 0.0
      %1873 = vmatmul.mubr.f32.gmra.mrb[0].mxu0 %v1806
      %v1874 = vpop.f32.mrb[0].mxu0
      %v1875 = vadd.f32 0.0, %v1874
      %v1876 = vpop.f32.mrb[0].mxu0
      %1877 = vdwg.mxu0
      %v1878 = vadd.f32 %v1637, %v1875
      %v1879 = vld [vmem:[%s749] sm:$0x1]
      %v1881 = vlaneseq
      %v1882 = vshrl.u32 %v1881, 7
      %v1883 = vsub.s32 0, %v1882
      %v1884 = vrot.slane %v1879, %v1883
      %v1886 = vadd.f32 %v1878, %v1884
      %v1887 = vld [vmem:[%s752] sm:$0x1]
      %v1889 = vlaneseq
      %v1890 = vshrl.u32 %v1889, 7
      %v1891 = vsub.s32 0, %v1890
      %v1892 = vrot.slane %v1887, %v1891
      %v1894 = vmul.f32 %v1886, %v1892
      %v1895 = vadd.f32 %v793, %v1894
      %v1896 = vld [vmem:[%s755] sm:$0x1]
      %v1897 = vld [vmem:[%s758] sm:$0x1]
      %v1898 = vsel %vm796, %v1895, 0.0
      %1899 = vadd.xlane.f32.xlu0 %v1898
      %v1900 = vpop.xlane.xlu0 %1899
      %v1901 = vmul.f32 %v1900, %v800
      %v1902 = vsub.f32 %v1895, %v1901
      %v1903 = vmul.f32 %v1902, %v1902
      %v1904 = vsel %vm796, %v1903, 0.0
      %1905 = vadd.xlane.f32.xlu0 %v1904
      %v1906 = vpop.xlane.xlu0 %1905
      %v1907 = vmul.f32 %v1906, %v800
      %v1908 = vadd.f32 %v1907, 1e-06
      %v1909 = vrsqrt.pop %v1908
      %v1910 = vmul.f32 %v1902, %v1909
      %v1912 = vlaneseq
      %v1913 = vshrl.u32 %v1912, 7
      %v1914 = vsub.s32 0, %v1913
      %v1915 = vrot.slane %v1896, %v1914
      %v1917 = vmul.f32 %v1910, %v1915
      %v1919 = vlaneseq
      %v1920 = vshrl.u32 %v1919, 7
      %v1921 = vsub.s32 0, %v1920
      %v1922 = vrot.slane %v1897, %v1921
      %v1924 = vadd.f32 %v1917, %v1922
      %v1925 = vld [vmem:[%s763] sm:$0xff]
      %v1926 = vld [vmem:[%s763 + $0x8] sm:$0xff]
      %v1927 = vld [vmem:[%s763 + $0x10] sm:$0xff]
      %v1928 = vld [vmem:[%s763 + $0x18] sm:$0xff]
      %v1929 = vld [vmem:[%s766] sm:$0x1]
      %v1931 = vlaneseq
      %v1932 = vshrl.u32 %v1931, 7
      %v1933 = vsub.s32 0, %v1932
      %v1934 = vrot.slane %v1929, %v1933
      %v1937 = vsel %vm836, %v1924, 0
      %1939 = vmatprep.subr.mxu0 0.0
      %1940 = vmatpush1.msra.mxu0 %v1925
      %1941 = vmatprep.subr.mxu0 0.0
      %1942 = vmatpush1.msra.mxu0 %v1926
      %1943 = vmatprep.subr.mxu0 0.0
      %1944 = vmatpush1.msra.mxu0 %v1927
      %1945 = vmatprep.subr.mxu0 0.0
      %1946 = vmatpush1.msra.mxu0 %v1928
      %1947 = vmatprep.subr.mxu0 0.0
      %1948 = vmatpush1.msra.mxu0 0.0
      %1949 = vmatprep.subr.mxu0 0.0
      %1950 = vmatpush1.msra.mxu0 0.0
      %1951 = vmatprep.subr.mxu0 0.0
      %1952 = vmatpush1.msra.mxu0 0.0
      %1953 = vmatprep.subr.mxu0 0.0
      %1954 = vmatpush1.msra.mxu0 0.0
      %1955 = vmatprep.subr.mxu0 0.0
      %1956 = vmatpush1.msra.mxu0 0.0
      %1957 = vmatprep.subr.mxu0 0.0
      %1958 = vmatpush1.msra.mxu0 0.0
      %1959 = vmatprep.subr.mxu0 0.0
      %1960 = vmatpush1.msra.mxu0 0.0
      %1961 = vmatprep.subr.mxu0 0.0
      %1962 = vmatpush1.msra.mxu0 0.0
      %1963 = vmatprep.subr.mxu0 0.0
      %1964 = vmatpush1.msra.mxu0 0.0
      %1965 = vmatprep.subr.mxu0 0.0
      %1966 = vmatpush1.msra.mxu0 0.0
      %1967 = vmatprep.subr.mxu0 0.0
      %1968 = vmatpush1.msra.mxu0 0.0
      %1969 = vmatprep.subr.mxu0 0.0
      %1970 = vmatpush1.msra.mxu0 0.0
      %1971 = vmatprep.subr.mxu0 0.0
      %1972 = vmatpush1.msra.mxu0 0.0
      %1973 = vmatprep.subr.mxu0 0.0
      %1974 = vmatpush1.msra.mxu0 0.0
      %1975 = vmatprep.subr.mxu0 0.0
      %1976 = vmatpush1.msra.mxu0 0.0
      %1977 = vmatprep.subr.mxu0 0.0
      %1978 = vmatpush1.msra.mxu0 0.0
      %1979 = vmatprep.subr.mxu0 0.0
      %1980 = vmatpush1.msra.mxu0 0.0
      %1981 = vmatprep.subr.mxu0 0.0
      %1982 = vmatpush1.msra.mxu0 0.0
      %1983 = vmatprep.subr.mxu0 0.0
      %1984 = vmatpush1.msra.mxu0 0.0
      %1985 = vmatprep.subr.mxu0 0.0
      %1986 = vmatpush1.msra.mxu0 0.0
      %1987 = vmatprep.subr.mxu0 0.0
      %1988 = vmatpush1.msra.mxu0 0.0
      %1989 = vmatprep.subr.mxu0 0.0
      %1990 = vmatpush1.msra.mxu0 0.0
      %1991 = vmatprep.subr.mxu0 0.0
      %1992 = vmatpush1.msra.mxu0 0.0
      %1993 = vmatprep.subr.mxu0 0.0
      %1994 = vmatpush1.msra.mxu0 0.0
      %1995 = vmatprep.subr.mxu0 0.0
      %1996 = vmatpush1.msra.mxu0 0.0
      %1997 = vmatprep.subr.mxu0 0.0
      %1998 = vmatpush1.msra.mxu0 0.0
      %1999 = vmatprep.subr.mxu0 0.0
      %2000 = vmatpush1.msra.mxu0 0.0
      %2001 = vmatprep.subr.mxu0 0.0
      %2002 = vmatpush1.msra.mxu0 0.0
      %2003 = vmatprep.mubr.f32.mxu0 0.0
      %2004 = vmatmul.mubr.f32.gmra.mrb[0].mxu0 %v1937
      %v2005 = vpop.f32.mrb[0].mxu0
      %v2006 = vadd.f32 %v1934, %v2005
      %v2007 = vpop.f32.mrb[0].mxu0
      %2008 = vdwg.mxu0
      %v2009 = vmul.f32 %v2006, 0.5
      %v2010 = vmul.f32 %v2006, 0.044715
      %v2011 = vmul.f32 %v2010, %v2006
      %v2012 = vmul.f32 %v2011, %v2006
      %v2013 = vadd.f32 %v2006, %v2012
      %v2014 = vmul.f32 %v2013, 0.7978846
      %v2015 = vtanh.pop %v2014
      %v2016 = vadd.f32 %v2015, 1.0
      %v2017 = vmul.f32 %v2009, %v2016
      %v2018 = vld [vmem:[%s771] sm:$0xff]
      %v2019 = vld [vmem:[%s771 + $0x8] sm:$0xff]
      %v2020 = vld [vmem:[%s771 + $0x10] sm:$0xff]
      %v2021 = vld [vmem:[%s771 + $0x18] sm:$0xff]
      %v2022 = vld [vmem:[%s771 + $0x20] sm:$0xff]
      %v2023 = vld [vmem:[%s771 + $0x28] sm:$0xff]
      %v2024 = vld [vmem:[%s771 + $0x30] sm:$0xff]
      %v2025 = vld [vmem:[%s771 + $0x38] sm:$0xff]
      %v2026 = vld [vmem:[%s771 + $0x40] sm:$0xff]
      %v2027 = vld [vmem:[%s771 + $0x48] sm:$0xff]
      %v2028 = vld [vmem:[%s771 + $0x50] sm:$0xff]
      %v2029 = vld [vmem:[%s771 + $0x58] sm:$0xff]
      %v2030 = vld [vmem:[%s771 + $0x60] sm:$0xff]
      %v2031 = vld [vmem:[%s771 + $0x68] sm:$0xff]
      %v2032 = vld [vmem:[%s771 + $0x70] sm:$0xff]
      %v2033 = vld [vmem:[%s771 + $0x78] sm:$0xff]
      %v2034 = vld [vmem:[%s774] sm:$0x1]
      %v2036 = vlaneseq
      %v2037 = vshrl.u32 %v2036, 7
      %v2038 = vsub.s32 0, %v2037
      %v2039 = vrot.slane %v2034, %v2038
      %2041 = vmatprep.subr.mxu0 0.0
      %2042 = vmatpush1.msra.mxu0 %v2018
      %2043 = vmatprep.subr.mxu0 0.0
      %2044 = vmatpush1.msra.mxu0 %v2019
      %2045 = vmatprep.subr.mxu0 0.0
      %2046 = vmatpush1.msra.mxu0 %v2020
      %2047 = vmatprep.subr.mxu0 0.0
      %2048 = vmatpush1.msra.mxu0 %v2021
      %2049 = vmatprep.subr.mxu0 0.0
      %2050 = vmatpush1.msra.mxu0 %v2022
      %2051 = vmatprep.subr.mxu0 0.0
      %2052 = vmatpush1.msra.mxu0 %v2023
      %2053 = vmatprep.subr.mxu0 0.0
      %2054 = vmatpush1.msra.mxu0 %v2024
      %2055 = vmatprep.subr.mxu0 0.0
      %2056 = vmatpush1.msra.mxu0 %v2025
      %2057 = vmatprep.subr.mxu0 0.0
      %2058 = vmatpush1.msra.mxu0 %v2026
      %2059 = vmatprep.subr.mxu0 0.0
      %2060 = vmatpush1.msra.mxu0 %v2027
      %2061 = vmatprep.subr.mxu0 0.0
      %2062 = vmatpush1.msra.mxu0 %v2028
      %2063 = vmatprep.subr.mxu0 0.0
      %2064 = vmatpush1.msra.mxu0 %v2029
      %2065 = vmatprep.subr.mxu0 0.0
      %2066 = vmatpush1.msra.mxu0 %v2030
      %2067 = vmatprep.subr.mxu0 0.0
      %2068 = vmatpush1.msra.mxu0 %v2031
      %2069 = vmatprep.subr.mxu0 0.0
      %2070 = vmatpush1.msra.mxu0 %v2032
      %2071 = vmatprep.subr.mxu0 0.0
      %2072 = vmatpush1.msra.mxu0 %v2033
      %2073 = vmatprep.subr.mxu0 0.0
      %2074 = vmatpush1.msra.mxu0 0.0
      %2075 = vmatprep.subr.mxu0 0.0
      %2076 = vmatpush1.msra.mxu0 0.0
      %2077 = vmatprep.subr.mxu0 0.0
      %2078 = vmatpush1.msra.mxu0 0.0
      %2079 = vmatprep.subr.mxu0 0.0
      %2080 = vmatpush1.msra.mxu0 0.0
      %2081 = vmatprep.subr.mxu0 0.0
      %2082 = vmatpush1.msra.mxu0 0.0
      %2083 = vmatprep.subr.mxu0 0.0
      %2084 = vmatpush1.msra.mxu0 0.0
      %2085 = vmatprep.subr.mxu0 0.0
      %2086 = vmatpush1.msra.mxu0 0.0
      %2087 = vmatprep.subr.mxu0 0.0
      %2088 = vmatpush1.msra.mxu0 0.0
      %2089 = vmatprep.subr.mxu0 0.0
      %2090 = vmatpush1.msra.mxu0 0.0
      %2091 = vmatprep.subr.mxu0 0.0
      %2092 = vmatpush1.msra.mxu0 0.0
      %2093 = vmatprep.subr.mxu0 0.0
      %2094 = vmatpush1.msra.mxu0 0.0
      %2095 = vmatprep.subr.mxu0 0.0
      %2096 = vmatpush1.msra.mxu0 0.0
      %2097 = vmatprep.subr.mxu0 0.0
      %2098 = vmatpush1.msra.mxu0 0.0
      %2099 = vmatprep.subr.mxu0 0.0
      %2100 = vmatpush1.msra.mxu0 0.0
      %2101 = vmatprep.subr.mxu0 0.0
      %2102 = vmatpush1.msra.mxu0 0.0
      %2103 = vmatprep.subr.mxu0 0.0
      %2104 = vmatpush1.msra.mxu0 0.0
      %2105 = vmatprep.mubr.f32.mxu0 0.0
      %2106 = vmatmul.mubr.f32.gmra.mrb[0].mxu0 %v2017
      %v2107 = vpop.f32.mrb[0].mxu0
      %v2108 = vadd.f32 %v2039, %v2107
      %v2109 = vpop.f32.mrb[0].mxu0
      %2110 = vdwg.mxu0
      %v2111 = vld [vmem:[%s777] sm:$0x1]
      %v2113 = vlaneseq
      %v2114 = vshrl.u32 %v2113, 7
      %v2115 = vsub.s32 0, %v2114
      %v2116 = vrot.slane %v2111, %v2115
      %v2118 = vmul.f32 %v2108, %v2116
      %v2119 = vadd.f32 %v1895, %v2118
      %2120 = vst.msk [vmem:[#allocation2] sm:$0x7f] %vm796, %v2119
      %v2121 = vld [vmem:[%s15] sm:$0x1]
      %v2122 = vld [vmem:[%s16] sm:$0x1]
      %v2123 = vsel %vm796, %v2119, 0.0
      %2124 = vadd.xlane.f32.xlu0 %v2123
      %v2125 = vpop.xlane.xlu0 %2124
      %v2126 = vmul.f32 %v2125, %v800
      %v2127 = vsub.f32 %v2119, %v2126
      %v2128 = vmul.f32 %v2127, %v2127
      %v2129 = vsel %vm796, %v2128, 0.0
      %2130 = vadd.xlane.f32.xlu0 %v2129
      %v2131 = vpop.xlane.xlu0 %2130
      %v2132 = vmul.f32 %v2131, %v800
      %v2133 = vadd.f32 %v2132, 1e-06
      %v2134 = vrsqrt.pop %v2133
      %v2135 = vmul.f32 %v2127, %v2134
      %v2137 = vlaneseq
      %v2138 = vshrl.u32 %v2137, 7
      %v2139 = vsub.s32 0, %v2138
      %v2140 = vrot.slane %v2121, %v2139
      %v2142 = vmul.f32 %v2135, %v2140
      %v2144 = vlaneseq
      %v2145 = vshrl.u32 %v2144, 7
      %v2146 = vsub.s32 0, %v2145
      %v2147 = vrot.slane %v2122, %v2146
      %v2149 = vadd.f32 %v2142, %v2147
      %2150 = vst.msk [vmem:[%s785] sm:$0x7f] %vm796, %v2149
      %p2151 = scmp.lt.s32.totalorder %s32, 0
      %s2152 = scalar_select %p2151, %s32, 0
      %p2153 = scmp.lt.s32.totalorder %s33, 11
      %s2154 = scalar_select %p2153, %s33, 11
      %s2155 = smul.addr %s2152, 12
      %s2156 = sadd.s32 %s2154, %s2155
      %s2157 = smul.addr %s2156, 8
      %s2158 = scalar_lea.vmem %s17, %s2157
      // Predicated region
      $region93: #{incre_dino_forward.6} parent=87 // pred_check
        %p2159 = pneg %p492
      $region94: #{incre_dino_forward.6} parent=87 // pred_check_branch
        %2161 = sbr.rel (%p2159) target = $region96
      $region95: #{incre_dino_forward.6} parent=87 // pred_region
        _
      $region96: #{incre_dino_forward.6} parent=87 // pred_fallthru
        _
    $region88: #{incre_dino_forward.6} parent=5 // pred_fallthru
      _
    %p2162 = scmp.le.s32.totalorder 2, %s23
    // Predicated region
    $region97: #{incre_dino_forward.6} parent=5 // pred_check
      %p2163 = pneg %p2162
    $region98: #{incre_dino_forward.6} parent=5 // pred_check_branch
      %2165 = sbr.rel (%p2163) target = $region100
    $region99: #{incre_dino_forward.6} parent=5 // pred_region
      %s2166 = ssub.s32 %s23, 2
      // Predicated region
      $region101: #{incre_dino_forward.6} parent=99 // pred_check
        %p2167 = pneg %p498
      $region102: #{incre_dino_forward.6} parent=99 // pred_check_branch
        %2169 = sbr.rel (%p2167) target = $region104
      $region103: #{incre_dino_forward.6} parent=99 // pred_region
        %p2170 = scmp.lt.s32.totalorder %s34, 0
        %s2171 = scalar_select %p2170, %s34, 0
        %p2172 = scmp.lt.s32.totalorder %s35, 11
        %s2173 = scalar_select %p2172, %s35, 11
        %s2174 = smul.addr %s2171, 12
        %s2175 = sadd.s32 %s2173, %s2174
        %s2176 = smul.addr %s2175, 8
        %s2177 = scalar_lea.vmem %s17, %s2176
      $region104: #{incre_dino_forward.6} parent=99 // pred_fallthru
        _
    $region100: #{incre_dino_forward.6} parent=5 // pred_fallthru
      _
  $region6: #{incre_dino_forward.6} parent=0 // loop_footer
    %s27 = sadd.s32 1, %s23
  $region7: #{incre_dino_forward.6} parent=0 // loop_footer_branch
    %22 = sbr.rel target = $region3
  $region8: #{incre_dino_forward.6} parent=0 // loop_exit
    _

</llo_original>
